<compile_context>
chip_gen: v5e
topology: v5e:2x2
jax: 0.10.0
libtpu: 0.0.40
codegen_flags: <defaults>
</compile_context>

<pallas_src>
import jax
import jax.numpy as jnp
from jax import lax
from jax.experimental import pallas as pl
from jax.experimental.pallas import tpu as pltpu

# ----------------------------------------------------------------------------
# Config (small shapes consistent with the module)
# ----------------------------------------------------------------------------
N_CLASSES = 8
LATENT_DIM = 56                     # latentdim + n_classes = 64
IN_DIM = N_CLASSES + LATENT_DIM     # 64
DEPTH = 128                         # self.depth
CHANNELS = 1
IMAGE_SIZE = 16
IMG_FLAT = CHANNELS * IMAGE_SIZE * IMAGE_SIZE   # 256
BATCH = 8
BN_EPS = 0.8                        # nn.BatchNorm1d(output, 0.8) -> eps = 0.8


# ----------------------------------------------------------------------------
# Pallas kernel: embedding gather + 5 Linear layers, 4 train-mode BN +
# LeakyReLU, final Tanh — fully fused, single grid step, everything in VMEM.
# ----------------------------------------------------------------------------
def _generator_kernel(labels_ref, emb_ref, noise_ref,
                      w1a_ref, w1b_ref, g1_ref, be1_ref,
                      w2_ref, g2_ref, be2_ref,
                      w3_ref, g3_ref, be3_ref,
                      w4_ref, g4_ref, be4_ref,
                      w5_ref, b5_ref,
                      out_ref):
    # ---- fused embedding lookup: one-hot matmul instead of an XLA gather ----
    lane = lax.broadcasted_iota(jnp.int32, (BATCH, N_CLASSES), 1)
    onehot = (lane == labels_ref[...]).astype(jnp.float32)            # (B, 8)
    emb_rows = jnp.dot(onehot, emb_ref[...],
                       preferred_element_type=jnp.float32)            # (B, 8)

    def dot_bf16(h, w_ref):
        # bf16 x bf16 MXU matmul, f32 accumulation.
        return jnp.dot(h.astype(jnp.bfloat16), w_ref[...],
                       preferred_element_type=jnp.float32)

    def bn_leaky(z, g_ref, be_ref):
        # Train-mode BatchNorm1d (biased batch stats, eps=0.8), then
        # LeakyReLU(0.2). One-pass variance: E[z^2] - E[z]^2.
        mean = jnp.mean(z, axis=0, keepdims=True)
        mean_sq = jnp.mean(z * z, axis=0, keepdims=True)
        var = mean_sq - mean * mean
        zn = (z - mean) * lax.rsqrt(var + BN_EPS)
        zn = zn * g_ref[...] + be_ref[...]
        return jnp.where(zn > 0, zn, 0.2 * zn)

    # Layer 1: concat(emb, noise) @ W1  ==  emb @ W1[:8] + noise @ W1[8:]
    # (exact split, avoids an in-kernel concatenate). Linear biases b1..b4 are
    # omitted on purpose: train-mode BN subtracts the batch mean, which
    # cancels any per-feature constant exactly.
    z = dot_bf16(emb_rows, w1a_ref) + dot_bf16(noise_ref[...], w1b_ref)
    h = bn_leaky(z, g1_ref, be1_ref)
    h = bn_leaky(dot_bf16(h, w2_ref), g2_ref, be2_ref)
    h = bn_leaky(dot_bf16(h, w3_ref), g3_ref, be3_ref)
    h = bn_leaky(dot_bf16(h, w4_ref), g4_ref, be4_ref)

    z = dot_bf16(h, w5_ref) + b5_ref[...]
    out_ref[...] = jnp.tanh(z)


def _full_spec(shape):
    # Whole-array block, single grid step.
    return pl.BlockSpec(shape, lambda i: (0,) * len(shape))


def generator_forward(noise, labels, params):
    """noise: (B, LATENT_DIM) f32, labels: (B,) int32 -> (B, C, H, W) f32."""
    labels_2d = labels.reshape(BATCH, 1).astype(jnp.int32)

    flat_inputs = [
        labels_2d,
        params["embedding"],
        noise,
        params["w1a"], params["w1b"], params["g1"], params["be1"],
        params["w2"], params["g2"], params["be2"],
        params["w3"], params["g3"], params["be3"],
        params["w4"], params["g4"], params["be4"],
        params["w5"], params["b5"],
    ]
    in_specs = [_full_spec(a.shape) for a in flat_inputs]

    out_flat = pl.pallas_call(
        _generator_kernel,
        out_shape=jax.ShapeDtypeStruct((BATCH, IMG_FLAT), jnp.float32),
        grid=(1,),
        in_specs=in_specs,
        out_specs=_full_spec((BATCH, IMG_FLAT)),
        compiler_params=pltpu.CompilerParams(
            dimension_semantics=("arbitrary",)),
    )(*flat_inputs)

    # Final view: (B, C*H*W) -> (B, C, H, W), identical to PyTorch .view
    return out_flat.reshape(BATCH, CHANNELS, IMAGE_SIZE, IMAGE_SIZE)


# ----------------------------------------------------------------------------
# Deterministic parameter initialization (shapes from the module __init__)
# ----------------------------------------------------------------------------
def init_params(key):
    dims = [IN_DIM, DEPTH, DEPTH * 2, DEPTH * 4, DEPTH * 8, IMG_FLAT]
    params = {}
    key, ek = jax.random.split(key)
    # nn.Embedding default init: N(0, 1)
    params["embedding"] = jax.random.normal(ek, (N_CLASSES, N_CLASSES), jnp.float32)

    for li in range(5):
        fan_in, fan_out = dims[li], dims[li + 1]
        key, wk, bk = jax.random.split(key, 3)
        bound = 1.0 / (fan_in ** 0.5)
        # Stored as (in, out) so the kernel computes x @ W (== x @ W_pt.T).
        w = jax.random.uniform(wk, (fan_in, fan_out), jnp.float32, -bound, bound)
        b = jax.random.uniform(bk, (1, fan_out), jnp.float32, -bound, bound)
        if li == 0:
            # Split W1 along the input axis: embedding part / noise part.
            params["w1a"] = w[:N_CLASSES].astype(jnp.bfloat16)
            params["w1b"] = w[N_CLASSES:].astype(jnp.bfloat16)
        else:
            params[f"w{li + 1}"] = w.astype(jnp.bfloat16)
        # b1..b4 are kept only for the reference (BN cancels them in forward).
        params[f"b{li + 1}"] = b
        if li < 4:
            # BatchNorm1d affine params: gamma = 1, beta = 0
            params[f"g{li + 1}"] = jnp.ones((1, fan_out), jnp.float32)
            params[f"be{li + 1}"] = jnp.zeros((1, fan_out), jnp.float32)
    return params


# ----------------------------------------------------------------------------
# Pure-JAX reference (f32 math, biases included) for sanity checking
# ----------------------------------------------------------------------------
def generator_ref(noise, labels, params):
    w1 = jnp.concatenate([params["w1a"], params["w1b"]], axis=0).astype(jnp.float32)
    ws = [w1] + [params[f"w{i}"].astype(jnp.float32) for i in range(2, 6)]

    x = jnp.concatenate([params["embedding"][labels], noise], axis=-1)
    h = x
    for li in range(4):
        z = h @ ws[li] + params[f"b{li + 1}"]          # bias included; BN cancels it
        mean = jnp.mean(z, axis=0, keepdims=True)
        var = jnp.mean((z - mean) ** 2, axis=0, keepdims=True)
        zn = (z - mean) / jnp.sqrt(var + BN_EPS)
        zn = zn * params[f"g{li + 1}"] + params[f"be{li + 1}"]
        h = jnp.where(zn > 0, zn, 0.2 * zn)
    out = jnp.tanh(h @ ws[4] + params["b5"])
    return out.reshape(BATCH, CHANNELS, IMAGE_SIZE, IMAGE_SIZE)


if __name__ == "__main__":
    key = jax.random.PRNGKey(0)
    pkey, nkey, lkey = jax.random.split(key, 3)

    params = init_params(pkey)
    noise = jax.random.normal(nkey, (BATCH, LATENT_DIM), jnp.float32)
    labels = jax.random.randint(lkey, (BATCH,), 0, N_CLASSES, jnp.int32)

    img = jax.jit(generator_forward)(noise, labels, params)
    img = jax.block_until_ready(img)

    ref = generator_ref(noise, labels, params)
    assert img.shape == (BATCH, CHANNELS, IMAGE_SIZE, IMAGE_SIZE)
    max_err = float(jnp.max(jnp.abs(img - ref)))
    # bf16 weights + bf16 activations into the MXU vs. an f32 reference:
    # BN renormalizes each layer and the output is tanh-bounded, so 3e-2
    # absolute is a comfortable envelope.
    assert max_err < 3e-2, f"mismatch vs reference (max abs err {max_err})"

    print("KERNEL_OK")
</pallas_src>

<mosaic_0001>
module attributes {stable_mosaic.version = 11 : i64} {
  func.func @_generator_kernel(%arg0: i32, %arg1: memref<8x1xi32, #tpu.memory_space<vmem>>, %arg2: memref<8x8xf32, #tpu.memory_space<vmem>>, %arg3: memref<8x56xf32, #tpu.memory_space<vmem>>, %arg4: memref<8x128xbf16, #tpu.memory_space<vmem>>, %arg5: memref<56x128xbf16, #tpu.memory_space<vmem>>, %arg6: memref<1x128xf32, #tpu.memory_space<vmem>>, %arg7: memref<1x128xf32, #tpu.memory_space<vmem>>, %arg8: memref<128x256xbf16, #tpu.memory_space<vmem>>, %arg9: memref<1x256xf32, #tpu.memory_space<vmem>>, %arg10: memref<1x256xf32, #tpu.memory_space<vmem>>, %arg11: memref<256x512xbf16, #tpu.memory_space<vmem>>, %arg12: memref<1x512xf32, #tpu.memory_space<vmem>>, %arg13: memref<1x512xf32, #tpu.memory_space<vmem>>, %arg14: memref<512x1024xbf16, #tpu.memory_space<vmem>>, %arg15: memref<1x1024xf32, #tpu.memory_space<vmem>>, %arg16: memref<1x1024xf32, #tpu.memory_space<vmem>>, %arg17: memref<1024x256xbf16, #tpu.memory_space<vmem>>, %arg18: memref<1x256xf32, #tpu.memory_space<vmem>>, %arg19: memref<8x256xf32, #tpu.memory_space<vmem>>) attributes {dimension_semantics = [#tpu.dimension_semantics<arbitrary>], iteration_bounds = array<i64: 1>, scalar_prefetch = 0 : i64, scratch_operands = 0 : i64, tpu.core_type = #tpu.core_type<tc>, window_params = [{pipeline_mode = #tpu.pipeline_mode<synchronous>, transform_indices = @transform_0, window_bounds = array<i64: 8, 1>}, {pipeline_mode = #tpu.pipeline_mode<synchronous>, transform_indices = @transform_1, window_bounds = array<i64: 8, 8>}, {pipeline_mode = #tpu.pipeline_mode<synchronous>, transform_indices = @transform_2, window_bounds = array<i64: 8, 56>}, {pipeline_mode = #tpu.pipeline_mode<synchronous>, transform_indices = @transform_3, window_bounds = array<i64: 8, 128>}, {pipeline_mode = #tpu.pipeline_mode<synchronous>, transform_indices = @transform_4, window_bounds = array<i64: 56, 128>}, {pipeline_mode = #tpu.pipeline_mode<synchronous>, transform_indices = @transform_5, window_bounds = array<i64: 1, 128>}, {pipeline_mode = #tpu.pipeline_mode<synchronous>, transform_indices = @transform_6, window_bounds = array<i64: 1, 128>}, {pipeline_mode = #tpu.pipeline_mode<synchronous>, transform_indices = @transform_7, window_bounds = array<i64: 128, 256>}, {pipeline_mode = #tpu.pipeline_mode<synchronous>, transform_indices = @transform_8, window_bounds = array<i64: 1, 256>}, {pipeline_mode = #tpu.pipeline_mode<synchronous>, transform_indices = @transform_9, window_bounds = array<i64: 1, 256>}, {pipeline_mode = #tpu.pipeline_mode<synchronous>, transform_indices = @transform_10, window_bounds = array<i64: 256, 512>}, {pipeline_mode = #tpu.pipeline_mode<synchronous>, transform_indices = @transform_11, window_bounds = array<i64: 1, 512>}, {pipeline_mode = #tpu.pipeline_mode<synchronous>, transform_indices = @transform_12, window_bounds = array<i64: 1, 512>}, {pipeline_mode = #tpu.pipeline_mode<synchronous>, transform_indices = @transform_13, window_bounds = array<i64: 512, 1024>}, {pipeline_mode = #tpu.pipeline_mode<synchronous>, transform_indices = @transform_14, window_bounds = array<i64: 1, 1024>}, {pipeline_mode = #tpu.pipeline_mode<synchronous>, transform_indices = @transform_15, window_bounds = array<i64: 1, 1024>}, {pipeline_mode = #tpu.pipeline_mode<synchronous>, transform_indices = @transform_16, window_bounds = array<i64: 1024, 256>}, {pipeline_mode = #tpu.pipeline_mode<synchronous>, transform_indices = @transform_17, window_bounds = array<i64: 1, 256>}, {pipeline_mode = #tpu.pipeline_mode<synchronous>, transform_indices = @transform_18, window_bounds = array<i64: 8, 256>}]} {
    %0 = tpu.iota {dimensions = array<i32: 1>} : vector<8x8xi32>
    %c0 = arith.constant 0 : index
    %c0_0 = arith.constant 0 : index
    %1 = vector.load %arg1[%c0, %c0_0] : memref<8x1xi32, #tpu.memory_space<vmem>>, vector<8x1xi32>
    %2 = vector.broadcast %1 : vector<8x1xi32> to vector<8x8xi32>
    %3 = arith.cmpi eq, %0, %2 : vector<8x8xi32>
    %4 = arith.extui %3 : vector<8x8xi1> to vector<8x8xi32>
    %5 = arith.sitofp %4 : vector<8x8xi32> to vector<8x8xf32>
    %c0_1 = arith.constant 0 : index
    %c0_2 = arith.constant 0 : index
    %6 = vector.load %arg2[%c0_1, %c0_2] : memref<8x8xf32, #tpu.memory_space<vmem>>, vector<8x8xf32>
    %cst = arith.constant dense<0.000000e+00> : vector<8x8xf32>
    %7 = tpu.matmul %5, %6, %cst {dimension_numbers = #tpu.dot_dimension_numbers<[1], [0], [0], [1], [0, 0, 1, 1], [], []>} : vector<8x8xf32>, vector<8x8xf32>, vector<8x8xf32> -> vector<8x8xf32>
    %8 = arith.truncf %7 : vector<8x8xf32> to vector<8x8xbf16>
    %c0_3 = arith.constant 0 : index
    %c0_4 = arith.constant 0 : index
    %9 = vector.load %arg4[%c0_3, %c0_4] : memref<8x128xbf16, #tpu.memory_space<vmem>>, vector<8x128xbf16>
    %cst_5 = arith.constant dense<0.000000e+00> : vector<8x128xf32>
    %10 = tpu.matmul %8, %9, %cst_5 {dimension_numbers = #tpu.dot_dimension_numbers<[1], [0], [0], [1], [0, 0, 1, 1], [], []>} : vector<8x8xbf16>, vector<8x128xbf16>, vector<8x128xf32> -> vector<8x128xf32>
    %c0_6 = arith.constant 0 : index
    %c0_7 = arith.constant 0 : index
    %11 = vector.load %arg3[%c0_6, %c0_7] : memref<8x56xf32, #tpu.memory_space<vmem>>, vector<8x56xf32>
    %12 = arith.truncf %11 : vector<8x56xf32> to vector<8x56xbf16>
    %c0_8 = arith.constant 0 : index
    %c0_9 = arith.constant 0 : index
    %13 = vector.load %arg5[%c0_8, %c0_9] : memref<56x128xbf16, #tpu.memory_space<vmem>>, vector<56x128xbf16>
    %cst_10 = arith.constant dense<0.000000e+00> : vector<8x128xf32>
    %14 = tpu.matmul %12, %13, %cst_10 {dimension_numbers = #tpu.dot_dimension_numbers<[1], [0], [0], [1], [0, 0, 1, 1], [], []>} : vector<8x56xbf16>, vector<56x128xbf16>, vector<8x128xf32> -> vector<8x128xf32>
    %15 = arith.addf %10, %14 : vector<8x128xf32>
    %cst_11 = arith.constant dense<0.000000e+00> : vector<128xf32>
    %16 = vector.multi_reduction <add>, %15, %cst_11 [0] : vector<8x128xf32> to vector<128xf32>
    %17 = vector.shape_cast %16 : vector<128xf32> to vector<1x128xf32>
    %cst_12 = arith.constant 8.000000e+00 : f32
    %18 = vector.broadcast %cst_12 : f32 to vector<1x128xf32>
    %19 = arith.divf %17, %18 : vector<1x128xf32>
    %20 = arith.mulf %15, %15 : vector<8x128xf32>
    %cst_13 = arith.constant dense<0.000000e+00> : vector<128xf32>
    %21 = vector.multi_reduction <add>, %20, %cst_13 [0] : vector<8x128xf32> to vector<128xf32>
    %22 = vector.shape_cast %21 : vector<128xf32> to vector<1x128xf32>
    %cst_14 = arith.constant 8.000000e+00 : f32
    %23 = vector.broadcast %cst_14 : f32 to vector<1x128xf32>
    %24 = arith.divf %22, %23 : vector<1x128xf32>
    %25 = arith.mulf %19, %19 : vector<1x128xf32>
    %26 = arith.subf %24, %25 : vector<1x128xf32>
    %27 = vector.broadcast %19 : vector<1x128xf32> to vector<8x128xf32>
    %28 = arith.subf %15, %27 : vector<8x128xf32>
    %cst_15 = arith.constant 8.000000e-01 : f32
    %29 = vector.broadcast %cst_15 : f32 to vector<1x128xf32>
    %30 = arith.addf %26, %29 : vector<1x128xf32>
    %31 = math.rsqrt %30 : vector<1x128xf32>
    %32 = vector.broadcast %31 : vector<1x128xf32> to vector<8x128xf32>
    %33 = arith.mulf %28, %32 : vector<8x128xf32>
    %c0_16 = arith.constant 0 : index
    %c0_17 = arith.constant 0 : index
    %34 = vector.load %arg6[%c0_16, %c0_17] : memref<1x128xf32, #tpu.memory_space<vmem>>, vector<1x128xf32>
    %35 = vector.broadcast %34 : vector<1x128xf32> to vector<8x128xf32>
    %36 = arith.mulf %33, %35 : vector<8x128xf32>
    %c0_18 = arith.constant 0 : index
    %c0_19 = arith.constant 0 : index
    %37 = vector.load %arg7[%c0_18, %c0_19] : memref<1x128xf32, #tpu.memory_space<vmem>>, vector<1x128xf32>
    %38 = vector.broadcast %37 : vector<1x128xf32> to vector<8x128xf32>
    %39 = arith.addf %36, %38 : vector<8x128xf32>
    %cst_20 = arith.constant 0.000000e+00 : f32
    %40 = vector.broadcast %cst_20 : f32 to vector<8x128xf32>
    %41 = arith.cmpf ogt, %39, %40 : vector<8x128xf32>
    %cst_21 = arith.constant 2.000000e-01 : f32
    %42 = vector.broadcast %cst_21 : f32 to vector<8x128xf32>
    %43 = arith.mulf %42, %39 : vector<8x128xf32>
    %44 = arith.select %41, %39, %43 : vector<8x128xi1>, vector<8x128xf32>
    %45 = arith.truncf %44 : vector<8x128xf32> to vector<8x128xbf16>
    %c0_22 = arith.constant 0 : index
    %c0_23 = arith.constant 0 : index
    %46 = vector.load %arg8[%c0_22, %c0_23] : memref<128x256xbf16, #tpu.memory_space<vmem>>, vector<128x256xbf16>
    %cst_24 = arith.constant dense<0.000000e+00> : vector<8x256xf32>
    %47 = tpu.matmul %45, %46, %cst_24 {dimension_numbers = #tpu.dot_dimension_numbers<[1], [0], [0], [1], [0, 0, 1, 1], [], []>} : vector<8x128xbf16>, vector<128x256xbf16>, vector<8x256xf32> -> vector<8x256xf32>
    %cst_25 = arith.constant dense<0.000000e+00> : vector<256xf32>
    %48 = vector.multi_reduction <add>, %47, %cst_25 [0] : vector<8x256xf32> to vector<256xf32>
    %49 = vector.shape_cast %48 : vector<256xf32> to vector<1x256xf32>
    %cst_26 = arith.constant 8.000000e+00 : f32
    %50 = vector.broadcast %cst_26 : f32 to vector<1x256xf32>
    %51 = arith.divf %49, %50 : vector<1x256xf32>
    %52 = arith.mulf %47, %47 : vector<8x256xf32>
    %cst_27 = arith.constant dense<0.000000e+00> : vector<256xf32>
    %53 = vector.multi_reduction <add>, %52, %cst_27 [0] : vector<8x256xf32> to vector<256xf32>
    %54 = vector.shape_cast %53 : vector<256xf32> to vector<1x256xf32>
    %cst_28 = arith.constant 8.000000e+00 : f32
    %55 = vector.broadcast %cst_28 : f32 to vector<1x256xf32>
    %56 = arith.divf %54, %55 : vector<1x256xf32>
    %57 = arith.mulf %51, %51 : vector<1x256xf32>
    %58 = arith.subf %56, %57 : vector<1x256xf32>
    %59 = vector.broadcast %51 : vector<1x256xf32> to vector<8x256xf32>
    %60 = arith.subf %47, %59 : vector<8x256xf32>
    %cst_29 = arith.constant 8.000000e-01 : f32
    %61 = vector.broadcast %cst_29 : f32 to vector<1x256xf32>
    %62 = arith.addf %58, %61 : vector<1x256xf32>
    %63 = math.rsqrt %62 : vector<1x256xf32>
    %64 = vector.broadcast %63 : vector<1x256xf32> to vector<8x256xf32>
    %65 = arith.mulf %60, %64 : vector<8x256xf32>
    %c0_30 = arith.constant 0 : index
    %c0_31 = arith.constant 0 : index
    %66 = vector.load %arg9[%c0_30, %c0_31] : memref<1x256xf32, #tpu.memory_space<vmem>>, vector<1x256xf32>
    %67 = vector.broadcast %66 : vector<1x256xf32> to vector<8x256xf32>
    %68 = arith.mulf %65, %67 : vector<8x256xf32>
    %c0_32 = arith.constant 0 : index
    %c0_33 = arith.constant 0 : index
    %69 = vector.load %arg10[%c0_32, %c0_33] : memref<1x256xf32, #tpu.memory_space<vmem>>, vector<1x256xf32>
    %70 = vector.broadcast %69 : vector<1x256xf32> to vector<8x256xf32>
    %71 = arith.addf %68, %70 : vector<8x256xf32>
    %cst_34 = arith.constant 0.000000e+00 : f32
    %72 = vector.broadcast %cst_34 : f32 to vector<8x256xf32>
    %73 = arith.cmpf ogt, %71, %72 : vector<8x256xf32>
    %cst_35 = arith.constant 2.000000e-01 : f32
    %74 = vector.broadcast %cst_35 : f32 to vector<8x256xf32>
    %75 = arith.mulf %74, %71 : vector<8x256xf32>
    %76 = arith.select %73, %71, %75 : vector<8x256xi1>, vector<8x256xf32>
    %77 = arith.truncf %76 : vector<8x256xf32> to vector<8x256xbf16>
    %c0_36 = arith.constant 0 : index
    %c0_37 = arith.constant 0 : index
    %78 = vector.load %arg11[%c0_36, %c0_37] : memref<256x512xbf16, #tpu.memory_space<vmem>>, vector<256x512xbf16>
    %cst_38 = arith.constant dense<0.000000e+00> : vector<8x512xf32>
    %79 = tpu.matmul %77, %78, %cst_38 {dimension_numbers = #tpu.dot_dimension_numbers<[1], [0], [0], [1], [0, 0, 1, 1], [], []>} : vector<8x256xbf16>, vector<256x512xbf16>, vector<8x512xf32> -> vector<8x512xf32>
    %cst_39 = arith.constant dense<0.000000e+00> : vector<512xf32>
    %80 = vector.multi_reduction <add>, %79, %cst_39 [0] : vector<8x512xf32> to vector<512xf32>
    %81 = vector.shape_cast %80 : vector<512xf32> to vector<1x512xf32>
    %cst_40 = arith.constant 8.000000e+00 : f32
    %82 = vector.broadcast %cst_40 : f32 to vector<1x512xf32>
    %83 = arith.divf %81, %82 : vector<1x512xf32>
    %84 = arith.mulf %79, %79 : vector<8x512xf32>
    %cst_41 = arith.constant dense<0.000000e+00> : vector<512xf32>
    %85 = vector.multi_reduction <add>, %84, %cst_41 [0] : vector<8x512xf32> to vector<512xf32>
    %86 = vector.shape_cast %85 : vector<512xf32> to vector<1x512xf32>
    %cst_42 = arith.constant 8.000000e+00 : f32
    %87 = vector.broadcast %cst_42 : f32 to vector<1x512xf32>
    %88 = arith.divf %86, %87 : vector<1x512xf32>
    %89 = arith.mulf %83, %83 : vector<1x512xf32>
    %90 = arith.subf %88, %89 : vector<1x512xf32>
    %91 = vector.broadcast %83 : vector<1x512xf32> to vector<8x512xf32>
    %92 = arith.subf %79, %91 : vector<8x512xf32>
    %cst_43 = arith.constant 8.000000e-01 : f32
    %93 = vector.broadcast %cst_43 : f32 to vector<1x512xf32>
    %94 = arith.addf %90, %93 : vector<1x512xf32>
    %95 = math.rsqrt %94 : vector<1x512xf32>
    %96 = vector.broadcast %95 : vector<1x512xf32> to vector<8x512xf32>
    %97 = arith.mulf %92, %96 : vector<8x512xf32>
    %c0_44 = arith.constant 0 : index
    %c0_45 = arith.constant 0 : index
    %98 = vector.load %arg12[%c0_44, %c0_45] : memref<1x512xf32, #tpu.memory_space<vmem>>, vector<1x512xf32>
    %99 = vector.broadcast %98 : vector<1x512xf32> to vector<8x512xf32>
    %100 = arith.mulf %97, %99 : vector<8x512xf32>
    %c0_46 = arith.constant 0 : index
    %c0_47 = arith.constant 0 : index
    %101 = vector.load %arg13[%c0_46, %c0_47] : memref<1x512xf32, #tpu.memory_space<vmem>>, vector<1x512xf32>
    %102 = vector.broadcast %101 : vector<1x512xf32> to vector<8x512xf32>
    %103 = arith.addf %100, %102 : vector<8x512xf32>
    %cst_48 = arith.constant 0.000000e+00 : f32
    %104 = vector.broadcast %cst_48 : f32 to vector<8x512xf32>
    %105 = arith.cmpf ogt, %103, %104 : vector<8x512xf32>
    %cst_49 = arith.constant 2.000000e-01 : f32
    %106 = vector.broadcast %cst_49 : f32 to vector<8x512xf32>
    %107 = arith.mulf %106, %103 : vector<8x512xf32>
    %108 = arith.select %105, %103, %107 : vector<8x512xi1>, vector<8x512xf32>
    %109 = arith.truncf %108 : vector<8x512xf32> to vector<8x512xbf16>
    %c0_50 = arith.constant 0 : index
    %c0_51 = arith.constant 0 : index
    %110 = vector.load %arg14[%c0_50, %c0_51] : memref<512x1024xbf16, #tpu.memory_space<vmem>>, vector<512x1024xbf16>
    %cst_52 = arith.constant dense<0.000000e+00> : vector<8x1024xf32>
    %111 = tpu.matmul %109, %110, %cst_52 {dimension_numbers = #tpu.dot_dimension_numbers<[1], [0], [0], [1], [0, 0, 1, 1], [], []>} : vector<8x512xbf16>, vector<512x1024xbf16>, vector<8x1024xf32> -> vector<8x1024xf32>
    %cst_53 = arith.constant dense<0.000000e+00> : vector<1024xf32>
    %112 = vector.multi_reduction <add>, %111, %cst_53 [0] : vector<8x1024xf32> to vector<1024xf32>
    %113 = vector.shape_cast %112 : vector<1024xf32> to vector<1x1024xf32>
    %cst_54 = arith.constant 8.000000e+00 : f32
    %114 = vector.broadcast %cst_54 : f32 to vector<1x1024xf32>
    %115 = arith.divf %113, %114 : vector<1x1024xf32>
    %116 = arith.mulf %111, %111 : vector<8x1024xf32>
    %cst_55 = arith.constant dense<0.000000e+00> : vector<1024xf32>
    %117 = vector.multi_reduction <add>, %116, %cst_55 [0] : vector<8x1024xf32> to vector<1024xf32>
    %118 = vector.shape_cast %117 : vector<1024xf32> to vector<1x1024xf32>
    %cst_56 = arith.constant 8.000000e+00 : f32
    %119 = vector.broadcast %cst_56 : f32 to vector<1x1024xf32>
    %120 = arith.divf %118, %119 : vector<1x1024xf32>
    %121 = arith.mulf %115, %115 : vector<1x1024xf32>
    %122 = arith.subf %120, %121 : vector<1x1024xf32>
    %123 = vector.broadcast %115 : vector<1x1024xf32> to vector<8x1024xf32>
    %124 = arith.subf %111, %123 : vector<8x1024xf32>
    %cst_57 = arith.constant 8.000000e-01 : f32
    %125 = vector.broadcast %cst_57 : f32 to vector<1x1024xf32>
    %126 = arith.addf %122, %125 : vector<1x1024xf32>
    %127 = math.rsqrt %126 : vector<1x1024xf32>
    %128 = vector.broadcast %127 : vector<1x1024xf32> to vector<8x1024xf32>
    %129 = arith.mulf %124, %128 : vector<8x1024xf32>
    %c0_58 = arith.constant 0 : index
    %c0_59 = arith.constant 0 : index
    %130 = vector.load %arg15[%c0_58, %c0_59] : memref<1x1024xf32, #tpu.memory_space<vmem>>, vector<1x1024xf32>
    %131 = vector.broadcast %130 : vector<1x1024xf32> to vector<8x1024xf32>
    %132 = arith.mulf %129, %131 : vector<8x1024xf32>
    %c0_60 = arith.constant 0 : index
    %c0_61 = arith.constant 0 : index
    %133 = vector.load %arg16[%c0_60, %c0_61] : memref<1x1024xf32, #tpu.memory_space<vmem>>, vector<1x1024xf32>
    %134 = vector.broadcast %133 : vector<1x1024xf32> to vector<8x1024xf32>
    %135 = arith.addf %132, %134 : vector<8x1024xf32>
    %cst_62 = arith.constant 0.000000e+00 : f32
    %136 = vector.broadcast %cst_62 : f32 to vector<8x1024xf32>
    %137 = arith.cmpf ogt, %135, %136 : vector<8x1024xf32>
    %cst_63 = arith.constant 2.000000e-01 : f32
    %138 = vector.broadcast %cst_63 : f32 to vector<8x1024xf32>
    %139 = arith.mulf %138, %135 : vector<8x1024xf32>
    %140 = arith.select %137, %135, %139 : vector<8x1024xi1>, vector<8x1024xf32>
    %141 = arith.truncf %140 : vector<8x1024xf32> to vector<8x1024xbf16>
    %c0_64 = arith.constant 0 : index
    %c0_65 = arith.constant 0 : index
    %142 = vector.load %arg17[%c0_64, %c0_65] : memref<1024x256xbf16, #tpu.memory_space<vmem>>, vector<1024x256xbf16>
    %cst_66 = arith.constant dense<0.000000e+00> : vector<8x256xf32>
    %143 = tpu.matmul %141, %142, %cst_66 {dimension_numbers = #tpu.dot_dimension_numbers<[1], [0], [0], [1], [0, 0, 1, 1], [], []>} : vector<8x1024xbf16>, vector<1024x256xbf16>, vector<8x256xf32> -> vector<8x256xf32>
    %c0_67 = arith.constant 0 : index
    %c0_68 = arith.constant 0 : index
    %144 = vector.load %arg18[%c0_67, %c0_68] : memref<1x256xf32, #tpu.memory_space<vmem>>, vector<1x256xf32>
    %145 = vector.broadcast %144 : vector<1x256xf32> to vector<8x256xf32>
    %146 = arith.addf %143, %145 : vector<8x256xf32>
    %147 = math.tanh %146 : vector<8x256xf32>
    %c0_69 = arith.constant 0 : index
    %c0_70 = arith.constant 0 : index
    %148 = vector.load %arg19[%c0_69, %c0_70] : memref<8x256xf32, #tpu.memory_space<vmem>>, vector<8x256xf32>
    tpu.vector_store %arg19[%c0_69, %c0_70], %147 {strides = array<i32>} : memref<8x256xf32, #tpu.memory_space<vmem>>, vector<8x256xf32>,
    return
  }
  func.func @transform_0(%arg0: i32) -> (i32, i32) {
    %c0_i32 = arith.constant 0 : i32
    %c0_i32_0 = arith.constant 0 : i32
    %c0_i32_1 = arith.constant 0 : i32
    return %c0_i32, %c0_i32_0 : i32, i32
  }
  func.func @transform_1(%arg0: i32) -> (i32, i32) {
    %c0_i32 = arith.constant 0 : i32
    %c0_i32_0 = arith.constant 0 : i32
    %c0_i32_1 = arith.constant 0 : i32
    return %c0_i32, %c0_i32_0 : i32, i32
  }
  func.func @transform_2(%arg0: i32) -> (i32, i32) {
    %c0_i32 = arith.constant 0 : i32
    %c0_i32_0 = arith.constant 0 : i32
    %c0_i32_1 = arith.constant 0 : i32
    return %c0_i32, %c0_i32_0 : i32, i32
  }
  func.func @transform_3(%arg0: i32) -> (i32, i32) {
    %c0_i32 = arith.constant 0 : i32
    %c0_i32_0 = arith.constant 0 : i32
    %c0_i32_1 = arith.constant 0 : i32
    return %c0_i32, %c0_i32_0 : i32, i32
  }
  func.func @transform_4(%arg0: i32) -> (i32, i32) {
    %c0_i32 = arith.constant 0 : i32
    %c0_i32_0 = arith.constant 0 : i32
    %c0_i32_1 = arith.constant 0 : i32
    return %c0_i32, %c0_i32_0 : i32, i32
  }
  func.func @transform_5(%arg0: i32) -> (i32, i32) {
    %c0_i32 = arith.constant 0 : i32
    %c0_i32_0 = arith.constant 0 : i32
    %c0_i32_1 = arith.constant 0 : i32
    return %c0_i32, %c0_i32_0 : i32, i32
  }
  func.func @transform_6(%arg0: i32) -> (i32, i32) {
    %c0_i32 = arith.constant 0 : i32
    %c0_i32_0 = arith.constant 0 : i32
    %c0_i32_1 = arith.constant 0 : i32
    return %c0_i32, %c0_i32_0 : i32, i32
  }
  func.func @transform_7(%arg0: i32) -> (i32, i32) {
    %c0_i32 = arith.constant 0 : i32
    %c0_i32_0 = arith.constant 0 : i32
    %c0_i32_1 = arith.constant 0 : i32
    return %c0_i32, %c0_i32_0 : i32, i32
  }
  func.func @transform_8(%arg0: i32) -> (i32, i32) {
    %c0_i32 = arith.constant 0 : i32
    %c0_i32_0 = arith.constant 0 : i32
    %c0_i32_1 = arith.constant 0 : i32
    return %c0_i32, %c0_i32_0 : i32, i32
  }
  func.func @transform_9(%arg0: i32) -> (i32, i32) {
    %c0_i32 = arith.constant 0 : i32
    %c0_i32_0 = arith.constant 0 : i32
    %c0_i32_1 = arith.constant 0 : i32
    return %c0_i32, %c0_i32_0 : i32, i32
  }
  func.func @transform_10(%arg0: i32) -> (i32, i32) {
    %c0_i32 = arith.constant 0 : i32
    %c0_i32_0 = arith.constant 0 : i32
    %c0_i32_1 = arith.constant 0 : i32
    return %c0_i32, %c0_i32_0 : i32, i32
  }
  func.func @transform_11(%arg0: i32) -> (i32, i32) {
    %c0_i32 = arith.constant 0 : i32
    %c0_i32_0 = arith.constant 0 : i32
    %c0_i32_1 = arith.constant 0 : i32
    return %c0_i32, %c0_i32_0 : i32, i32
  }
  func.func @transform_12(%arg0: i32) -> (i32, i32) {
    %c0_i32 = arith.constant 0 : i32
    %c0_i32_0 = arith.constant 0 : i32
    %c0_i32_1 = arith.constant 0 : i32
    return %c0_i32, %c0_i32_0 : i32, i32
  }
  func.func @transform_13(%arg0: i32) -> (i32, i32) {
    %c0_i32 = arith.constant 0 : i32
    %c0_i32_0 = arith.constant 0 : i32
    %c0_i32_1 = arith.constant 0 : i32
    return %c0_i32, %c0_i32_0 : i32, i32
  }
  func.func @transform_14(%arg0: i32) -> (i32, i32) {
    %c0_i32 = arith.constant 0 : i32
    %c0_i32_0 = arith.constant 0 : i32
    %c0_i32_1 = arith.constant 0 : i32
    return %c0_i32, %c0_i32_0 : i32, i32
  }
  func.func @transform_15(%arg0: i32) -> (i32, i32) {
    %c0_i32 = arith.constant 0 : i32
    %c0_i32_0 = arith.constant 0 : i32
    %c0_i32_1 = arith.constant 0 : i32
    return %c0_i32, %c0_i32_0 : i32, i32
  }
  func.func @transform_16(%arg0: i32) -> (i32, i32) {
    %c0_i32 = arith.constant 0 : i32
    %c0_i32_0 = arith.constant 0 : i32
    %c0_i32_1 = arith.constant 0 : i32
    return %c0_i32, %c0_i32_0 : i32, i32
  }
  func.func @transform_17(%arg0: i32) -> (i32, i32) {
    %c0_i32 = arith.constant 0 : i32
    %c0_i32_0 = arith.constant 0 : i32
    %c0_i32_1 = arith.constant 0 : i32
    return %c0_i32, %c0_i32_0 : i32, i32
  }
  func.func @transform_18(%arg0: i32) -> (i32, i32) {
    %c0_i32 = arith.constant 0 : i32
    %c0_i32_0 = arith.constant 0 : i32
    %c0_i32_1 = arith.constant 0 : i32
    return %c0_i32, %c0_i32_0 : i32, i32
  }
}

</mosaic_0001>

<llo_original>
// kernel: generator_forward.1
$region0: #{generator_forward.1}
  #allocation0 [shape = 'u32[]', space=smem, size = 0x4, offset = 0x4, fixed_abs, tag = 'smem constant byte address 0x4 - core index']
  #allocation1 [shape = 'u32[72,128]{1,0:T(1,128)}', space=vmem, size = 0x9000, scoped, tag = 'internal scratch']
  %s0 = inlined_call_operand.vmem [shape: s32[8,1], index: 0, kind: input, shape index: {}]
  %s1 = inlined_call_operand.vmem [shape: f32[8,8], index: 1, kind: input, shape index: {}]
  %s2 = inlined_call_operand.hbm [shape: f32[8,56], index: 2, kind: input, shape index: {}]
  %s3 = inlined_call_operand.hbm [shape: bf16[8,128], index: 3, kind: input, shape index: {}]
  %s4 = inlined_call_operand.hbm [shape: bf16[56,128], index: 4, kind: input, shape index: {}]
  %s5 = inlined_call_operand.vmem [shape: f32[1,128], index: 5, kind: input, shape index: {}]
  %s6 = inlined_call_operand.hbm [shape: f32[1,128], index: 6, kind: input, shape index: {}]
  %s7 = inlined_call_operand.hbm [shape: bf16[128,256], index: 7, kind: input, shape index: {}]
  %s8 = inlined_call_operand.hbm [shape: f32[1,256], index: 8, kind: input, shape index: {}]
  %s9 = inlined_call_operand.hbm [shape: f32[1,256], index: 9, kind: input, shape index: {}]
  %s10 = inlined_call_operand.hbm [shape: bf16[256,512], index: 10, kind: input, shape index: {}]
  %s11 = inlined_call_operand.hbm [shape: f32[1,512], index: 11, kind: input, shape index: {}]
  %s12 = inlined_call_operand.hbm [shape: f32[1,512], index: 12, kind: input, shape index: {}]
  %s13 = inlined_call_operand.hbm [shape: bf16[512,1024], index: 13, kind: input, shape index: {}]
  %s14 = inlined_call_operand.vmem [shape: f32[1,1024], index: 14, kind: input, shape index: {}]
  %s15 = inlined_call_operand.hbm [shape: f32[1,1024], index: 15, kind: input, shape index: {}]
  %s16 = inlined_call_operand.hbm [shape: bf16[1024,256], index: 16, kind: input, shape index: {}]
  %s17 = inlined_call_operand.hbm [shape: f32[1,256], index: 17, kind: input, shape index: {}]
  %s18 = inlined_call_operand.vmem [shape: f32[8,256], index: 18, kind: output, shape index: {}]
  %s19 = sld [smem:[#allocation0]]
  $region138: #{generator_forward.1} parent=0
    _
  %s21 = ssub.s32 1, %s19
  %s22 = scalar_select 0, %s21, %s19
  $region1: #{generator_forward.1} parent=0
    #allocation2 [shape = 'u8[4096]{0}', space=vmem, size = 0x1000, scoped, tag = 'input window, operand 2, single buffered']
    #allocation3 [shape = 's32[1]{0}', space=sflag, size = 0x4, scoped, tag = 'scoped memory for generator_forward.1']
    #allocation4 [shape = 'u8[2048]{0}', space=vmem, size = 0x800, scoped, tag = 'input window, operand 3, single buffered']
    #allocation5 [shape = 's32[1]{0}', space=sflag, size = 0x4, scoped, tag = 'scoped memory for generator_forward.1']
    #allocation6 [shape = 'u8[14336]{0}', space=vmem, size = 0x3800, scoped, tag = 'input window, operand 4, single buffered']
    #allocation7 [shape = 'u8[512]{0}', space=vmem, size = 0x400, scoped, tag = 'input window, operand 6, single buffered']
    #allocation8 [shape = 's32[1]{0}', space=sflag, size = 0x4, scoped, tag = 'scoped memory for generator_forward.1']
    #allocation9 [shape = 'u8[65536]{0}', space=vmem, size = 0x10000, scoped, tag = 'input window, operand 7, single buffered']
    #allocation10 [shape = 'u8[1024]{0}', space=vmem, size = 0x400, scoped, tag = 'input window, operand 8, single buffered']
    #allocation11 [shape = 's32[1]{0}', space=sflag, size = 0x4, scoped, tag = 'scoped memory for generator_forward.1']
    #allocation12 [shape = 'u8[1024]{0}', space=vmem, size = 0x400, scoped, tag = 'input window, operand 9, single buffered']
    #allocation13 [shape = 'u8[262144]{0}', space=vmem, size = 0x40000, scoped, tag = 'input window, operand 10, single buffered']
    #allocation14 [shape = 's32[1]{0}', space=sflag, size = 0x4, scoped, tag = 'scoped memory for generator_forward.1']
    #allocation15 [shape = 'u8[2048]{0}', space=vmem, size = 0x800, scoped, tag = 'input window, operand 11, single buffered']
    #allocation16 [shape = 'u8[2048]{0}', space=vmem, size = 0x800, scoped, tag = 'input window, operand 12, single buffered']
    #allocation17 [shape = 's32[1]{0}', space=sflag, size = 0x4, scoped, tag = 'scoped memory for generator_forward.1']
    #allocation18 [shape = 'u8[1048576]{0}', space=vmem, size = 0x100000, scoped, tag = 'input window, operand 13, single buffered']
    #allocation19 [shape = 'u8[4096]{0}', space=vmem, size = 0x1000, scoped, tag = 'input window, operand 15, single buffered']
    #allocation20 [shape = 's32[1]{0}', space=sflag, size = 0x4, scoped, tag = 'scoped memory for generator_forward.1']
    #allocation21 [shape = 'u8[524288]{0}', space=vmem, size = 0x80000, scoped, tag = 'input window, operand 16, single buffered']
    #allocation22 [shape = 'u8[1024]{0}', space=vmem, size = 0x400, scoped, tag = 'input window, operand 17, single buffered']
    #allocation23 [shape = 's32[1]{0}', space=sflag, size = 0x4, scoped, tag = 'scoped memory for generator_forward.1']
    %23 = vsyncpa [#allocation3], 0
    %24 = vsyncpa [#allocation5], 0
    %25 = vsyncpa [#allocation8], 0
    %26 = vsyncpa [#allocation11], 0
    %27 = vsyncpa [#allocation14], 0
    %28 = vsyncpa [#allocation17], 0
    %29 = vsyncpa [#allocation20], 0
    %30 = vsyncpa [#allocation23], 0
    // Predicated region
    $region2: #{generator_forward.1} parent=1 // pred_check
      _
    $region3: #{generator_forward.1} parent=1 // pred_check_branch
      %32 = sbr.rel (0) target = $region5
    $region4: #{generator_forward.1} parent=1 // pred_region
      _
    $region5: #{generator_forward.1} parent=1 // pred_fallthru
      _
    // Predicated region
    $region6: #{generator_forward.1} parent=1 // pred_check
      _
    $region7: #{generator_forward.1} parent=1 // pred_check_branch
      %34 = sbr.rel (0) target = $region9
    $region8: #{generator_forward.1} parent=1 // pred_region
      _
    $region9: #{generator_forward.1} parent=1 // pred_fallthru
      _
    // Predicated region
    $region10: #{generator_forward.1} parent=1 // pred_check
      _
    $region11: #{generator_forward.1} parent=1 // pred_check_branch
      %36 = sbr.rel (0) target = $region13
    $region12: #{generator_forward.1} parent=1 // pred_region
      %38 = vsyncadd [#allocation3], 0
      %s40 = sshll.u32 %s2, 4
      %s41 = int_to_ptr.hbm [resolvable:$true] %s40
      %s42 = sshll.u32 [#allocation2], 4
      %s43 = int_to_ptr.vmem [resolvable:$true] %s42
      %45 = dma.hbm_to_vmem [thread:$0]  %s41, 128, %s43, [#allocation3]
    $region13: #{generator_forward.1} parent=1 // pred_fallthru
      _
    // Predicated region
    $region14: #{generator_forward.1} parent=1 // pred_check
      _
    $region15: #{generator_forward.1} parent=1 // pred_check_branch
      %47 = sbr.rel (0) target = $region17
    $region16: #{generator_forward.1} parent=1 // pred_region
      %49 = vsyncadd [#allocation5], 0
      %s51 = sshll.u32 %s3, 4
      %s52 = int_to_ptr.hbm [resolvable:$true] %s51
      %s53 = sshll.u32 [#allocation4], 4
      %s54 = int_to_ptr.vmem [resolvable:$true] %s53
      %56 = dma.hbm_to_vmem [thread:$0]  %s52, 64, %s54, [#allocation5]
    $region17: #{generator_forward.1} parent=1 // pred_fallthru
      _
    // Predicated region
    $region18: #{generator_forward.1} parent=1 // pred_check
      _
    $region19: #{generator_forward.1} parent=1 // pred_check_branch
      %58 = sbr.rel (0) target = $region21
    $region20: #{generator_forward.1} parent=1 // pred_region
      %60 = vsyncadd [#allocation5], 0
      %s61 = sshll.u32 %s4, 4
      %s62 = int_to_ptr.hbm [resolvable:$true] %s61
      %s63 = sshll.u32 [#allocation6], 4
      %s64 = int_to_ptr.vmem [resolvable:$true] %s63
      %69 = dma.hbm_to_vmem [thread:$0]  %s62, 448, %s64, [#allocation5], 64, 64, 4
    $region21: #{generator_forward.1} parent=1 // pred_fallthru
      _
    // Predicated region
    $region22: #{generator_forward.1} parent=1 // pred_check
      _
    $region23: #{generator_forward.1} parent=1 // pred_check_branch
      %71 = sbr.rel (0) target = $region25
    $region24: #{generator_forward.1} parent=1 // pred_region
      _
    $region25: #{generator_forward.1} parent=1 // pred_fallthru
      _
    // Predicated region
    $region26: #{generator_forward.1} parent=1 // pred_check
      _
    $region27: #{generator_forward.1} parent=1 // pred_check_branch
      %73 = sbr.rel (0) target = $region29
    $region28: #{generator_forward.1} parent=1 // pred_region
      %75 = vsyncadd [#allocation8], 0
      %s77 = sshll.u32 %s6, 4
      %s78 = int_to_ptr.hbm [resolvable:$true] %s77
      %s79 = sshll.u32 [#allocation7], 4
      %s80 = int_to_ptr.vmem [resolvable:$true] %s79
      %82 = dma.hbm_to_vmem [thread:$0]  %s78, 16, %s80, [#allocation8]
    $region29: #{generator_forward.1} parent=1 // pred_fallthru
      _
    // Predicated region
    $region30: #{generator_forward.1} parent=1 // pred_check
      _
    $region31: #{generator_forward.1} parent=1 // pred_check_branch
      %84 = sbr.rel (0) target = $region33
    $region32: #{generator_forward.1} parent=1 // pred_region
      %86 = vsyncadd [#allocation8], 0
      %s87 = sshll.u32 %s7, 4
      %s88 = int_to_ptr.hbm [resolvable:$true] %s87
      %s89 = sshll.u32 [#allocation9], 4
      %s90 = int_to_ptr.vmem [resolvable:$true] %s89
      %95 = dma.hbm_to_vmem [thread:$0]  %s88, 2048, %s90, [#allocation8], 128, 128, 8
    $region33: #{generator_forward.1} parent=1 // pred_fallthru
      _
    // Predicated region
    $region34: #{generator_forward.1} parent=1 // pred_check
      _
    $region35: #{generator_forward.1} parent=1 // pred_check_branch
      %97 = sbr.rel (0) target = $region37
    $region36: #{generator_forward.1} parent=1 // pred_region
      %99 = vsyncadd [#allocation11], 0
      %s101 = sshll.u32 %s8, 4
      %s102 = int_to_ptr.hbm [resolvable:$true] %s101
      %s103 = sshll.u32 [#allocation10], 4
      %s104 = int_to_ptr.vmem [resolvable:$true] %s103
      %106 = dma.hbm_to_vmem [thread:$0]  %s102, 32, %s104, [#allocation11]
    $region37: #{generator_forward.1} parent=1 // pred_fallthru
      _
    // Predicated region
    $region38: #{generator_forward.1} parent=1 // pred_check
      _
    $region39: #{generator_forward.1} parent=1 // pred_check_branch
      %108 = sbr.rel (0) target = $region41
    $region40: #{generator_forward.1} parent=1 // pred_region
      %110 = vsyncadd [#allocation11], 0
      %s112 = sshll.u32 %s9, 4
      %s113 = int_to_ptr.hbm [resolvable:$true] %s112
      %s114 = sshll.u32 [#allocation12], 4
      %s115 = int_to_ptr.vmem [resolvable:$true] %s114
      %117 = dma.hbm_to_vmem [thread:$0]  %s113, 32, %s115, [#allocation11]
    $region41: #{generator_forward.1} parent=1 // pred_fallthru
      _
    // Predicated region
    $region42: #{generator_forward.1} parent=1 // pred_check
      _
    $region43: #{generator_forward.1} parent=1 // pred_check_branch
      %119 = sbr.rel (0) target = $region45
    $region44: #{generator_forward.1} parent=1 // pred_region
      %121 = vsyncadd [#allocation14], 0
      %s122 = sshll.u32 %s10, 4
      %s123 = int_to_ptr.hbm [resolvable:$true] %s122
      %s124 = sshll.u32 [#allocation13], 4
      %s125 = int_to_ptr.vmem [resolvable:$true] %s124
      %130 = dma.hbm_to_vmem [thread:$0]  %s123, 8192, %s125, [#allocation14], 256, 256, 16
    $region45: #{generator_forward.1} parent=1 // pred_fallthru
      _
    // Predicated region
    $region46: #{generator_forward.1} parent=1 // pred_check
      _
    $region47: #{generator_forward.1} parent=1 // pred_check_branch
      %132 = sbr.rel (0) target = $region49
    $region48: #{generator_forward.1} parent=1 // pred_region
      %134 = vsyncadd [#allocation14], 0
      %s136 = sshll.u32 %s11, 4
      %s137 = int_to_ptr.hbm [resolvable:$true] %s136
      %s138 = sshll.u32 [#allocation15], 4
      %s139 = int_to_ptr.vmem [resolvable:$true] %s138
      %141 = dma.hbm_to_vmem [thread:$0]  %s137, 64, %s139, [#allocation14]
    $region49: #{generator_forward.1} parent=1 // pred_fallthru
      _
    // Predicated region
    $region50: #{generator_forward.1} parent=1 // pred_check
      _
    $region51: #{generator_forward.1} parent=1 // pred_check_branch
      %143 = sbr.rel (0) target = $region53
    $region52: #{generator_forward.1} parent=1 // pred_region
      %145 = vsyncadd [#allocation17], 0
      %s147 = sshll.u32 %s12, 4
      %s148 = int_to_ptr.hbm [resolvable:$true] %s147
      %s149 = sshll.u32 [#allocation16], 4
      %s150 = int_to_ptr.vmem [resolvable:$true] %s149
      %152 = dma.hbm_to_vmem [thread:$0]  %s148, 64, %s150, [#allocation17]
    $region53: #{generator_forward.1} parent=1 // pred_fallthru
      _
    // Predicated region
    $region54: #{generator_forward.1} parent=1 // pred_check
      _
    $region55: #{generator_forward.1} parent=1 // pred_check_branch
      %154 = sbr.rel (0) target = $region57
    $region56: #{generator_forward.1} parent=1 // pred_region
      %156 = vsyncadd [#allocation17], 0
      %s157 = sshll.u32 %s13, 4
      %s158 = int_to_ptr.hbm [resolvable:$true] %s157
      %s159 = sshll.u32 [#allocation18], 4
      %s160 = int_to_ptr.vmem [resolvable:$true] %s159
      %165 = dma.hbm_to_vmem [thread:$0]  %s158, 32768, %s160, [#allocation17], 512, 512, 32
    $region57: #{generator_forward.1} parent=1 // pred_fallthru
      _
    // Predicated region
    $region58: #{generator_forward.1} parent=1 // pred_check
      _
    $region59: #{generator_forward.1} parent=1 // pred_check_branch
      %167 = sbr.rel (0) target = $region61
    $region60: #{generator_forward.1} parent=1 // pred_region
      _
    $region61: #{generator_forward.1} parent=1 // pred_fallthru
      _
    // Predicated region
    $region62: #{generator_forward.1} parent=1 // pred_check
      _
    $region63: #{generator_forward.1} parent=1 // pred_check_branch
      %169 = sbr.rel (0) target = $region65
    $region64: #{generator_forward.1} parent=1 // pred_region
      %171 = vsyncadd [#allocation20], 0
      %s173 = sshll.u32 %s15, 4
      %s174 = int_to_ptr.hbm [resolvable:$true] %s173
      %s175 = sshll.u32 [#allocation19], 4
      %s176 = int_to_ptr.vmem [resolvable:$true] %s175
      %178 = dma.hbm_to_vmem [thread:$0]  %s174, 128, %s176, [#allocation20]
    $region65: #{generator_forward.1} parent=1 // pred_fallthru
      _
    // Predicated region
    $region66: #{generator_forward.1} parent=1 // pred_check
      _
    $region67: #{generator_forward.1} parent=1 // pred_check_branch
      %180 = sbr.rel (0) target = $region69
    $region68: #{generator_forward.1} parent=1 // pred_region
      %182 = vsyncadd [#allocation20], 0
      %s183 = sshll.u32 %s16, 4
      %s184 = int_to_ptr.hbm [resolvable:$true] %s183
      %s185 = sshll.u32 [#allocation21], 4
      %s186 = int_to_ptr.vmem [resolvable:$true] %s185
      %191 = dma.hbm_to_vmem [thread:$0]  %s184, 16384, %s186, [#allocation20], 128, 128, 8
    $region69: #{generator_forward.1} parent=1 // pred_fallthru
      _
    // Predicated region
    $region70: #{generator_forward.1} parent=1 // pred_check
      _
    $region71: #{generator_forward.1} parent=1 // pred_check_branch
      %193 = sbr.rel (0) target = $region73
    $region72: #{generator_forward.1} parent=1 // pred_region
      %195 = vsyncadd [#allocation23], 0
      %s197 = sshll.u32 %s17, 4
      %s198 = int_to_ptr.hbm [resolvable:$true] %s197
      %s199 = sshll.u32 [#allocation22], 4
      %s200 = int_to_ptr.vmem [resolvable:$true] %s199
      %202 = dma.hbm_to_vmem [thread:$0]  %s198, 32, %s200, [#allocation23]
    $region73: #{generator_forward.1} parent=1 // pred_fallthru
      _
    // Predicated region
    $region74: #{generator_forward.1} parent=1 // pred_check
      _
    $region75: #{generator_forward.1} parent=1 // pred_check_branch
      %204 = sbr.rel (0) target = $region77
    $region76: #{generator_forward.1} parent=1 // pred_region
      %206 = dma.done [#allocation3], 128
    $region77: #{generator_forward.1} parent=1 // pred_fallthru
      _
    // Predicated region
    $region78: #{generator_forward.1} parent=1 // pred_check
      _
    $region79: #{generator_forward.1} parent=1 // pred_check_branch
      %208 = sbr.rel (0) target = $region81
    $region80: #{generator_forward.1} parent=1 // pred_region
      %210 = dma.done [#allocation5], 64
    $region81: #{generator_forward.1} parent=1 // pred_fallthru
      _
    // Predicated region
    $region82: #{generator_forward.1} parent=1 // pred_check
      _
    $region83: #{generator_forward.1} parent=1 // pred_check_branch
      %212 = sbr.rel (0) target = $region85
    $region84: #{generator_forward.1} parent=1 // pred_region
      %214 = dma.done [#allocation5], 448
    $region85: #{generator_forward.1} parent=1 // pred_fallthru
      _
    // Predicated region
    $region86: #{generator_forward.1} parent=1 // pred_check
      _
    $region87: #{generator_forward.1} parent=1 // pred_check_branch
      %216 = sbr.rel (0) target = $region89
    $region88: #{generator_forward.1} parent=1 // pred_region
      %218 = dma.done [#allocation8], 16
    $region89: #{generator_forward.1} parent=1 // pred_fallthru
      _
    // Predicated region
    $region90: #{generator_forward.1} parent=1 // pred_check
      _
    $region91: #{generator_forward.1} parent=1 // pred_check_branch
      %220 = sbr.rel (0) target = $region93
    $region92: #{generator_forward.1} parent=1 // pred_region
      %222 = dma.done [#allocation8], 2048
    $region93: #{generator_forward.1} parent=1 // pred_fallthru
      _
    // Predicated region
    $region94: #{generator_forward.1} parent=1 // pred_check
      _
    $region95: #{generator_forward.1} parent=1 // pred_check_branch
      %224 = sbr.rel (0) target = $region97
    $region96: #{generator_forward.1} parent=1 // pred_region
      %226 = dma.done [#allocation11], 32
    $region97: #{generator_forward.1} parent=1 // pred_fallthru
      _
    // Predicated region
    $region98: #{generator_forward.1} parent=1 // pred_check
      _
    $region99: #{generator_forward.1} parent=1 // pred_check_branch
      %228 = sbr.rel (0) target = $region101
    $region100: #{generator_forward.1} parent=1 // pred_region
      %230 = dma.done [#allocation11], 32
    $region101: #{generator_forward.1} parent=1 // pred_fallthru
      _
    // Predicated region
    $region102: #{generator_forward.1} parent=1 // pred_check
      _
    $region103: #{generator_forward.1} parent=1 // pred_check_branch
      %232 = sbr.rel (0) target = $region105
    $region104: #{generator_forward.1} parent=1 // pred_region
      %234 = dma.done [#allocation14], 8192
    $region105: #{generator_forward.1} parent=1 // pred_fallthru
      _
    // Predicated region
    $region106: #{generator_forward.1} parent=1 // pred_check
      _
    $region107: #{generator_forward.1} parent=1 // pred_check_branch
      %236 = sbr.rel (0) target = $region109
    $region108: #{generator_forward.1} parent=1 // pred_region
      %238 = dma.done [#allocation14], 64
    $region109: #{generator_forward.1} parent=1 // pred_fallthru
      _
    // Predicated region
    $region110: #{generator_forward.1} parent=1 // pred_check
      _
    $region111: #{generator_forward.1} parent=1 // pred_check_branch
      %240 = sbr.rel (0) target = $region113
    $region112: #{generator_forward.1} parent=1 // pred_region
      %242 = dma.done [#allocation17], 64
    $region113: #{generator_forward.1} parent=1 // pred_fallthru
      _
    // Predicated region
    $region114: #{generator_forward.1} parent=1 // pred_check
      _
    $region115: #{generator_forward.1} parent=1 // pred_check_branch
      %244 = sbr.rel (0) target = $region117
    $region116: #{generator_forward.1} parent=1 // pred_region
      %246 = dma.done [#allocation17], 32768
    $region117: #{generator_forward.1} parent=1 // pred_fallthru
      _
    // Predicated region
    $region118: #{generator_forward.1} parent=1 // pred_check
      _
    $region119: #{generator_forward.1} parent=1 // pred_check_branch
      %248 = sbr.rel (0) target = $region121
    $region120: #{generator_forward.1} parent=1 // pred_region
      %250 = dma.done [#allocation20], 128
    $region121: #{generator_forward.1} parent=1 // pred_fallthru
      _
    // Predicated region
    $region122: #{generator_forward.1} parent=1 // pred_check
      _
    $region123: #{generator_forward.1} parent=1 // pred_check_branch
      %252 = sbr.rel (0) target = $region125
    $region124: #{generator_forward.1} parent=1 // pred_region
      %254 = dma.done [#allocation20], 16384
    $region125: #{generator_forward.1} parent=1 // pred_fallthru
      _
    // Predicated region
    $region126: #{generator_forward.1} parent=1 // pred_check
      _
    $region127: #{generator_forward.1} parent=1 // pred_check_branch
      %256 = sbr.rel (0) target = $region129
    $region128: #{generator_forward.1} parent=1 // pred_region
      %258 = dma.done [#allocation23], 32
    $region129: #{generator_forward.1} parent=1 // pred_fallthru
      _
    %v260 = vlaneseq
    %v261 = vand.u32 %v260, 127
    %v262 = vld [vmem:[%s0] sm:$0xff]
    %263 = vset.pattern.permute.xlu0 0
    %264 = vperm.xlu0 %263, %v262
    %v265 = vpop.permute.xlu0 %264
    %vm266 = vcmp.eq.s32.totalorder %v261, %v265
    %v267 = vsel %vm266, 1, 0
    %v268 = vcvt.s32.f32 %v267
    %v269 = vld [vmem:[%s1] sm:$0xff]
    %vm270 = vcmask 64512
    %v272 = vsel %vm270, %v268, 0
    %274 = vmatpush.msra.mxu0 0.0
    %275 = vmatpush.msra.mxu0 0.0
    %276 = vmatpush.msra.mxu0 0.0
    %277 = vmatpush.msra.mxu0 0.0
    %278 = vmatpush.msra.mxu0 0.0
    %279 = vmatpush.msra.mxu0 0.0
    %280 = vmatpush.msra.mxu0 0.0
    %281 = vmatpush.msra.mxu0 0.0
    %282 = vmatpush.msra.mxu0 0.0
    %283 = vmatpush.msra.mxu0 0.0
    %284 = vmatpush.msra.mxu0 0.0
    %285 = vmatpush.msra.mxu0 0.0
    %286 = vmatpush.msra.mxu0 0.0
    %287 = vmatpush.msra.mxu0 0.0
    %288 = vmatpush.msra.mxu0 0.0
    %289 = vmatpush.msra.mxu0 %v269
    %290 = vmatmul.f32.gmra.mxu0 %v272
    %v291 = vpop.f32.mrf.mxu0
    %v292 = vadd.f32 0.0, %v291
    %293 = vdwg.mxu0
    %v294 = vpack.c.bf16 %v292, %v292
    %v295 = vld [vmem:[#allocation4] sm:$0xf]
    %v296 = vld [vmem:[#allocation2] sm:$0xff]
    %v297 = vpack.c.bf16 %v296, %v296
    %v298 = vld [vmem:[#allocation6] sm:$0xf]
    %v299 = vld [vmem:[#allocation6 + $0x4] sm:$0xf]
    %v300 = vld [vmem:[#allocation6 + $0x8] sm:$0xf]
    %v301 = vld [vmem:[#allocation6 + $0xc] sm:$0xf]
    %v302 = vld [vmem:[#allocation6 + $0x10] sm:$0xf]
    %v303 = vld [vmem:[#allocation6 + $0x14] sm:$0xf]
    %v304 = vld [vmem:[#allocation6 + $0x18] sm:$0xf]
    %v312 = vunpack.c.l.b16 %v298
    %v313 = vunpack.c.l.b16 %v299
    %v314 = vunpack.c.l.b16 %v300
    %v315 = vunpack.c.l.b16 %v301
    %v316 = vunpack.c.l.b16 %v302
    %v317 = vunpack.c.l.b16 %v303
    %v318 = vunpack.c.l.b16 %v304
    %v319 = vpack.c.b16 %v313, %v312
    %v320 = vpack.c.b16 %v315, %v314
    %v321 = vpack.c.b16 %v317, %v316
    %v322 = vpack.c.b16 %v318, %v318
    %vm326 = vcmask 457728
    %v328 = vsel %vm326, %v297, 0
    %vm330 = vcmask 1043456
    %v332 = vsel %vm330, %v322, 0
    %334 = vmatpush.bf16.msra.mxu0 0
    %335 = vmatpush.bf16.msra.mxu0 0
    %336 = vmatpush.bf16.msra.mxu0 0
    %337 = vmatpush.bf16.msra.mxu0 0
    %338 = vmatpush.bf16.msra.mxu0 %v332
    %339 = vmatpush.bf16.msra.mxu0 %v321
    %340 = vmatpush.bf16.msra.mxu0 %v320
    %341 = vmatpush.bf16.msra.mxu0 %v319
    %342 = vmatmul.bf16.gmra.mxu0 %v328
    %v343 = vpop.f32.mrf.mxu0
    %v344 = vadd.f32 0.0, %v343
    %v345 = vpop.f32.mrf.mxu0
    %346 = vdwg.mxu0
    %v348 = vsel %vm270, %v294, 0
    %v351 = vsel %vm330, %v295, 0
    %353 = vmatpush.bf16.msra.mxu0 0
    %354 = vmatpush.bf16.msra.mxu0 0
    %355 = vmatpush.bf16.msra.mxu0 0
    %356 = vmatpush.bf16.msra.mxu0 0
    %357 = vmatpush.bf16.msra.mxu0 0
    %358 = vmatpush.bf16.msra.mxu0 0
    %359 = vmatpush.bf16.msra.mxu0 0
    %360 = vmatpush.bf16.msra.mxu0 %v351
    %361 = vmatmul.bf16.gmra.mxu0 %v348
    %v362 = vpop.f32.mrf.mxu0
    %v363 = vadd.f32 %v344, %v362
    %v364 = vpop.f32.mrf.mxu0
    %365 = vdwg.mxu0
    %v366 = vrot.slane %v363, 4
    %v367 = vadd.f32 %v363, %v366
    %v368 = vrot.slane %v367, 2
    %v369 = vadd.f32 %v367, %v368
    %v370 = vrot.slane %v369, 1
    %v371 = vadd.f32 %v369, %v370
    %v372 = vrcp.pop 8.0
    %v373 = vmul.f32 8.0, %v372
    %v374 = vsub.f32 1.0, %v373
    %v375 = vmul.f32 %v372, %v374
    %v376 = vadd.f32 %v372, %v375
    %vm377 = vweird.f32 %v372
    %v378 = vsel %vm377, %v372, %v376
    %v379 = vmul.f32 %v371, %v378
    %v380 = vmul.f32 %v363, %v363
    %v381 = vrot.slane %v380, 4
    %v382 = vadd.f32 %v380, %v381
    %v383 = vrot.slane %v382, 2
    %v384 = vadd.f32 %v382, %v383
    %v385 = vrot.slane %v384, 1
    %v386 = vadd.f32 %v384, %v385
    %v387 = vmul.f32 %v386, %v378
    %v388 = vmul.f32 %v379, %v379
    %v389 = vsub.f32 %v387, %v388
    %v390 = vsub.f32 %v363, %v379
    %v391 = vadd.f32 %v389, 0.8
    %v392 = vrsqrt.pop %v391
    %v393 = vmul.f32 %v392, %v391
    %v394 = vmul.f32 %v393, %v392
    %v395 = vmul.f32 0.5, %v394
    %v396 = vsub.f32 1.5, %v395
    %v397 = vmul.f32 %v392, %v396
    %vm398 = vweird.f32 %v391
    %vm399 = vweird.f32 %v392
    %vm400 = vmor %vm398, %vm399
    %v401 = vsel %vm400, %v392, %v397
    %v402 = vmul.f32 %v390, %v401
    %v403 = vld [vmem:[%s5] sm:$0x1]
    %v405 = vperm.slane %v403, 0
    %v407 = vmul.f32 %v402, %v405
    %v408 = vld [vmem:[#allocation7] sm:$0x1]
    %v410 = vperm.slane %v408, 0
    %v412 = vadd.f32 %v407, %v410
    %vm413 = vcmp.gt.f32.partialorder %v412, 0.0
    %v414 = vmul.f32 %v412, 0.2
    %v415 = vsel %vm413, %v412, %v414
    %v416 = vpack.c.bf16 %v415, %v415
    %v417 = vld [vmem:[#allocation9] sm:$0xff]
    %v418 = vld [vmem:[#allocation9 + $0x8] sm:$0xff]
    %v419 = vld [vmem:[#allocation9 + $0x10] sm:$0xff]
    %v420 = vld [vmem:[#allocation9 + $0x18] sm:$0xff]
    %v421 = vld [vmem:[#allocation9 + $0x20] sm:$0xff]
    %v422 = vld [vmem:[#allocation9 + $0x28] sm:$0xff]
    %v423 = vld [vmem:[#allocation9 + $0x30] sm:$0xff]
    %v424 = vld [vmem:[#allocation9 + $0x38] sm:$0xff]
    %v425 = vld [vmem:[#allocation9 + $0x40] sm:$0xff]
    %v426 = vld [vmem:[#allocation9 + $0x48] sm:$0xff]
    %v427 = vld [vmem:[#allocation9 + $0x50] sm:$0xff]
    %v428 = vld [vmem:[#allocation9 + $0x58] sm:$0xff]
    %v429 = vld [vmem:[#allocation9 + $0x60] sm:$0xff]
    %v430 = vld [vmem:[#allocation9 + $0x68] sm:$0xff]
    %v431 = vld [vmem:[#allocation9 + $0x70] sm:$0xff]
    %v432 = vld [vmem:[#allocation9 + $0x78] sm:$0xff]
    %v449 = vunpack.c.l.b16 %v417
    %v450 = vunpack.c.h.b16 %v417
    %v451 = vunpack.c.l.b16 %v418
    %v452 = vunpack.c.h.b16 %v418
    %v453 = vunpack.c.l.b16 %v419
    %v454 = vunpack.c.h.b16 %v419
    %v455 = vunpack.c.l.b16 %v420
    %v456 = vunpack.c.h.b16 %v420
    %v457 = vunpack.c.l.b16 %v421
    %v458 = vunpack.c.h.b16 %v421
    %v459 = vunpack.c.l.b16 %v422
    %v460 = vunpack.c.h.b16 %v422
    %v461 = vunpack.c.l.b16 %v423
    %v462 = vunpack.c.h.b16 %v423
    %v463 = vunpack.c.l.b16 %v424
    %v464 = vunpack.c.h.b16 %v424
    %v465 = vunpack.c.l.b16 %v425
    %v466 = vunpack.c.h.b16 %v425
    %v467 = vunpack.c.l.b16 %v426
    %v468 = vunpack.c.h.b16 %v426
    %v469 = vunpack.c.l.b16 %v427
    %v470 = vunpack.c.h.b16 %v427
    %v471 = vunpack.c.l.b16 %v428
    %v472 = vunpack.c.h.b16 %v428
    %v473 = vunpack.c.l.b16 %v429
    %v474 = vunpack.c.h.b16 %v429
    %v475 = vunpack.c.l.b16 %v430
    %v476 = vunpack.c.h.b16 %v430
    %v477 = vunpack.c.l.b16 %v431
    %v478 = vunpack.c.h.b16 %v431
    %v479 = vunpack.c.l.b16 %v432
    %v480 = vunpack.c.h.b16 %v432
    %v481 = vpack.c.b16 %v451, %v449
    %v482 = vpack.c.b16 %v452, %v450
    %v483 = vpack.c.b16 %v455, %v453
    %v484 = vpack.c.b16 %v456, %v454
    %v485 = vpack.c.b16 %v459, %v457
    %v486 = vpack.c.b16 %v460, %v458
    %v487 = vpack.c.b16 %v463, %v461
    %v488 = vpack.c.b16 %v464, %v462
    %v489 = vpack.c.b16 %v467, %v465
    %v490 = vpack.c.b16 %v468, %v466
    %v491 = vpack.c.b16 %v471, %v469
    %v492 = vpack.c.b16 %v472, %v470
    %v493 = vpack.c.b16 %v475, %v473
    %v494 = vpack.c.b16 %v476, %v474
    %v495 = vpack.c.b16 %v479, %v477
    %v496 = vpack.c.b16 %v480, %v478
    %513 = vmatpush.bf16.msra.mxu0 %v495
    %514 = vmatpush.bf16.msra.mxu0 %v493
    %515 = vmatpush.bf16.msra.mxu0 %v491
    %516 = vmatpush.bf16.msra.mxu0 %v489
    %517 = vmatpush.bf16.msra.mxu0 %v487
    %518 = vmatpush.bf16.msra.mxu0 %v485
    %519 = vmatpush.bf16.msra.mxu0 %v483
    %520 = vmatpush.bf16.msra.mxu0 %v481
    %521 = vmatmul.bf16.gmra.mxu0 %v416
    %v522 = vpop.f32.mrf.mxu0
    %v523 = vadd.f32 0.0, %v522
    %v524 = vpop.f32.mrf.mxu0
    %525 = vdwg.mxu0
    %526 = vmatpush.bf16.msra.mxu0 %v496
    %527 = vmatpush.bf16.msra.mxu0 %v494
    %528 = vmatpush.bf16.msra.mxu0 %v492
    %529 = vmatpush.bf16.msra.mxu0 %v490
    %530 = vmatpush.bf16.msra.mxu0 %v488
    %531 = vmatpush.bf16.msra.mxu0 %v486
    %532 = vmatpush.bf16.msra.mxu0 %v484
    %533 = vmatpush.bf16.msra.mxu0 %v482
    %534 = vmatmul.bf16.gmra.mxu0 %v416
    %v535 = vpop.f32.mrf.mxu0
    %v536 = vadd.f32 0.0, %v535
    %v537 = vpop.f32.mrf.mxu0
    %538 = vdwg.mxu0
    %v539 = vrot.slane %v523, 4
    %v540 = vadd.f32 %v523, %v539
    %v541 = vrot.slane %v540, 2
    %v542 = vadd.f32 %v540, %v541
    %v543 = vrot.slane %v542, 1
    %v544 = vadd.f32 %v542, %v543
    %v545 = vrot.slane %v536, 4
    %v546 = vadd.f32 %v536, %v545
    %v547 = vrot.slane %v546, 2
    %v548 = vadd.f32 %v546, %v547
    %v549 = vrot.slane %v548, 1
    %v550 = vadd.f32 %v548, %v549
    %v551 = vmul.f32 %v544, %v378
    %v552 = vmul.f32 %v550, %v378
    %v553 = vmul.f32 %v523, %v523
    %v554 = vmul.f32 %v536, %v536
    %v555 = vrot.slane %v553, 4
    %v556 = vadd.f32 %v553, %v555
    %v557 = vrot.slane %v556, 2
    %v558 = vadd.f32 %v556, %v557
    %v559 = vrot.slane %v558, 1
    %v560 = vadd.f32 %v558, %v559
    %v561 = vrot.slane %v554, 4
    %v562 = vadd.f32 %v554, %v561
    %v563 = vrot.slane %v562, 2
    %v564 = vadd.f32 %v562, %v563
    %v565 = vrot.slane %v564, 1
    %v566 = vadd.f32 %v564, %v565
    %v567 = vmul.f32 %v560, %v378
    %v568 = vmul.f32 %v566, %v378
    %v569 = vmul.f32 %v551, %v551
    %v570 = vmul.f32 %v552, %v552
    %v571 = vsub.f32 %v567, %v569
    %v572 = vsub.f32 %v568, %v570
    %v573 = vsub.f32 %v523, %v551
    %v574 = vsub.f32 %v536, %v552
    %v575 = vadd.f32 %v571, 0.8
    %v576 = vadd.f32 %v572, 0.8
    %v577 = vrsqrt.pop %v575
    %v578 = vmul.f32 %v577, %v575
    %v579 = vmul.f32 %v578, %v577
    %v580 = vmul.f32 0.5, %v579
    %v581 = vsub.f32 1.5, %v580
    %v582 = vmul.f32 %v577, %v581
    %vm583 = vweird.f32 %v575
    %vm584 = vweird.f32 %v577
    %vm585 = vmor %vm583, %vm584
    %v586 = vsel %vm585, %v577, %v582
    %v587 = vrsqrt.pop %v576
    %v588 = vmul.f32 %v587, %v576
    %v589 = vmul.f32 %v588, %v587
    %v590 = vmul.f32 0.5, %v589
    %v591 = vsub.f32 1.5, %v590
    %v592 = vmul.f32 %v587, %v591
    %vm593 = vweird.f32 %v576
    %vm594 = vweird.f32 %v587
    %vm595 = vmor %vm593, %vm594
    %v596 = vsel %vm595, %v587, %v592
    %v597 = vmul.f32 %v573, %v586
    %v598 = vmul.f32 %v574, %v596
    %v599 = vld [vmem:[#allocation10] sm:$0x3]
    %v601 = vperm.slane %v599, 0
    %v602 = vperm.slane %v599, 1
    %v605 = vmul.f32 %v597, %v601
    %v606 = vmul.f32 %v598, %v602
    %v607 = vld [vmem:[#allocation12] sm:$0x3]
    %v609 = vperm.slane %v607, 0
    %v610 = vperm.slane %v607, 1
    %v613 = vadd.f32 %v605, %v609
    %v614 = vadd.f32 %v606, %v610
    %vm615 = vcmp.gt.f32.partialorder %v613, 0.0
    %vm616 = vcmp.gt.f32.partialorder %v614, 0.0
    %v617 = vmul.f32 %v613, 0.2
    %v618 = vmul.f32 %v614, 0.2
    %v619 = vsel %vm615, %v613, %v617
    %v620 = vsel %vm616, %v614, %v618
    %v621 = vpack.c.bf16 %v619, %v619
    %v622 = vpack.c.bf16 %v620, %v620
    %v623 = vld [vmem:[#allocation13] sm:$0xff]
    %v624 = vld [vmem:[#allocation13 + $0x8] sm:$0xff]
    %v625 = vld [vmem:[#allocation13 + $0x10] sm:$0xff]
    %v626 = vld [vmem:[#allocation13 + $0x18] sm:$0xff]
    %v627 = vld [vmem:[#allocation13 + $0x20] sm:$0xff]
    %v628 = vld [vmem:[#allocation13 + $0x28] sm:$0xff]
    %v629 = vld [vmem:[#allocation13 + $0x30] sm:$0xff]
    %v630 = vld [vmem:[#allocation13 + $0x38] sm:$0xff]
    %v631 = vld [vmem:[#allocation13 + $0x40] sm:$0xff]
    %v632 = vld [vmem:[#allocation13 + $0x48] sm:$0xff]
    %v633 = vld [vmem:[#allocation13 + $0x50] sm:$0xff]
    %v634 = vld [vmem:[#allocation13 + $0x58] sm:$0xff]
    %v635 = vld [vmem:[#allocation13 + $0x60] sm:$0xff]
    %v636 = vld [vmem:[#allocation13 + $0x68] sm:$0xff]
    %v637 = vld [vmem:[#allocation13 + $0x70] sm:$0xff]
    %v638 = vld [vmem:[#allocation13 + $0x78] sm:$0xff]
    %v639 = vld [vmem:[#allocation13 + $0x80] sm:$0xff]
    %v640 = vld [vmem:[#allocation13 + $0x88] sm:$0xff]
    %v641 = vld [vmem:[#allocation13 + $0x90] sm:$0xff]
    %v642 = vld [vmem:[#allocation13 + $0x98] sm:$0xff]
    %v643 = vld [vmem:[#allocation13 + $0xa0] sm:$0xff]
    %v644 = vld [vmem:[#allocation13 + $0xa8] sm:$0xff]
    %v645 = vld [vmem:[#allocation13 + $0xb0] sm:$0xff]
    %v646 = vld [vmem:[#allocation13 + $0xb8] sm:$0xff]
    %v647 = vld [vmem:[#allocation13 + $0xc0] sm:$0xff]
    %v648 = vld [vmem:[#allocation13 + $0xc8] sm:$0xff]
    %v649 = vld [vmem:[#allocation13 + $0xd0] sm:$0xff]
    %v650 = vld [vmem:[#allocation13 + $0xd8] sm:$0xff]
    %v651 = vld [vmem:[#allocation13 + $0xe0] sm:$0xff]
    %v652 = vld [vmem:[#allocation13 + $0xe8] sm:$0xff]
    %v653 = vld [vmem:[#allocation13 + $0xf0] sm:$0xff]
    %v654 = vld [vmem:[#allocation13 + $0xf8] sm:$0xff]
    %v655 = vld [vmem:[#allocation13 + $0x100] sm:$0xff]
    %v656 = vld [vmem:[#allocation13 + $0x108] sm:$0xff]
    %v657 = vld [vmem:[#allocation13 + $0x110] sm:$0xff]
    %v658 = vld [vmem:[#allocation13 + $0x118] sm:$0xff]
    %v659 = vld [vmem:[#allocation13 + $0x120] sm:$0xff]
    %v660 = vld [vmem:[#allocation13 + $0x128] sm:$0xff]
    %v661 = vld [vmem:[#allocation13 + $0x130] sm:$0xff]
    %v662 = vld [vmem:[#allocation13 + $0x138] sm:$0xff]
    %v663 = vld [vmem:[#allocation13 + $0x140] sm:$0xff]
    %v664 = vld [vmem:[#allocation13 + $0x148] sm:$0xff]
    %v665 = vld [vmem:[#allocation13 + $0x150] sm:$0xff]
    %v666 = vld [vmem:[#allocation13 + $0x158] sm:$0xff]
    %v667 = vld [vmem:[#allocation13 + $0x160] sm:$0xff]
    %v668 = vld [vmem:[#allocation13 + $0x168] sm:$0xff]
    %v669 = vld [vmem:[#allocation13 + $0x170] sm:$0xff]
    %v670 = vld [vmem:[#allocation13 + $0x178] sm:$0xff]
    %v671 = vld [vmem:[#allocation13 + $0x180] sm:$0xff]
    %v672 = vld [vmem:[#allocation13 + $0x188] sm:$0xff]
    %v673 = vld [vmem:[#allocation13 + $0x190] sm:$0xff]
    %v674 = vld [vmem:[#allocation13 + $0x198] sm:$0xff]
    %v675 = vld [vmem:[#allocation13 + $0x1a0] sm:$0xff]
    %v676 = vld [vmem:[#allocation13 + $0x1a8] sm:$0xff]
    %v677 = vld [vmem:[#allocation13 + $0x1b0] sm:$0xff]
    %v678 = vld [vmem:[#allocation13 + $0x1b8] sm:$0xff]
    %v679 = vld [vmem:[#allocation13 + $0x1c0] sm:$0xff]
    %v680 = vld [vmem:[#allocation13 + $0x1c8] sm:$0xff]
    %v681 = vld [vmem:[#allocation13 + $0x1d0] sm:$0xff]
    %v682 = vld [vmem:[#allocation13 + $0x1d8] sm:$0xff]
    %v683 = vld [vmem:[#allocation13 + $0x1e0] sm:$0xff]
    %v684 = vld [vmem:[#allocation13 + $0x1e8] sm:$0xff]
    %v685 = vld [vmem:[#allocation13 + $0x1f0] sm:$0xff]
    %v686 = vld [vmem:[#allocation13 + $0x1f8] sm:$0xff]
    %v751 = vunpack.c.l.b16 %v623
    %v752 = vunpack.c.h.b16 %v623
    %v753 = vunpack.c.l.b16 %v624
    %v754 = vunpack.c.h.b16 %v624
    %v755 = vunpack.c.l.b16 %v625
    %v756 = vunpack.c.h.b16 %v625
    %v757 = vunpack.c.l.b16 %v626
    %v758 = vunpack.c.h.b16 %v626
    %v759 = vunpack.c.l.b16 %v627
    %v760 = vunpack.c.h.b16 %v627
    %v761 = vunpack.c.l.b16 %v628
    %v762 = vunpack.c.h.b16 %v628
    %v763 = vunpack.c.l.b16 %v629
    %v764 = vunpack.c.h.b16 %v629
    %v765 = vunpack.c.l.b16 %v630
    %v766 = vunpack.c.h.b16 %v630
    %v767 = vunpack.c.l.b16 %v631
    %v768 = vunpack.c.h.b16 %v631
    %v769 = vunpack.c.l.b16 %v632
    %v770 = vunpack.c.h.b16 %v632
    %v771 = vunpack.c.l.b16 %v633
    %v772 = vunpack.c.h.b16 %v633
    %v773 = vunpack.c.l.b16 %v634
    %v774 = vunpack.c.h.b16 %v634
    %v775 = vunpack.c.l.b16 %v635
    %v776 = vunpack.c.h.b16 %v635
    %v777 = vunpack.c.l.b16 %v636
    %v778 = vunpack.c.h.b16 %v636
    %v779 = vunpack.c.l.b16 %v637
    %v780 = vunpack.c.h.b16 %v637
    %v781 = vunpack.c.l.b16 %v638
    %v782 = vunpack.c.h.b16 %v638
    %v783 = vunpack.c.l.b16 %v639
    %v784 = vunpack.c.h.b16 %v639
    %v785 = vunpack.c.l.b16 %v640
    %v786 = vunpack.c.h.b16 %v640
    %v787 = vunpack.c.l.b16 %v641
    %v788 = vunpack.c.h.b16 %v641
    %v789 = vunpack.c.l.b16 %v642
    %v790 = vunpack.c.h.b16 %v642
    %v791 = vunpack.c.l.b16 %v643
    %v792 = vunpack.c.h.b16 %v643
    %v793 = vunpack.c.l.b16 %v644
    %v794 = vunpack.c.h.b16 %v644
    %v795 = vunpack.c.l.b16 %v645
    %v796 = vunpack.c.h.b16 %v645
    %v797 = vunpack.c.l.b16 %v646
    %v798 = vunpack.c.h.b16 %v646
    %v799 = vunpack.c.l.b16 %v647
    %v800 = vunpack.c.h.b16 %v647
    %v801 = vunpack.c.l.b16 %v648
    %v802 = vunpack.c.h.b16 %v648
    %v803 = vunpack.c.l.b16 %v649
    %v804 = vunpack.c.h.b16 %v649
    %v805 = vunpack.c.l.b16 %v650
    %v806 = vunpack.c.h.b16 %v650
    %v807 = vunpack.c.l.b16 %v651
    %v808 = vunpack.c.h.b16 %v651
    %v809 = vunpack.c.l.b16 %v652
    %v810 = vunpack.c.h.b16 %v652
    %v811 = vunpack.c.l.b16 %v653
    %v812 = vunpack.c.h.b16 %v653
    %v813 = vunpack.c.l.b16 %v654
    %v814 = vunpack.c.h.b16 %v654
    %v815 = vunpack.c.l.b16 %v655
    %v816 = vunpack.c.h.b16 %v655
    %v817 = vunpack.c.l.b16 %v656
    %v818 = vunpack.c.h.b16 %v656
    %v819 = vunpack.c.l.b16 %v657
    %v820 = vunpack.c.h.b16 %v657
    %v821 = vunpack.c.l.b16 %v658
    %v822 = vunpack.c.h.b16 %v658
    %v823 = vunpack.c.l.b16 %v659
    %v824 = vunpack.c.h.b16 %v659
    %v825 = vunpack.c.l.b16 %v660
    %v826 = vunpack.c.h.b16 %v660
    %v827 = vunpack.c.l.b16 %v661
    %v828 = vunpack.c.h.b16 %v661
    %v829 = vunpack.c.l.b16 %v662
    %v830 = vunpack.c.h.b16 %v662
    %v831 = vunpack.c.l.b16 %v663
    %v832 = vunpack.c.h.b16 %v663
    %v833 = vunpack.c.l.b16 %v664
    %v834 = vunpack.c.h.b16 %v664
    %v835 = vunpack.c.l.b16 %v665
    %v836 = vunpack.c.h.b16 %v665
    %v837 = vunpack.c.l.b16 %v666
    %v838 = vunpack.c.h.b16 %v666
    %v839 = vunpack.c.l.b16 %v667
    %v840 = vunpack.c.h.b16 %v667
    %v841 = vunpack.c.l.b16 %v668
    %v842 = vunpack.c.h.b16 %v668
    %v843 = vunpack.c.l.b16 %v669
    %v844 = vunpack.c.h.b16 %v669
    %v845 = vunpack.c.l.b16 %v670
    %v846 = vunpack.c.h.b16 %v670
    %v847 = vunpack.c.l.b16 %v671
    %v848 = vunpack.c.h.b16 %v671
    %v849 = vunpack.c.l.b16 %v672
    %v850 = vunpack.c.h.b16 %v672
    %v851 = vunpack.c.l.b16 %v673
    %v852 = vunpack.c.h.b16 %v673
    %v853 = vunpack.c.l.b16 %v674
    %v854 = vunpack.c.h.b16 %v674
    %v855 = vunpack.c.l.b16 %v675
    %v856 = vunpack.c.h.b16 %v675
    %v857 = vunpack.c.l.b16 %v676
    %v858 = vunpack.c.h.b16 %v676
    %v859 = vunpack.c.l.b16 %v677
    %v860 = vunpack.c.h.b16 %v677
    %v861 = vunpack.c.l.b16 %v678
    %v862 = vunpack.c.h.b16 %v678
    %v863 = vunpack.c.l.b16 %v679
    %v864 = vunpack.c.h.b16 %v679
    %v865 = vunpack.c.l.b16 %v680
    %v866 = vunpack.c.h.b16 %v680
    %v867 = vunpack.c.l.b16 %v681
    %v868 = vunpack.c.h.b16 %v681
    %v869 = vunpack.c.l.b16 %v682
    %v870 = vunpack.c.h.b16 %v682
    %v871 = vunpack.c.l.b16 %v683
    %v872 = vunpack.c.h.b16 %v683
    %v873 = vunpack.c.l.b16 %v684
    %v874 = vunpack.c.h.b16 %v684
    %v875 = vunpack.c.l.b16 %v685
    %v876 = vunpack.c.h.b16 %v685
    %v877 = vunpack.c.l.b16 %v686
    %v878 = vunpack.c.h.b16 %v686
    %v879 = vpack.c.b16 %v755, %v751
    %v880 = vpack.c.b16 %v756, %v752
    %v881 = vpack.c.b16 %v757, %v753
    %v882 = vpack.c.b16 %v758, %v754
    %v883 = vpack.c.b16 %v763, %v759
    %v884 = vpack.c.b16 %v764, %v760
    %v885 = vpack.c.b16 %v765, %v761
    %v886 = vpack.c.b16 %v766, %v762
    %v887 = vpack.c.b16 %v771, %v767
    %v888 = vpack.c.b16 %v772, %v768
    %v889 = vpack.c.b16 %v773, %v769
    %v890 = vpack.c.b16 %v774, %v770
    %v891 = vpack.c.b16 %v779, %v775
    %v892 = vpack.c.b16 %v780, %v776
    %v893 = vpack.c.b16 %v781, %v777
    %v894 = vpack.c.b16 %v782, %v778
    %v895 = vpack.c.b16 %v787, %v783
    %v896 = vpack.c.b16 %v788, %v784
    %v897 = vpack.c.b16 %v789, %v785
    %v898 = vpack.c.b16 %v790, %v786
    %v899 = vpack.c.b16 %v795, %v791
    %v900 = vpack.c.b16 %v796, %v792
    %v901 = vpack.c.b16 %v797, %v793
    %v902 = vpack.c.b16 %v798, %v794
    %v903 = vpack.c.b16 %v803, %v799
    %v904 = vpack.c.b16 %v804, %v800
    %v905 = vpack.c.b16 %v805, %v801
    %v906 = vpack.c.b16 %v806, %v802
    %v907 = vpack.c.b16 %v811, %v807
    %v908 = vpack.c.b16 %v812, %v808
    %v909 = vpack.c.b16 %v813, %v809
    %v910 = vpack.c.b16 %v814, %v810
    %v911 = vpack.c.b16 %v819, %v815
    %v912 = vpack.c.b16 %v820, %v816
    %v913 = vpack.c.b16 %v821, %v817
    %v914 = vpack.c.b16 %v822, %v818
    %v915 = vpack.c.b16 %v827, %v823
    %v916 = vpack.c.b16 %v828, %v824
    %v917 = vpack.c.b16 %v829, %v825
    %v918 = vpack.c.b16 %v830, %v826
    %v919 = vpack.c.b16 %v835, %v831
    %v920 = vpack.c.b16 %v836, %v832
    %v921 = vpack.c.b16 %v837, %v833
    %v922 = vpack.c.b16 %v838, %v834
    %v923 = vpack.c.b16 %v843, %v839
    %v924 = vpack.c.b16 %v844, %v840
    %v925 = vpack.c.b16 %v845, %v841
    %v926 = vpack.c.b16 %v846, %v842
    %v927 = vpack.c.b16 %v851, %v847
    %v928 = vpack.c.b16 %v852, %v848
    %v929 = vpack.c.b16 %v853, %v849
    %v930 = vpack.c.b16 %v854, %v850
    %v931 = vpack.c.b16 %v859, %v855
    %v932 = vpack.c.b16 %v860, %v856
    %v933 = vpack.c.b16 %v861, %v857
    %v934 = vpack.c.b16 %v862, %v858
    %v935 = vpack.c.b16 %v867, %v863
    %v936 = vpack.c.b16 %v868, %v864
    %v937 = vpack.c.b16 %v869, %v865
    %v938 = vpack.c.b16 %v870, %v866
    %v939 = vpack.c.b16 %v875, %v871
    %v940 = vpack.c.b16 %v876, %v872
    %v941 = vpack.c.b16 %v877, %v873
    %v942 = vpack.c.b16 %v878, %v874
    %1007 = vmatpush.bf16.msra.mxu0 %v907
    %1008 = vmatpush.bf16.msra.mxu0 %v903
    %1009 = vmatpush.bf16.msra.mxu0 %v899
    %1010 = vmatpush.bf16.msra.mxu0 %v895
    %1011 = vmatpush.bf16.msra.mxu0 %v891
    %1012 = vmatpush.bf16.msra.mxu0 %v887
    %1013 = vmatpush.bf16.msra.mxu0 %v883
    %1014 = vmatpush.bf16.msra.mxu0 %v879
    %1015 = vmatmul.bf16.gmra.mxu0 %v621
    %v1016 = vpop.f32.mrf.mxu0
    %v1017 = vadd.f32 0.0, %v1016
    %v1018 = vpop.f32.mrf.mxu0
    %1019 = vdwg.mxu0
    %1020 = vmatpush.bf16.msra.mxu0 %v939
    %1021 = vmatpush.bf16.msra.mxu0 %v935
    %1022 = vmatpush.bf16.msra.mxu0 %v931
    %1023 = vmatpush.bf16.msra.mxu0 %v927
    %1024 = vmatpush.bf16.msra.mxu0 %v923
    %1025 = vmatpush.bf16.msra.mxu0 %v919
    %1026 = vmatpush.bf16.msra.mxu0 %v915
    %1027 = vmatpush.bf16.msra.mxu0 %v911
    %1028 = vmatmul.bf16.gmra.mxu0 %v622
    %v1029 = vpop.f32.mrf.mxu0
    %v1030 = vadd.f32 %v1017, %v1029
    %v1031 = vpop.f32.mrf.mxu0
    %1032 = vdwg.mxu0
    %1033 = vmatpush.bf16.msra.mxu0 %v908
    %1034 = vmatpush.bf16.msra.mxu0 %v904
    %1035 = vmatpush.bf16.msra.mxu0 %v900
    %1036 = vmatpush.bf16.msra.mxu0 %v896
    %1037 = vmatpush.bf16.msra.mxu0 %v892
    %1038 = vmatpush.bf16.msra.mxu0 %v888
    %1039 = vmatpush.bf16.msra.mxu0 %v884
    %1040 = vmatpush.bf16.msra.mxu0 %v880
    %1041 = vmatmul.bf16.gmra.mxu0 %v621
    %v1042 = vpop.f32.mrf.mxu0
    %v1043 = vadd.f32 0.0, %v1042
    %v1044 = vpop.f32.mrf.mxu0
    %1045 = vdwg.mxu0
    %1046 = vmatpush.bf16.msra.mxu0 %v940
    %1047 = vmatpush.bf16.msra.mxu0 %v936
    %1048 = vmatpush.bf16.msra.mxu0 %v932
    %1049 = vmatpush.bf16.msra.mxu0 %v928
    %1050 = vmatpush.bf16.msra.mxu0 %v924
    %1051 = vmatpush.bf16.msra.mxu0 %v920
    %1052 = vmatpush.bf16.msra.mxu0 %v916
    %1053 = vmatpush.bf16.msra.mxu0 %v912
    %1054 = vmatmul.bf16.gmra.mxu0 %v622
    %v1055 = vpop.f32.mrf.mxu0
    %v1056 = vadd.f32 %v1043, %v1055
    %v1057 = vpop.f32.mrf.mxu0
    %1058 = vdwg.mxu0
    %1059 = vmatpush.bf16.msra.mxu0 %v909
    %1060 = vmatpush.bf16.msra.mxu0 %v905
    %1061 = vmatpush.bf16.msra.mxu0 %v901
    %1062 = vmatpush.bf16.msra.mxu0 %v897
    %1063 = vmatpush.bf16.msra.mxu0 %v893
    %1064 = vmatpush.bf16.msra.mxu0 %v889
    %1065 = vmatpush.bf16.msra.mxu0 %v885
    %1066 = vmatpush.bf16.msra.mxu0 %v881
    %1067 = vmatmul.bf16.gmra.mxu0 %v621
    %v1068 = vpop.f32.mrf.mxu0
    %v1069 = vadd.f32 0.0, %v1068
    %v1070 = vpop.f32.mrf.mxu0
    %1071 = vdwg.mxu0
    %1072 = vmatpush.bf16.msra.mxu0 %v941
    %1073 = vmatpush.bf16.msra.mxu0 %v937
    %1074 = vmatpush.bf16.msra.mxu0 %v933
    %1075 = vmatpush.bf16.msra.mxu0 %v929
    %1076 = vmatpush.bf16.msra.mxu0 %v925
    %1077 = vmatpush.bf16.msra.mxu0 %v921
    %1078 = vmatpush.bf16.msra.mxu0 %v917
    %1079 = vmatpush.bf16.msra.mxu0 %v913
    %1080 = vmatmul.bf16.gmra.mxu0 %v622
    %v1081 = vpop.f32.mrf.mxu0
    %v1082 = vadd.f32 %v1069, %v1081
    %v1083 = vpop.f32.mrf.mxu0
    %1084 = vdwg.mxu0
    %1085 = vmatpush.bf16.msra.mxu0 %v910
    %1086 = vmatpush.bf16.msra.mxu0 %v906
    %1087 = vmatpush.bf16.msra.mxu0 %v902
    %1088 = vmatpush.bf16.msra.mxu0 %v898
    %1089 = vmatpush.bf16.msra.mxu0 %v894
    %1090 = vmatpush.bf16.msra.mxu0 %v890
    %1091 = vmatpush.bf16.msra.mxu0 %v886
    %1092 = vmatpush.bf16.msra.mxu0 %v882
    %1093 = vmatmul.bf16.gmra.mxu0 %v621
    %v1094 = vpop.f32.mrf.mxu0
    %v1095 = vadd.f32 0.0, %v1094
    %v1096 = vpop.f32.mrf.mxu0
    %1097 = vdwg.mxu0
    %1098 = vmatpush.bf16.msra.mxu0 %v942
    %1099 = vmatpush.bf16.msra.mxu0 %v938
    %1100 = vmatpush.bf16.msra.mxu0 %v934
    %1101 = vmatpush.bf16.msra.mxu0 %v930
    %1102 = vmatpush.bf16.msra.mxu0 %v926
    %1103 = vmatpush.bf16.msra.mxu0 %v922
    %1104 = vmatpush.bf16.msra.mxu0 %v918
    %1105 = vmatpush.bf16.msra.mxu0 %v914
    %1106 = vmatmul.bf16.gmra.mxu0 %v622
    %v1107 = vpop.f32.mrf.mxu0
    %v1108 = vadd.f32 %v1095, %v1107
    %v1109 = vpop.f32.mrf.mxu0
    %1110 = vdwg.mxu0
    %v1111 = vrot.slane %v1030, 4
    %v1112 = vadd.f32 %v1030, %v1111
    %v1113 = vrot.slane %v1112, 2
    %v1114 = vadd.f32 %v1112, %v1113
    %v1115 = vrot.slane %v1114, 1
    %v1116 = vadd.f32 %v1114, %v1115
    %v1117 = vrot.slane %v1056, 4
    %v1118 = vadd.f32 %v1056, %v1117
    %v1119 = vrot.slane %v1118, 2
    %v1120 = vadd.f32 %v1118, %v1119
    %v1121 = vrot.slane %v1120, 1
    %v1122 = vadd.f32 %v1120, %v1121
    %v1123 = vrot.slane %v1082, 4
    %v1124 = vadd.f32 %v1082, %v1123
    %v1125 = vrot.slane %v1124, 2
    %v1126 = vadd.f32 %v1124, %v1125
    %v1127 = vrot.slane %v1126, 1
    %v1128 = vadd.f32 %v1126, %v1127
    %v1129 = vrot.slane %v1108, 4
    %v1130 = vadd.f32 %v1108, %v1129
    %v1131 = vrot.slane %v1130, 2
    %v1132 = vadd.f32 %v1130, %v1131
    %v1133 = vrot.slane %v1132, 1
    %v1134 = vadd.f32 %v1132, %v1133
    %v1135 = vmul.f32 %v1116, %v378
    %v1136 = vmul.f32 %v1122, %v378
    %v1137 = vmul.f32 %v1128, %v378
    %v1138 = vmul.f32 %v1134, %v378
    %v1139 = vmul.f32 %v1030, %v1030
    %v1140 = vmul.f32 %v1056, %v1056
    %v1141 = vmul.f32 %v1082, %v1082
    %v1142 = vmul.f32 %v1108, %v1108
    %v1143 = vrot.slane %v1139, 4
    %v1144 = vadd.f32 %v1139, %v1143
    %v1145 = vrot.slane %v1144, 2
    %v1146 = vadd.f32 %v1144, %v1145
    %v1147 = vrot.slane %v1146, 1
    %v1148 = vadd.f32 %v1146, %v1147
    %v1149 = vrot.slane %v1140, 4
    %v1150 = vadd.f32 %v1140, %v1149
    %v1151 = vrot.slane %v1150, 2
    %v1152 = vadd.f32 %v1150, %v1151
    %v1153 = vrot.slane %v1152, 1
    %v1154 = vadd.f32 %v1152, %v1153
    %v1155 = vrot.slane %v1141, 4
    %v1156 = vadd.f32 %v1141, %v1155
    %v1157 = vrot.slane %v1156, 2
    %v1158 = vadd.f32 %v1156, %v1157
    %v1159 = vrot.slane %v1158, 1
    %v1160 = vadd.f32 %v1158, %v1159
    %v1161 = vrot.slane %v1142, 4
    %v1162 = vadd.f32 %v1142, %v1161
    %v1163 = vrot.slane %v1162, 2
    %v1164 = vadd.f32 %v1162, %v1163
    %v1165 = vrot.slane %v1164, 1
    %v1166 = vadd.f32 %v1164, %v1165
    %v1167 = vmul.f32 %v1148, %v378
    %v1168 = vmul.f32 %v1154, %v378
    %v1169 = vmul.f32 %v1160, %v378
    %v1170 = vmul.f32 %v1166, %v378
    %v1171 = vmul.f32 %v1135, %v1135
    %v1172 = vmul.f32 %v1136, %v1136
    %v1173 = vmul.f32 %v1137, %v1137
    %v1174 = vmul.f32 %v1138, %v1138
    %v1175 = vsub.f32 %v1167, %v1171
    %v1176 = vsub.f32 %v1168, %v1172
    %v1177 = vsub.f32 %v1169, %v1173
    %v1178 = vsub.f32 %v1170, %v1174
    %v1179 = vsub.f32 %v1030, %v1135
    %v1180 = vsub.f32 %v1056, %v1136
    %v1181 = vsub.f32 %v1082, %v1137
    %v1182 = vsub.f32 %v1108, %v1138
    %v1183 = vadd.f32 %v1175, 0.8
    %v1184 = vadd.f32 %v1176, 0.8
    %v1185 = vadd.f32 %v1177, 0.8
    %v1186 = vadd.f32 %v1178, 0.8
    %v1187 = vrsqrt.pop %v1183
    %v1188 = vmul.f32 %v1187, %v1183
    %v1189 = vmul.f32 %v1188, %v1187
    %v1190 = vmul.f32 0.5, %v1189
    %v1191 = vsub.f32 1.5, %v1190
    %v1192 = vmul.f32 %v1187, %v1191
    %vm1193 = vweird.f32 %v1183
    %vm1194 = vweird.f32 %v1187
    %vm1195 = vmor %vm1193, %vm1194
    %v1196 = vsel %vm1195, %v1187, %v1192
    %v1197 = vrsqrt.pop %v1184
    %v1198 = vmul.f32 %v1197, %v1184
    %v1199 = vmul.f32 %v1198, %v1197
    %v1200 = vmul.f32 0.5, %v1199
    %v1201 = vsub.f32 1.5, %v1200
    %v1202 = vmul.f32 %v1197, %v1201
    %vm1203 = vweird.f32 %v1184
    %vm1204 = vweird.f32 %v1197
    %vm1205 = vmor %vm1203, %vm1204
    %v1206 = vsel %vm1205, %v1197, %v1202
    %v1207 = vrsqrt.pop %v1185
    %v1208 = vmul.f32 %v1207, %v1185
    %v1209 = vmul.f32 %v1208, %v1207
    %v1210 = vmul.f32 0.5, %v1209
    %v1211 = vsub.f32 1.5, %v1210
    %v1212 = vmul.f32 %v1207, %v1211
    %vm1213 = vweird.f32 %v1185
    %vm1214 = vweird.f32 %v1207
    %vm1215 = vmor %vm1213, %vm1214
    %v1216 = vsel %vm1215, %v1207, %v1212
    %v1217 = vrsqrt.pop %v1186
    %v1218 = vmul.f32 %v1217, %v1186
    %v1219 = vmul.f32 %v1218, %v1217
    %v1220 = vmul.f32 0.5, %v1219
    %v1221 = vsub.f32 1.5, %v1220
    %v1222 = vmul.f32 %v1217, %v1221
    %vm1223 = vweird.f32 %v1186
    %vm1224 = vweird.f32 %v1217
    %vm1225 = vmor %vm1223, %vm1224
    %v1226 = vsel %vm1225, %v1217, %v1222
    %v1227 = vmul.f32 %v1179, %v1196
    %v1228 = vmul.f32 %v1180, %v1206
    %v1229 = vmul.f32 %v1181, %v1216
    %v1230 = vmul.f32 %v1182, %v1226
    %v1231 = vld [vmem:[#allocation15] sm:$0xf]
    %v1233 = vperm.slane %v1231, 0
    %v1234 = vperm.slane %v1231, 1
    %v1235 = vperm.slane %v1231, 2
    %v1236 = vperm.slane %v1231, 3
    %v1241 = vmul.f32 %v1227, %v1233
    %v1242 = vmul.f32 %v1228, %v1234
    %v1243 = vmul.f32 %v1229, %v1235
    %v1244 = vmul.f32 %v1230, %v1236
    %v1245 = vld [vmem:[#allocation16] sm:$0xf]
    %v1247 = vperm.slane %v1245, 0
    %v1248 = vperm.slane %v1245, 1
    %v1249 = vperm.slane %v1245, 2
    %v1250 = vperm.slane %v1245, 3
    %v1255 = vadd.f32 %v1241, %v1247
    %v1256 = vadd.f32 %v1242, %v1248
    %v1257 = vadd.f32 %v1243, %v1249
    %v1258 = vadd.f32 %v1244, %v1250
    %vm1259 = vcmp.gt.f32.partialorder %v1255, 0.0
    %vm1260 = vcmp.gt.f32.partialorder %v1256, 0.0
    %vm1261 = vcmp.gt.f32.partialorder %v1257, 0.0
    %vm1262 = vcmp.gt.f32.partialorder %v1258, 0.0
    %v1263 = vmul.f32 %v1255, 0.2
    %v1264 = vmul.f32 %v1256, 0.2
    %v1265 = vmul.f32 %v1257, 0.2
    %v1266 = vmul.f32 %v1258, 0.2
    %v1267 = vsel %vm1259, %v1255, %v1263
    %v1268 = vsel %vm1260, %v1256, %v1264
    %v1269 = vsel %vm1261, %v1257, %v1265
    %v1270 = vsel %vm1262, %v1258, %v1266
    %v1271 = vpack.c.bf16 %v1267, %v1267
    %v1272 = vpack.c.bf16 %v1268, %v1268
    %v1273 = vpack.c.bf16 %v1269, %v1269
    %v1274 = vpack.c.bf16 %v1270, %v1270
    %v1275 = vld [vmem:[#allocation18] sm:$0xff]
    %v1276 = vld [vmem:[#allocation18 + $0x8] sm:$0xff]
    %v1277 = vld [vmem:[#allocation18 + $0x10] sm:$0xff]
    %v1278 = vld [vmem:[#allocation18 + $0x18] sm:$0xff]
    %v1279 = vld [vmem:[#allocation18 + $0x20] sm:$0xff]
    %v1280 = vld [vmem:[#allocation18 + $0x28] sm:$0xff]
    %v1281 = vld [vmem:[#allocation18 + $0x30] sm:$0xff]
    %v1282 = vld [vmem:[#allocation18 + $0x38] sm:$0xff]
    %v1283 = vld [vmem:[#allocation18 + $0x40] sm:$0xff]
    %v1284 = vld [vmem:[#allocation18 + $0x48] sm:$0xff]
    %v1285 = vld [vmem:[#allocation18 + $0x50] sm:$0xff]
    %v1286 = vld [vmem:[#allocation18 + $0x58] sm:$0xff]
    %v1287 = vld [vmem:[#allocation18 + $0x60] sm:$0xff]
    %v1288 = vld [vmem:[#allocation18 + $0x68] sm:$0xff]
    %v1289 = vld [vmem:[#allocation18 + $0x70] sm:$0xff]
    %v1290 = vld [vmem:[#allocation18 + $0x78] sm:$0xff]
    %v1291 = vld [vmem:[#allocation18 + $0x80] sm:$0xff]
    %v1292 = vld [vmem:[#allocation18 + $0x88] sm:$0xff]
    %v1293 = vld [vmem:[#allocation18 + $0x90] sm:$0xff]
    %v1294 = vld [vmem:[#allocation18 + $0x98] sm:$0xff]
    %v1295 = vld [vmem:[#allocation18 + $0xa0] sm:$0xff]
    %v1296 = vld [vmem:[#allocation18 + $0xa8] sm:$0xff]
    %v1297 = vld [vmem:[#allocation18 + $0xb0] sm:$0xff]
    %v1298 = vld [vmem:[#allocation18 + $0xb8] sm:$0xff]
    %v1299 = vld [vmem:[#allocation18 + $0xc0] sm:$0xff]
    %v1300 = vld [vmem:[#allocation18 + $0xc8] sm:$0xff]
    %v1301 = vld [vmem:[#allocation18 + $0xd0] sm:$0xff]
    %v1302 = vld [vmem:[#allocation18 + $0xd8] sm:$0xff]
    %v1303 = vld [vmem:[#allocation18 + $0xe0] sm:$0xff]
    %v1304 = vld [vmem:[#allocation18 + $0xe8] sm:$0xff]
    %v1305 = vld [vmem:[#allocation18 + $0xf0] sm:$0xff]
    %v1306 = vld [vmem:[#allocation18 + $0xf8] sm:$0xff]
    %v1307 = vld [vmem:[#allocation18 + $0x100] sm:$0xff]
    %v1308 = vld [vmem:[#allocation18 + $0x108] sm:$0xff]
    %v1309 = vld [vmem:[#allocation18 + $0x110] sm:$0xff]
    %v1310 = vld [vmem:[#allocation18 + $0x118] sm:$0xff]
    %v1311 = vld [vmem:[#allocation18 + $0x120] sm:$0xff]
    %v1312 = vld [vmem:[#allocation18 + $0x128] sm:$0xff]
    %v1313 = vld [vmem:[#allocation18 + $0x130] sm:$0xff]
    %v1314 = vld [vmem:[#allocation18 + $0x138] sm:$0xff]
    %v1315 = vld [vmem:[#allocation18 + $0x140] sm:$0xff]
    %v1316 = vld [vmem:[#allocation18 + $0x148] sm:$0xff]
    %v1317 = vld [vmem:[#allocation18 + $0x150] sm:$0xff]
    %v1318 = vld [vmem:[#allocation18 + $0x158] sm:$0xff]
    %v1319 = vld [vmem:[#allocation18 + $0x160] sm:$0xff]
    %v1320 = vld [vmem:[#allocation18 + $0x168] sm:$0xff]
    %v1321 = vld [vmem:[#allocation18 + $0x170] sm:$0xff]
    %v1322 = vld [vmem:[#allocation18 + $0x178] sm:$0xff]
    %v1323 = vld [vmem:[#allocation18 + $0x180] sm:$0xff]
    %v1324 = vld [vmem:[#allocation18 + $0x188] sm:$0xff]
    %v1325 = vld [vmem:[#allocation18 + $0x190] sm:$0xff]
    %v1326 = vld [vmem:[#allocation18 + $0x198] sm:$0xff]
    %v1327 = vld [vmem:[#allocation18 + $0x1a0] sm:$0xff]
    %v1328 = vld [vmem:[#allocation18 + $0x1a8] sm:$0xff]
    %v1329 = vld [vmem:[#allocation18 + $0x1b0] sm:$0xff]
    %v1330 = vld [vmem:[#allocation18 + $0x1b8] sm:$0xff]
    %v1331 = vld [vmem:[#allocation18 + $0x1c0] sm:$0xff]
    %v1332 = vld [vmem:[#allocation18 + $0x1c8] sm:$0xff]
    %v1333 = vld [vmem:[#allocation18 + $0x1d0] sm:$0xff]
    %v1334 = vld [vmem:[#allocation18 + $0x1d8] sm:$0xff]
    %v1335 = vld [vmem:[#allocation18 + $0x1e0] sm:$0xff]
    %v1336 = vld [vmem:[#allocation18 + $0x1e8] sm:$0xff]
    %v1337 = vld [vmem:[#allocation18 + $0x1f0] sm:$0xff]
    %v1338 = vld [vmem:[#allocation18 + $0x1f8] sm:$0xff]
    %v1339 = vld [vmem:[#allocation18 + $0x200] sm:$0xff]
    %v1340 = vld [vmem:[#allocation18 + $0x208] sm:$0xff]
    %v1341 = vld [vmem:[#allocation18 + $0x210] sm:$0xff]
    %v1342 = vld [vmem:[#allocation18 + $0x218] sm:$0xff]
    %v1343 = vld [vmem:[#allocation18 + $0x220] sm:$0xff]
    %v1344 = vld [vmem:[#allocation18 + $0x228] sm:$0xff]
    %v1345 = vld [vmem:[#allocation18 + $0x230] sm:$0xff]
    %v1346 = vld [vmem:[#allocation18 + $0x238] sm:$0xff]
    %v1347 = vld [vmem:[#allocation18 + $0x240] sm:$0xff]
    %v1348 = vld [vmem:[#allocation18 + $0x248] sm:$0xff]
    %v1349 = vld [vmem:[#allocation18 + $0x250] sm:$0xff]
    %v1350 = vld [vmem:[#allocation18 + $0x258] sm:$0xff]
    %v1351 = vld [vmem:[#allocation18 + $0x260] sm:$0xff]
    %v1352 = vld [vmem:[#allocation18 + $0x268] sm:$0xff]
    %v1353 = vld [vmem:[#allocation18 + $0x270] sm:$0xff]
    %v1354 = vld [vmem:[#allocation18 + $0x278] sm:$0xff]
    %v1355 = vld [vmem:[#allocation18 + $0x280] sm:$0xff]
    %v1356 = vld [vmem:[#allocation18 + $0x288] sm:$0xff]
    %v1357 = vld [vmem:[#allocation18 + $0x290] sm:$0xff]
    %v1358 = vld [vmem:[#allocation18 + $0x298] sm:$0xff]
    %v1359 = vld [vmem:[#allocation18 + $0x2a0] sm:$0xff]
    %v1360 = vld [vmem:[#allocation18 + $0x2a8] sm:$0xff]
    %v1361 = vld [vmem:[#allocation18 + $0x2b0] sm:$0xff]
    %v1362 = vld [vmem:[#allocation18 + $0x2b8] sm:$0xff]
    %v1363 = vld [vmem:[#allocation18 + $0x2c0] sm:$0xff]
    %v1364 = vld [vmem:[#allocation18 + $0x2c8] sm:$0xff]
    %v1365 = vld [vmem:[#allocation18 + $0x2d0] sm:$0xff]
    %v1366 = vld [vmem:[#allocation18 + $0x2d8] sm:$0xff]
    %v1367 = vld [vmem:[#allocation18 + $0x2e0] sm:$0xff]
    %v1368 = vld [vmem:[#allocation18 + $0x2e8] sm:$0xff]
    %v1369 = vld [vmem:[#allocation18 + $0x2f0] sm:$0xff]
    %v1370 = vld [vmem:[#allocation18 + $0x2f8] sm:$0xff]
    %v1371 = vld [vmem:[#allocation18 + $0x300] sm:$0xff]
    %v1372 = vld [vmem:[#allocation18 + $0x308] sm:$0xff]
    %v1373 = vld [vmem:[#allocation18 + $0x310] sm:$0xff]
    %v1374 = vld [vmem:[#allocation18 + $0x318] sm:$0xff]
    %v1375 = vld [vmem:[#allocation18 + $0x320] sm:$0xff]
    %v1376 = vld [vmem:[#allocation18 + $0x328] sm:$0xff]
    %v1377 = vld [vmem:[#allocation18 + $0x330] sm:$0xff]
    %v1378 = vld [vmem:[#allocation18 + $0x338] sm:$0xff]
    %v1379 = vld [vmem:[#allocation18 + $0x340] sm:$0xff]
    %v1380 = vld [vmem:[#allocation18 + $0x348] sm:$0xff]
    %v1381 = vld [vmem:[#allocation18 + $0x350] sm:$0xff]
    %v1382 = vld [vmem:[#allocation18 + $0x358] sm:$0xff]
    %v1383 = vld [vmem:[#allocation18 + $0x360] sm:$0xff]
    %v1384 = vld [vmem:[#allocation18 + $0x368] sm:$0xff]
    %v1385 = vld [vmem:[#allocation18 + $0x370] sm:$0xff]
    %v1386 = vld [vmem:[#allocation18 + $0x378] sm:$0xff]
    %v1387 = vld [vmem:[#allocation18 + $0x380] sm:$0xff]
    %v1388 = vld [vmem:[#allocation18 + $0x388] sm:$0xff]
    %v1389 = vld [vmem:[#allocation18 + $0x390] sm:$0xff]
    %v1390 = vld [vmem:[#allocation18 + $0x398] sm:$0xff]
    %v1391 = vld [vmem:[#allocation18 + $0x3a0] sm:$0xff]
    %v1392 = vld [vmem:[#allocation18 + $0x3a8] sm:$0xff]
    %v1393 = vld [vmem:[#allocation18 + $0x3b0] sm:$0xff]
    %v1394 = vld [vmem:[#allocation18 + $0x3b8] sm:$0xff]
    %v1395 = vld [vmem:[#allocation18 + $0x3c0] sm:$0xff]
    %v1396 = vld [vmem:[#allocation18 + $0x3c8] sm:$0xff]
    %v1397 = vld [vmem:[#allocation18 + $0x3d0] sm:$0xff]
    %v1398 = vld [vmem:[#allocation18 + $0x3d8] sm:$0xff]
    %v1399 = vld [vmem:[#allocation18 + $0x3e0] sm:$0xff]
    %v1400 = vld [vmem:[#allocation18 + $0x3e8] sm:$0xff]
    %v1401 = vld [vmem:[#allocation18 + $0x3f0] sm:$0xff]
    %v1402 = vld [vmem:[#allocation18 + $0x3f8] sm:$0xff]
    %v1403 = vld [vmem:[#allocation18 + $0x400] sm:$0xff]
    %v1404 = vld [vmem:[#allocation18 + $0x408] sm:$0xff]
    %v1405 = vld [vmem:[#allocation18 + $0x410] sm:$0xff]
    %v1406 = vld [vmem:[#allocation18 + $0x418] sm:$0xff]
    %v1407 = vld [vmem:[#allocation18 + $0x420] sm:$0xff]
    %v1408 = vld [vmem:[#allocation18 + $0x428] sm:$0xff]
    %v1409 = vld [vmem:[#allocation18 + $0x430] sm:$0xff]
    %v1410 = vld [vmem:[#allocation18 + $0x438] sm:$0xff]
    %v1411 = vld [vmem:[#allocation18 + $0x440] sm:$0xff]
    %v1412 = vld [vmem:[#allocation18 + $0x448] sm:$0xff]
    %v1413 = vld [vmem:[#allocation18 + $0x450] sm:$0xff]
    %v1414 = vld [vmem:[#allocation18 + $0x458] sm:$0xff]
    %v1415 = vld [vmem:[#allocation18 + $0x460] sm:$0xff]
    %v1416 = vld [vmem:[#allocation18 + $0x468] sm:$0xff]
    %v1417 = vld [vmem:[#allocation18 + $0x470] sm:$0xff]
    %v1418 = vld [vmem:[#allocation18 + $0x478] sm:$0xff]
    %v1419 = vld [vmem:[#allocation18 + $0x480] sm:$0xff]
    %v1420 = vld [vmem:[#allocation18 + $0x488] sm:$0xff]
    %v1421 = vld [vmem:[#allocation18 + $0x490] sm:$0xff]
    %v1422 = vld [vmem:[#allocation18 + $0x498] sm:$0xff]
    %v1423 = vld [vmem:[#allocation18 + $0x4a0] sm:$0xff]
    %v1424 = vld [vmem:[#allocation18 + $0x4a8] sm:$0xff]
    %v1425 = vld [vmem:[#allocation18 + $0x4b0] sm:$0xff]
    %v1426 = vld [vmem:[#allocation18 + $0x4b8] sm:$0xff]
    %v1427 = vld [vmem:[#allocation18 + $0x4c0] sm:$0xff]
    %v1428 = vld [vmem:[#allocation18 + $0x4c8] sm:$0xff]
    %v1429 = vld [vmem:[#allocation18 + $0x4d0] sm:$0xff]
    %v1430 = vld [vmem:[#allocation18 + $0x4d8] sm:$0xff]
    %v1431 = vld [vmem:[#allocation18 + $0x4e0] sm:$0xff]
    %v1432 = vld [vmem:[#allocation18 + $0x4e8] sm:$0xff]
    %v1433 = vld [vmem:[#allocation18 + $0x4f0] sm:$0xff]
    %v1434 = vld [vmem:[#allocation18 + $0x4f8] sm:$0xff]
    %v1435 = vld [vmem:[#allocation18 + $0x500] sm:$0xff]
    %v1436 = vld [vmem:[#allocation18 + $0x508] sm:$0xff]
    %v1437 = vld [vmem:[#allocation18 + $0x510] sm:$0xff]
    %v1438 = vld [vmem:[#allocation18 + $0x518] sm:$0xff]
    %v1439 = vld [vmem:[#allocation18 + $0x520] sm:$0xff]
    %v1440 = vld [vmem:[#allocation18 + $0x528] sm:$0xff]
    %v1441 = vld [vmem:[#allocation18 + $0x530] sm:$0xff]
    %v1442 = vld [vmem:[#allocation18 + $0x538] sm:$0xff]
    %v1443 = vld [vmem:[#allocation18 + $0x540] sm:$0xff]
    %v1444 = vld [vmem:[#allocation18 + $0x548] sm:$0xff]
    %v1445 = vld [vmem:[#allocation18 + $0x550] sm:$0xff]
    %v1446 = vld [vmem:[#allocation18 + $0x558] sm:$0xff]
    %v1447 = vld [vmem:[#allocation18 + $0x560] sm:$0xff]
    %v1448 = vld [vmem:[#allocation18 + $0x568] sm:$0xff]
    %v1449 = vld [vmem:[#allocation18 + $0x570] sm:$0xff]
    %v1450 = vld [vmem:[#allocation18 + $0x578] sm:$0xff]
    %v1451 = vld [vmem:[#allocation18 + $0x580] sm:$0xff]
    %v1452 = vld [vmem:[#allocation18 + $0x588] sm:$0xff]
    %v1453 = vld [vmem:[#allocation18 + $0x590] sm:$0xff]
    %v1454 = vld [vmem:[#allocation18 + $0x598] sm:$0xff]
    %v1455 = vld [vmem:[#allocation18 + $0x5a0] sm:$0xff]
    %v1456 = vld [vmem:[#allocation18 + $0x5a8] sm:$0xff]
    %v1457 = vld [vmem:[#allocation18 + $0x5b0] sm:$0xff]
    %v1458 = vld [vmem:[#allocation18 + $0x5b8] sm:$0xff]
    %v1459 = vld [vmem:[#allocation18 + $0x5c0] sm:$0xff]
    %v1460 = vld [vmem:[#allocation18 + $0x5c8] sm:$0xff]
    %v1461 = vld [vmem:[#allocation18 + $0x5d0] sm:$0xff]
    %v1462 = vld [vmem:[#allocation18 + $0x5d8] sm:$0xff]
    %v1463 = vld [vmem:[#allocation18 + $0x5e0] sm:$0xff]
    %v1464 = vld [vmem:[#allocation18 + $0x5e8] sm:$0xff]
    %v1465 = vld [vmem:[#allocation18 + $0x5f0] sm:$0xff]
    %v1466 = vld [vmem:[#allocation18 + $0x5f8] sm:$0xff]
    %v1467 = vld [vmem:[#allocation18 + $0x600] sm:$0xff]
    %v1468 = vld [vmem:[#allocation18 + $0x608] sm:$0xff]
    %v1469 = vld [vmem:[#allocation18 + $0x610] sm:$0xff]
    %v1470 = vld [vmem:[#allocation18 + $0x618] sm:$0xff]
    %v1471 = vld [vmem:[#allocation18 + $0x620] sm:$0xff]
    %v1472 = vld [vmem:[#allocation18 + $0x628] sm:$0xff]
    %v1473 = vld [vmem:[#allocation18 + $0x630] sm:$0xff]
    %v1474 = vld [vmem:[#allocation18 + $0x638] sm:$0xff]
    %v1475 = vld [vmem:[#allocation18 + $0x640] sm:$0xff]
    %v1476 = vld [vmem:[#allocation18 + $0x648] sm:$0xff]
    %v1477 = vld [vmem:[#allocation18 + $0x650] sm:$0xff]
    %v1478 = vld [vmem:[#allocation18 + $0x658] sm:$0xff]
    %v1479 = vld [vmem:[#allocation18 + $0x660] sm:$0xff]
    %v1480 = vld [vmem:[#allocation18 + $0x668] sm:$0xff]
    %v1481 = vld [vmem:[#allocation18 + $0x670] sm:$0xff]
    %v1482 = vld [vmem:[#allocation18 + $0x678] sm:$0xff]
    %v1483 = vld [vmem:[#allocation18 + $0x680] sm:$0xff]
    %v1484 = vld [vmem:[#allocation18 + $0x688] sm:$0xff]
    %v1485 = vld [vmem:[#allocation18 + $0x690] sm:$0xff]
    %v1486 = vld [vmem:[#allocation18 + $0x698] sm:$0xff]
    %v1487 = vld [vmem:[#allocation18 + $0x6a0] sm:$0xff]
    %v1488 = vld [vmem:[#allocation18 + $0x6a8] sm:$0xff]
    %v1489 = vld [vmem:[#allocation18 + $0x6b0] sm:$0xff]
    %v1490 = vld [vmem:[#allocation18 + $0x6b8] sm:$0xff]
    %v1491 = vld [vmem:[#allocation18 + $0x6c0] sm:$0xff]
    %v1492 = vld [vmem:[#allocation18 + $0x6c8] sm:$0xff]
    %v1493 = vld [vmem:[#allocation18 + $0x6d0] sm:$0xff]
    %v1494 = vld [vmem:[#allocation18 + $0x6d8] sm:$0xff]
    %v1495 = vld [vmem:[#allocation18 + $0x6e0] sm:$0xff]
    %v1496 = vld [vmem:[#allocation18 + $0x6e8] sm:$0xff]
    %v1497 = vld [vmem:[#allocation18 + $0x6f0] sm:$0xff]
    %v1498 = vld [vmem:[#allocation18 + $0x6f8] sm:$0xff]
    %v1499 = vld [vmem:[#allocation18 + $0x700] sm:$0xff]
    %v1500 = vld [vmem:[#allocation18 + $0x708] sm:$0xff]
    %v1501 = vld [vmem:[#allocation18 + $0x710] sm:$0xff]
    %v1502 = vld [vmem:[#allocation18 + $0x718] sm:$0xff]
    %v1503 = vld [vmem:[#allocation18 + $0x720] sm:$0xff]
    %v1504 = vld [vmem:[#allocation18 + $0x728] sm:$0xff]
    %v1505 = vld [vmem:[#allocation18 + $0x730] sm:$0xff]
    %v1506 = vld [vmem:[#allocation18 + $0x738] sm:$0xff]
    %v1507 = vld [vmem:[#allocation18 + $0x740] sm:$0xff]
    %v1508 = vld [vmem:[#allocation18 + $0x748] sm:$0xff]
    %v1509 = vld [vmem:[#allocation18 + $0x750] sm:$0xff]
    %v1510 = vld [vmem:[#allocation18 + $0x758] sm:$0xff]
    %v1511 = vld [vmem:[#allocation18 + $0x760] sm:$0xff]
    %v1512 = vld [vmem:[#allocation18 + $0x768] sm:$0xff]
    %v1513 = vld [vmem:[#allocation18 + $0x770] sm:$0xff]
    %v1514 = vld [vmem:[#allocation18 + $0x778] sm:$0xff]
    %v1515 = vld [vmem:[#allocation18 + $0x780] sm:$0xff]
    %v1516 = vld [vmem:[#allocation18 + $0x788] sm:$0xff]
    %v1517 = vld [vmem:[#allocation18 + $0x790] sm:$0xff]
    %v1518 = vld [vmem:[#allocation18 + $0x798] sm:$0xff]
    %v1519 = vld [vmem:[#allocation18 + $0x7a0] sm:$0xff]
    %v1520 = vld [vmem:[#allocation18 + $0x7a8] sm:$0xff]
    %v1521 = vld [vmem:[#allocation18 + $0x7b0] sm:$0xff]
    %v1522 = vld [vmem:[#allocation18 + $0x7b8] sm:$0xff]
    %v1523 = vld [vmem:[#allocation18 + $0x7c0] sm:$0xff]
    %v1524 = vld [vmem:[#allocation18 + $0x7c8] sm:$0xff]
    %v1525 = vld [vmem:[#allocation18 + $0x7d0] sm:$0xff]
    %v1526 = vld [vmem:[#allocation18 + $0x7d8] sm:$0xff]
    %v1527 = vld [vmem:[#allocation18 + $0x7e0] sm:$0xff]
    %v1528 = vld [vmem:[#allocation18 + $0x7e8] sm:$0xff]
    %v1529 = vld [vmem:[#allocation18 + $0x7f0] sm:$0xff]
    %v1530 = vld [vmem:[#allocation18 + $0x7f8] sm:$0xff]
    %v1787 = vunpack.c.l.b16 %v1275
    %v1788 = vunpack.c.h.b16 %v1275
    %v1789 = vunpack.c.l.b16 %v1276
    %v1790 = vunpack.c.h.b16 %v1276
    %v1791 = vunpack.c.l.b16 %v1277
    %v1792 = vunpack.c.h.b16 %v1277
    %v1793 = vunpack.c.l.b16 %v1278
    %v1794 = vunpack.c.h.b16 %v1278
    %v1795 = vunpack.c.l.b16 %v1279
    %v1796 = vunpack.c.h.b16 %v1279
    %v1797 = vunpack.c.l.b16 %v1280
    %v1798 = vunpack.c.h.b16 %v1280
    %v1799 = vunpack.c.l.b16 %v1281
    %v1800 = vunpack.c.h.b16 %v1281
    %v1801 = vunpack.c.l.b16 %v1282
    %v1802 = vunpack.c.h.b16 %v1282
    %v1803 = vunpack.c.l.b16 %v1283
    %v1804 = vunpack.c.h.b16 %v1283
    %v1805 = vunpack.c.l.b16 %v1284
    %v1806 = vunpack.c.h.b16 %v1284
    %v1807 = vunpack.c.l.b16 %v1285
    %v1808 = vunpack.c.h.b16 %v1285
    %v1809 = vunpack.c.l.b16 %v1286
    %v1810 = vunpack.c.h.b16 %v1286
    %v1811 = vunpack.c.l.b16 %v1287
    %v1812 = vunpack.c.h.b16 %v1287
    %v1813 = vunpack.c.l.b16 %v1288
    %v1814 = vunpack.c.h.b16 %v1288
    %v1815 = vunpack.c.l.b16 %v1289
    %v1816 = vunpack.c.h.b16 %v1289
    %v1817 = vunpack.c.l.b16 %v1290
    %v1818 = vunpack.c.h.b16 %v1290
    %v1819 = vunpack.c.l.b16 %v1291
    %v1820 = vunpack.c.h.b16 %v1291
    %v1821 = vunpack.c.l.b16 %v1292
    %v1822 = vunpack.c.h.b16 %v1292
    %v1823 = vunpack.c.l.b16 %v1293
    %v1824 = vunpack.c.h.b16 %v1293
    %v1825 = vunpack.c.l.b16 %v1294
    %v1826 = vunpack.c.h.b16 %v1294
    %v1827 = vunpack.c.l.b16 %v1295
    %v1828 = vunpack.c.h.b16 %v1295
    %v1829 = vunpack.c.l.b16 %v1296
    %v1830 = vunpack.c.h.b16 %v1296
    %v1831 = vunpack.c.l.b16 %v1297
    %v1832 = vunpack.c.h.b16 %v1297
    %v1833 = vunpack.c.l.b16 %v1298
    %v1834 = vunpack.c.h.b16 %v1298
    %v1835 = vunpack.c.l.b16 %v1299
    %v1836 = vunpack.c.h.b16 %v1299
    %v1837 = vunpack.c.l.b16 %v1300
    %v1838 = vunpack.c.h.b16 %v1300
    %v1839 = vunpack.c.l.b16 %v1301
    %v1840 = vunpack.c.h.b16 %v1301
    %v1841 = vunpack.c.l.b16 %v1302
    %v1842 = vunpack.c.h.b16 %v1302
    %v1843 = vunpack.c.l.b16 %v1303
    %v1844 = vunpack.c.h.b16 %v1303
    %v1845 = vunpack.c.l.b16 %v1304
    %v1846 = vunpack.c.h.b16 %v1304
    %v1847 = vunpack.c.l.b16 %v1305
    %v1848 = vunpack.c.h.b16 %v1305
    %v1849 = vunpack.c.l.b16 %v1306
    %v1850 = vunpack.c.h.b16 %v1306
    %v1851 = vunpack.c.l.b16 %v1307
    %v1852 = vunpack.c.h.b16 %v1307
    %v1853 = vunpack.c.l.b16 %v1308
    %v1854 = vunpack.c.h.b16 %v1308
    %v1855 = vunpack.c.l.b16 %v1309
    %v1856 = vunpack.c.h.b16 %v1309
    %v1857 = vunpack.c.l.b16 %v1310
    %v1858 = vunpack.c.h.b16 %v1310
    %v1859 = vunpack.c.l.b16 %v1311
    %v1860 = vunpack.c.h.b16 %v1311
    %v1861 = vunpack.c.l.b16 %v1312
    %v1862 = vunpack.c.h.b16 %v1312
    %v1863 = vunpack.c.l.b16 %v1313
    %v1864 = vunpack.c.h.b16 %v1313
    %v1865 = vunpack.c.l.b16 %v1314
    %v1866 = vunpack.c.h.b16 %v1314
    %v1867 = vunpack.c.l.b16 %v1315
    %v1868 = vunpack.c.h.b16 %v1315
    %v1869 = vunpack.c.l.b16 %v1316
    %v1870 = vunpack.c.h.b16 %v1316
    %v1871 = vunpack.c.l.b16 %v1317
    %v1872 = vunpack.c.h.b16 %v1317
    %v1873 = vunpack.c.l.b16 %v1318
    %v1874 = vunpack.c.h.b16 %v1318
    %v1875 = vunpack.c.l.b16 %v1319
    %v1876 = vunpack.c.h.b16 %v1319
    %v1877 = vunpack.c.l.b16 %v1320
    %v1878 = vunpack.c.h.b16 %v1320
    %v1879 = vunpack.c.l.b16 %v1321
    %v1880 = vunpack.c.h.b16 %v1321
    %v1881 = vunpack.c.l.b16 %v1322
    %v1882 = vunpack.c.h.b16 %v1322
    %v1883 = vunpack.c.l.b16 %v1323
    %v1884 = vunpack.c.h.b16 %v1323
    %v1885 = vunpack.c.l.b16 %v1324
    %v1886 = vunpack.c.h.b16 %v1324
    %v1887 = vunpack.c.l.b16 %v1325
    %v1888 = vunpack.c.h.b16 %v1325
    %v1889 = vunpack.c.l.b16 %v1326
    %v1890 = vunpack.c.h.b16 %v1326
    %v1891 = vunpack.c.l.b16 %v1327
    %v1892 = vunpack.c.h.b16 %v1327
    %v1893 = vunpack.c.l.b16 %v1328
    %v1894 = vunpack.c.h.b16 %v1328
    %v1895 = vunpack.c.l.b16 %v1329
    %v1896 = vunpack.c.h.b16 %v1329
    %v1897 = vunpack.c.l.b16 %v1330
    %v1898 = vunpack.c.h.b16 %v1330
    %v1899 = vunpack.c.l.b16 %v1331
    %v1900 = vunpack.c.h.b16 %v1331
    %v1901 = vunpack.c.l.b16 %v1332
    %v1902 = vunpack.c.h.b16 %v1332
    %v1903 = vunpack.c.l.b16 %v1333
    %v1904 = vunpack.c.h.b16 %v1333
    %v1905 = vunpack.c.l.b16 %v1334
    %v1906 = vunpack.c.h.b16 %v1334
    %v1907 = vunpack.c.l.b16 %v1335
    %v1908 = vunpack.c.h.b16 %v1335
    %v1909 = vunpack.c.l.b16 %v1336
    %v1910 = vunpack.c.h.b16 %v1336
    %v1911 = vunpack.c.l.b16 %v1337
    %v1912 = vunpack.c.h.b16 %v1337
    %v1913 = vunpack.c.l.b16 %v1338
    %v1914 = vunpack.c.h.b16 %v1338
    %v1915 = vunpack.c.l.b16 %v1339
    %v1916 = vunpack.c.h.b16 %v1339
    %v1917 = vunpack.c.l.b16 %v1340
    %v1918 = vunpack.c.h.b16 %v1340
    %v1919 = vunpack.c.l.b16 %v1341
    %v1920 = vunpack.c.h.b16 %v1341
    %v1921 = vunpack.c.l.b16 %v1342
    %v1922 = vunpack.c.h.b16 %v1342
    %v1923 = vunpack.c.l.b16 %v1343
    %v1924 = vunpack.c.h.b16 %v1343
    %v1925 = vunpack.c.l.b16 %v1344
    %v1926 = vunpack.c.h.b16 %v1344
    %v1927 = vunpack.c.l.b16 %v1345
    %v1928 = vunpack.c.h.b16 %v1345
    %v1929 = vunpack.c.l.b16 %v1346
    %v1930 = vunpack.c.h.b16 %v1346
    %v1931 = vunpack.c.l.b16 %v1347
    %v1932 = vunpack.c.h.b16 %v1347
    %v1933 = vunpack.c.l.b16 %v1348
    %v1934 = vunpack.c.h.b16 %v1348
    %v1935 = vunpack.c.l.b16 %v1349
    %v1936 = vunpack.c.h.b16 %v1349
    %v1937 = vunpack.c.l.b16 %v1350
    %v1938 = vunpack.c.h.b16 %v1350
    %v1939 = vunpack.c.l.b16 %v1351
    %v1940 = vunpack.c.h.b16 %v1351
    %v1941 = vunpack.c.l.b16 %v1352
    %v1942 = vunpack.c.h.b16 %v1352
    %v1943 = vunpack.c.l.b16 %v1353
    %v1944 = vunpack.c.h.b16 %v1353
    %v1945 = vunpack.c.l.b16 %v1354
    %v1946 = vunpack.c.h.b16 %v1354
    %v1947 = vunpack.c.l.b16 %v1355
    %v1948 = vunpack.c.h.b16 %v1355
    %v1949 = vunpack.c.l.b16 %v1356
    %v1950 = vunpack.c.h.b16 %v1356
    %v1951 = vunpack.c.l.b16 %v1357
    %v1952 = vunpack.c.h.b16 %v1357
    %v1953 = vunpack.c.l.b16 %v1358
    %v1954 = vunpack.c.h.b16 %v1358
    %v1955 = vunpack.c.l.b16 %v1359
    %v1956 = vunpack.c.h.b16 %v1359
    %v1957 = vunpack.c.l.b16 %v1360
    %v1958 = vunpack.c.h.b16 %v1360
    %v1959 = vunpack.c.l.b16 %v1361
    %v1960 = vunpack.c.h.b16 %v1361
    %v1961 = vunpack.c.l.b16 %v1362
    %v1962 = vunpack.c.h.b16 %v1362
    %v1963 = vunpack.c.l.b16 %v1363
    %v1964 = vunpack.c.h.b16 %v1363
    %v1965 = vunpack.c.l.b16 %v1364
    %v1966 = vunpack.c.h.b16 %v1364
    %v1967 = vunpack.c.l.b16 %v1365
    %v1968 = vunpack.c.h.b16 %v1365
    %v1969 = vunpack.c.l.b16 %v1366
    %v1970 = vunpack.c.h.b16 %v1366
    %v1971 = vunpack.c.l.b16 %v1367
    %v1972 = vunpack.c.h.b16 %v1367
    %v1973 = vunpack.c.l.b16 %v1368
    %v1974 = vunpack.c.h.b16 %v1368
    %v1975 = vunpack.c.l.b16 %v1369
    %v1976 = vunpack.c.h.b16 %v1369
    %v1977 = vunpack.c.l.b16 %v1370
    %v1978 = vunpack.c.h.b16 %v1370
    %v1979 = vunpack.c.l.b16 %v1371
    %v1980 = vunpack.c.h.b16 %v1371
    %v1981 = vunpack.c.l.b16 %v1372
    %v1982 = vunpack.c.h.b16 %v1372
    %v1983 = vunpack.c.l.b16 %v1373
    %v1984 = vunpack.c.h.b16 %v1373
    %v1985 = vunpack.c.l.b16 %v1374
    %v1986 = vunpack.c.h.b16 %v1374
    %v1987 = vunpack.c.l.b16 %v1375
    %v1988 = vunpack.c.h.b16 %v1375
    %v1989 = vunpack.c.l.b16 %v1376
    %v1990 = vunpack.c.h.b16 %v1376
    %v1991 = vunpack.c.l.b16 %v1377
    %v1992 = vunpack.c.h.b16 %v1377
    %v1993 = vunpack.c.l.b16 %v1378
    %v1994 = vunpack.c.h.b16 %v1378
    %v1995 = vunpack.c.l.b16 %v1379
    %v1996 = vunpack.c.h.b16 %v1379
    %v1997 = vunpack.c.l.b16 %v1380
    %v1998 = vunpack.c.h.b16 %v1380
    %v1999 = vunpack.c.l.b16 %v1381
    %v2000 = vunpack.c.h.b16 %v1381
    %v2001 = vunpack.c.l.b16 %v1382
    %v2002 = vunpack.c.h.b16 %v1382
    %v2003 = vunpack.c.l.b16 %v1383
    %v2004 = vunpack.c.h.b16 %v1383
    %v2005 = vunpack.c.l.b16 %v1384
    %v2006 = vunpack.c.h.b16 %v1384
    %v2007 = vunpack.c.l.b16 %v1385
    %v2008 = vunpack.c.h.b16 %v1385
    %v2009 = vunpack.c.l.b16 %v1386
    %v2010 = vunpack.c.h.b16 %v1386
    %v2011 = vunpack.c.l.b16 %v1387
    %v2012 = vunpack.c.h.b16 %v1387
    %v2013 = vunpack.c.l.b16 %v1388
    %v2014 = vunpack.c.h.b16 %v1388
    %v2015 = vunpack.c.l.b16 %v1389
    %v2016 = vunpack.c.h.b16 %v1389
    %v2017 = vunpack.c.l.b16 %v1390
    %v2018 = vunpack.c.h.b16 %v1390
    %v2019 = vunpack.c.l.b16 %v1391
    %v2020 = vunpack.c.h.b16 %v1391
    %v2021 = vunpack.c.l.b16 %v1392
    %v2022 = vunpack.c.h.b16 %v1392
    %v2023 = vunpack.c.l.b16 %v1393
    %v2024 = vunpack.c.h.b16 %v1393
    %v2025 = vunpack.c.l.b16 %v1394
    %v2026 = vunpack.c.h.b16 %v1394
    %v2027 = vunpack.c.l.b16 %v1395
    %v2028 = vunpack.c.h.b16 %v1395
    %v2029 = vunpack.c.l.b16 %v1396
    %v2030 = vunpack.c.h.b16 %v1396
    %v2031 = vunpack.c.l.b16 %v1397
    %v2032 = vunpack.c.h.b16 %v1397
    %v2033 = vunpack.c.l.b16 %v1398
    %v2034 = vunpack.c.h.b16 %v1398
    %v2035 = vunpack.c.l.b16 %v1399
    %v2036 = vunpack.c.h.b16 %v1399
    %v2037 = vunpack.c.l.b16 %v1400
    %v2038 = vunpack.c.h.b16 %v1400
    %v2039 = vunpack.c.l.b16 %v1401
    %v2040 = vunpack.c.h.b16 %v1401
    %v2041 = vunpack.c.l.b16 %v1402
    %v2042 = vunpack.c.h.b16 %v1402
    %v2043 = vunpack.c.l.b16 %v1403
    %v2044 = vunpack.c.h.b16 %v1403
    %v2045 = vunpack.c.l.b16 %v1404
    %v2046 = vunpack.c.h.b16 %v1404
    %v2047 = vunpack.c.l.b16 %v1405
    %v2048 = vunpack.c.h.b16 %v1405
    %v2049 = vunpack.c.l.b16 %v1406
    %v2050 = vunpack.c.h.b16 %v1406
    %v2051 = vunpack.c.l.b16 %v1407
    %v2052 = vunpack.c.h.b16 %v1407
    %v2053 = vunpack.c.l.b16 %v1408
    %v2054 = vunpack.c.h.b16 %v1408
    %v2055 = vunpack.c.l.b16 %v1409
    %v2056 = vunpack.c.h.b16 %v1409
    %v2057 = vunpack.c.l.b16 %v1410
    %v2058 = vunpack.c.h.b16 %v1410
    %v2059 = vunpack.c.l.b16 %v1411
    %v2060 = vunpack.c.h.b16 %v1411
    %v2061 = vunpack.c.l.b16 %v1412
    %v2062 = vunpack.c.h.b16 %v1412
    %v2063 = vunpack.c.l.b16 %v1413
    %v2064 = vunpack.c.h.b16 %v1413
    %v2065 = vunpack.c.l.b16 %v1414
    %v2066 = vunpack.c.h.b16 %v1414
    %v2067 = vunpack.c.l.b16 %v1415
    %v2068 = vunpack.c.h.b16 %v1415
    %v2069 = vunpack.c.l.b16 %v1416
    %v2070 = vunpack.c.h.b16 %v1416
    %v2071 = vunpack.c.l.b16 %v1417
    %v2072 = vunpack.c.h.b16 %v1417
    %v2073 = vunpack.c.l.b16 %v1418
    %v2074 = vunpack.c.h.b16 %v1418
    %v2075 = vunpack.c.l.b16 %v1419
    %v2076 = vunpack.c.h.b16 %v1419
    %v2077 = vunpack.c.l.b16 %v1420
    %v2078 = vunpack.c.h.b16 %v1420
    %v2079 = vunpack.c.l.b16 %v1421
    %v2080 = vunpack.c.h.b16 %v1421
    %v2081 = vunpack.c.l.b16 %v1422
    %v2082 = vunpack.c.h.b16 %v1422
    %v2083 = vunpack.c.l.b16 %v1423
    %v2084 = vunpack.c.h.b16 %v1423
    %v2085 = vunpack.c.l.b16 %v1424
    %v2086 = vunpack.c.h.b16 %v1424
    %v2087 = vunpack.c.l.b16 %v1425
    %v2088 = vunpack.c.h.b16 %v1425
    %v2089 = vunpack.c.l.b16 %v1426
    %v2090 = vunpack.c.h.b16 %v1426
    %v2091 = vunpack.c.l.b16 %v1427
    %v2092 = vunpack.c.h.b16 %v1427
    %v2093 = vunpack.c.l.b16 %v1428
    %v2094 = vunpack.c.h.b16 %v1428
    %v2095 = vunpack.c.l.b16 %v1429
    %v2096 = vunpack.c.h.b16 %v1429
    %v2097 = vunpack.c.l.b16 %v1430
    %v2098 = vunpack.c.h.b16 %v1430
    %v2099 = vunpack.c.l.b16 %v1431
    %v2100 = vunpack.c.h.b16 %v1431
    %v2101 = vunpack.c.l.b16 %v1432
    %v2102 = vunpack.c.h.b16 %v1432
    %v2103 = vunpack.c.l.b16 %v1433
    %v2104 = vunpack.c.h.b16 %v1433
    %v2105 = vunpack.c.l.b16 %v1434
    %v2106 = vunpack.c.h.b16 %v1434
    %v2107 = vunpack.c.l.b16 %v1435
    %v2108 = vunpack.c.h.b16 %v1435
    %v2109 = vunpack.c.l.b16 %v1436
    %v2110 = vunpack.c.h.b16 %v1436
    %v2111 = vunpack.c.l.b16 %v1437
    %v2112 = vunpack.c.h.b16 %v1437
    %v2113 = vunpack.c.l.b16 %v1438
    %v2114 = vunpack.c.h.b16 %v1438
    %v2115 = vunpack.c.l.b16 %v1439
    %v2116 = vunpack.c.h.b16 %v1439
    %v2117 = vunpack.c.l.b16 %v1440
    %v2118 = vunpack.c.h.b16 %v1440
    %v2119 = vunpack.c.l.b16 %v1441
    %v2120 = vunpack.c.h.b16 %v1441
    %v2121 = vunpack.c.l.b16 %v1442
    %v2122 = vunpack.c.h.b16 %v1442
    %v2123 = vunpack.c.l.b16 %v1443
    %v2124 = vunpack.c.h.b16 %v1443
    %v2125 = vunpack.c.l.b16 %v1444
    %v2126 = vunpack.c.h.b16 %v1444
    %v2127 = vunpack.c.l.b16 %v1445
    %v2128 = vunpack.c.h.b16 %v1445
    %v2129 = vunpack.c.l.b16 %v1446
    %v2130 = vunpack.c.h.b16 %v1446
    %v2131 = vunpack.c.l.b16 %v1447
    %v2132 = vunpack.c.h.b16 %v1447
    %v2133 = vunpack.c.l.b16 %v1448
    %v2134 = vunpack.c.h.b16 %v1448
    %v2135 = vunpack.c.l.b16 %v1449
    %v2136 = vunpack.c.h.b16 %v1449
    %v2137 = vunpack.c.l.b16 %v1450
    %v2138 = vunpack.c.h.b16 %v1450
    %v2139 = vunpack.c.l.b16 %v1451
    %v2140 = vunpack.c.h.b16 %v1451
    %v2141 = vunpack.c.l.b16 %v1452
    %v2142 = vunpack.c.h.b16 %v1452
    %v2143 = vunpack.c.l.b16 %v1453
    %v2144 = vunpack.c.h.b16 %v1453
    %v2145 = vunpack.c.l.b16 %v1454
    %v2146 = vunpack.c.h.b16 %v1454
    %v2147 = vunpack.c.l.b16 %v1455
    %v2148 = vunpack.c.h.b16 %v1455
    %v2149 = vunpack.c.l.b16 %v1456
    %v2150 = vunpack.c.h.b16 %v1456
    %v2151 = vunpack.c.l.b16 %v1457
    %v2152 = vunpack.c.h.b16 %v1457
    %v2153 = vunpack.c.l.b16 %v1458
    %v2154 = vunpack.c.h.b16 %v1458
    %v2155 = vunpack.c.l.b16 %v1459
    %v2156 = vunpack.c.h.b16 %v1459
    %v2157 = vunpack.c.l.b16 %v1460
    %v2158 = vunpack.c.h.b16 %v1460
    %v2159 = vunpack.c.l.b16 %v1461
    %v2160 = vunpack.c.h.b16 %v1461
    %v2161 = vunpack.c.l.b16 %v1462
    %v2162 = vunpack.c.h.b16 %v1462
    %v2163 = vunpack.c.l.b16 %v1463
    %v2164 = vunpack.c.h.b16 %v1463
    %v2165 = vunpack.c.l.b16 %v1464
    %v2166 = vunpack.c.h.b16 %v1464
    %v2167 = vunpack.c.l.b16 %v1465
    %v2168 = vunpack.c.h.b16 %v1465
    %v2169 = vunpack.c.l.b16 %v1466
    %v2170 = vunpack.c.h.b16 %v1466
    %v2171 = vunpack.c.l.b16 %v1467
    %v2172 = vunpack.c.h.b16 %v1467
    %v2173 = vunpack.c.l.b16 %v1468
    %v2174 = vunpack.c.h.b16 %v1468
    %v2175 = vunpack.c.l.b16 %v1469
    %v2176 = vunpack.c.h.b16 %v1469
    %v2177 = vunpack.c.l.b16 %v1470
    %v2178 = vunpack.c.h.b16 %v1470
    %v2179 = vunpack.c.l.b16 %v1471
    %v2180 = vunpack.c.h.b16 %v1471
    %v2181 = vunpack.c.l.b16 %v1472
    %v2182 = vunpack.c.h.b16 %v1472
    %v2183 = vunpack.c.l.b16 %v1473
    %v2184 = vunpack.c.h.b16 %v1473
    %v2185 = vunpack.c.l.b16 %v1474
    %v2186 = vunpack.c.h.b16 %v1474
    %v2187 = vunpack.c.l.b16 %v1475
    %v2188 = vunpack.c.h.b16 %v1475
    %v2189 = vunpack.c.l.b16 %v1476
    %v2190 = vunpack.c.h.b16 %v1476
    %v2191 = vunpack.c.l.b16 %v1477
    %v2192 = vunpack.c.h.b16 %v1477
    %v2193 = vunpack.c.l.b16 %v1478
    %v2194 = vunpack.c.h.b16 %v1478
    %v2195 = vunpack.c.l.b16 %v1479
    %v2196 = vunpack.c.h.b16 %v1479
    %v2197 = vunpack.c.l.b16 %v1480
    %v2198 = vunpack.c.h.b16 %v1480
    %v2199 = vunpack.c.l.b16 %v1481
    %v2200 = vunpack.c.h.b16 %v1481
    %v2201 = vunpack.c.l.b16 %v1482
    %v2202 = vunpack.c.h.b16 %v1482
    %v2203 = vunpack.c.l.b16 %v1483
    %v2204 = vunpack.c.h.b16 %v1483
    %v2205 = vunpack.c.l.b16 %v1484
    %v2206 = vunpack.c.h.b16 %v1484
    %v2207 = vunpack.c.l.b16 %v1485
    %v2208 = vunpack.c.h.b16 %v1485
    %v2209 = vunpack.c.l.b16 %v1486
    %v2210 = vunpack.c.h.b16 %v1486
    %v2211 = vunpack.c.l.b16 %v1487
    %v2212 = vunpack.c.h.b16 %v1487
    %v2213 = vunpack.c.l.b16 %v1488
    %v2214 = vunpack.c.h.b16 %v1488
    %v2215 = vunpack.c.l.b16 %v1489
    %v2216 = vunpack.c.h.b16 %v1489
    %v2217 = vunpack.c.l.b16 %v1490
    %v2218 = vunpack.c.h.b16 %v1490
    %v2219 = vunpack.c.l.b16 %v1491
    %v2220 = vunpack.c.h.b16 %v1491
    %v2221 = vunpack.c.l.b16 %v1492
    %v2222 = vunpack.c.h.b16 %v1492
    %v2223 = vunpack.c.l.b16 %v1493
    %v2224 = vunpack.c.h.b16 %v1493
    %v2225 = vunpack.c.l.b16 %v1494
    %v2226 = vunpack.c.h.b16 %v1494
    %v2227 = vunpack.c.l.b16 %v1495
    %v2228 = vunpack.c.h.b16 %v1495
    %v2229 = vunpack.c.l.b16 %v1496
    %v2230 = vunpack.c.h.b16 %v1496
    %v2231 = vunpack.c.l.b16 %v1497
    %v2232 = vunpack.c.h.b16 %v1497
    %v2233 = vunpack.c.l.b16 %v1498
    %v2234 = vunpack.c.h.b16 %v1498
    %v2235 = vunpack.c.l.b16 %v1499
    %v2236 = vunpack.c.h.b16 %v1499
    %v2237 = vunpack.c.l.b16 %v1500
    %v2238 = vunpack.c.h.b16 %v1500
    %v2239 = vunpack.c.l.b16 %v1501
    %v2240 = vunpack.c.h.b16 %v1501
    %v2241 = vunpack.c.l.b16 %v1502
    %v2242 = vunpack.c.h.b16 %v1502
    %v2243 = vunpack.c.l.b16 %v1503
    %v2244 = vunpack.c.h.b16 %v1503
    %v2245 = vunpack.c.l.b16 %v1504
    %v2246 = vunpack.c.h.b16 %v1504
    %v2247 = vunpack.c.l.b16 %v1505
    %v2248 = vunpack.c.h.b16 %v1505
    %v2249 = vunpack.c.l.b16 %v1506
    %v2250 = vunpack.c.h.b16 %v1506
    %v2251 = vunpack.c.l.b16 %v1507
    %v2252 = vunpack.c.h.b16 %v1507
    %v2253 = vunpack.c.l.b16 %v1508
    %v2254 = vunpack.c.h.b16 %v1508
    %v2255 = vunpack.c.l.b16 %v1509
    %v2256 = vunpack.c.h.b16 %v1509
    %v2257 = vunpack.c.l.b16 %v1510
    %v2258 = vunpack.c.h.b16 %v1510
    %v2259 = vunpack.c.l.b16 %v1511
    %v2260 = vunpack.c.h.b16 %v1511
    %v2261 = vunpack.c.l.b16 %v1512
    %v2262 = vunpack.c.h.b16 %v1512
    %v2263 = vunpack.c.l.b16 %v1513
    %v2264 = vunpack.c.h.b16 %v1513
    %v2265 = vunpack.c.l.b16 %v1514
    %v2266 = vunpack.c.h.b16 %v1514
    %v2267 = vunpack.c.l.b16 %v1515
    %v2268 = vunpack.c.h.b16 %v1515
    %v2269 = vunpack.c.l.b16 %v1516
    %v2270 = vunpack.c.h.b16 %v1516
    %v2271 = vunpack.c.l.b16 %v1517
    %v2272 = vunpack.c.h.b16 %v1517
    %v2273 = vunpack.c.l.b16 %v1518
    %v2274 = vunpack.c.h.b16 %v1518
    %v2275 = vunpack.c.l.b16 %v1519
    %v2276 = vunpack.c.h.b16 %v1519
    %v2277 = vunpack.c.l.b16 %v1520
    %v2278 = vunpack.c.h.b16 %v1520
    %v2279 = vunpack.c.l.b16 %v1521
    %v2280 = vunpack.c.h.b16 %v1521
    %v2281 = vunpack.c.l.b16 %v1522
    %v2282 = vunpack.c.h.b16 %v1522
    %v2283 = vunpack.c.l.b16 %v1523
    %v2284 = vunpack.c.h.b16 %v1523
    %v2285 = vunpack.c.l.b16 %v1524
    %v2286 = vunpack.c.h.b16 %v1524
    %v2287 = vunpack.c.l.b16 %v1525
    %v2288 = vunpack.c.h.b16 %v1525
    %v2289 = vunpack.c.l.b16 %v1526
    %v2290 = vunpack.c.h.b16 %v1526
    %v2291 = vunpack.c.l.b16 %v1527
    %v2292 = vunpack.c.h.b16 %v1527
    %v2293 = vunpack.c.l.b16 %v1528
    %v2294 = vunpack.c.h.b16 %v1528
    %v2295 = vunpack.c.l.b16 %v1529
    %v2296 = vunpack.c.h.b16 %v1529
    %v2297 = vunpack.c.l.b16 %v1530
    %v2298 = vunpack.c.h.b16 %v1530
    %v2299 = vpack.c.b16 %v1795, %v1787
    %v2300 = vpack.c.b16 %v1796, %v1788
    %v2301 = vpack.c.b16 %v1797, %v1789
    %v2302 = vpack.c.b16 %v1798, %v1790
    %v2303 = vpack.c.b16 %v1799, %v1791
    %v2304 = vpack.c.b16 %v1800, %v1792
    %v2305 = vpack.c.b16 %v1801, %v1793
    %v2306 = vpack.c.b16 %v1802, %v1794
    %v2307 = vpack.c.b16 %v1811, %v1803
    %v2308 = vpack.c.b16 %v1812, %v1804
    %v2309 = vpack.c.b16 %v1813, %v1805
    %v2310 = vpack.c.b16 %v1814, %v1806
    %v2311 = vpack.c.b16 %v1815, %v1807
    %v2312 = vpack.c.b16 %v1816, %v1808
    %v2313 = vpack.c.b16 %v1817, %v1809
    %v2314 = vpack.c.b16 %v1818, %v1810
    %v2315 = vpack.c.b16 %v1827, %v1819
    %v2316 = vpack.c.b16 %v1828, %v1820
    %v2317 = vpack.c.b16 %v1829, %v1821
    %v2318 = vpack.c.b16 %v1830, %v1822
    %v2319 = vpack.c.b16 %v1831, %v1823
    %v2320 = vpack.c.b16 %v1832, %v1824
    %v2321 = vpack.c.b16 %v1833, %v1825
    %v2322 = vpack.c.b16 %v1834, %v1826
    %v2323 = vpack.c.b16 %v1843, %v1835
    %v2324 = vpack.c.b16 %v1844, %v1836
    %v2325 = vpack.c.b16 %v1845, %v1837
    %v2326 = vpack.c.b16 %v1846, %v1838
    %v2327 = vpack.c.b16 %v1847, %v1839
    %v2328 = vpack.c.b16 %v1848, %v1840
    %v2329 = vpack.c.b16 %v1849, %v1841
    %v2330 = vpack.c.b16 %v1850, %v1842
    %v2331 = vpack.c.b16 %v1859, %v1851
    %v2332 = vpack.c.b16 %v1860, %v1852
    %v2333 = vpack.c.b16 %v1861, %v1853
    %v2334 = vpack.c.b16 %v1862, %v1854
    %v2335 = vpack.c.b16 %v1863, %v1855
    %v2336 = vpack.c.b16 %v1864, %v1856
    %v2337 = vpack.c.b16 %v1865, %v1857
    %v2338 = vpack.c.b16 %v1866, %v1858
    %v2339 = vpack.c.b16 %v1875, %v1867
    %v2340 = vpack.c.b16 %v1876, %v1868
    %v2341 = vpack.c.b16 %v1877, %v1869
    %v2342 = vpack.c.b16 %v1878, %v1870
    %v2343 = vpack.c.b16 %v1879, %v1871
    %v2344 = vpack.c.b16 %v1880, %v1872
    %v2345 = vpack.c.b16 %v1881, %v1873
    %v2346 = vpack.c.b16 %v1882, %v1874
    %v2347 = vpack.c.b16 %v1891, %v1883
    %v2348 = vpack.c.b16 %v1892, %v1884
    %v2349 = vpack.c.b16 %v1893, %v1885
    %v2350 = vpack.c.b16 %v1894, %v1886
    %v2351 = vpack.c.b16 %v1895, %v1887
    %v2352 = vpack.c.b16 %v1896, %v1888
    %v2353 = vpack.c.b16 %v1897, %v1889
    %v2354 = vpack.c.b16 %v1898, %v1890
    %v2355 = vpack.c.b16 %v1907, %v1899
    %v2356 = vpack.c.b16 %v1908, %v1900
    %v2357 = vpack.c.b16 %v1909, %v1901
    %v2358 = vpack.c.b16 %v1910, %v1902
    %v2359 = vpack.c.b16 %v1911, %v1903
    %v2360 = vpack.c.b16 %v1912, %v1904
    %v2361 = vpack.c.b16 %v1913, %v1905
    %v2362 = vpack.c.b16 %v1914, %v1906
    %v2363 = vpack.c.b16 %v1923, %v1915
    %v2364 = vpack.c.b16 %v1924, %v1916
    %v2365 = vpack.c.b16 %v1925, %v1917
    %v2366 = vpack.c.b16 %v1926, %v1918
    %v2367 = vpack.c.b16 %v1927, %v1919
    %v2368 = vpack.c.b16 %v1928, %v1920
    %v2369 = vpack.c.b16 %v1929, %v1921
    %v2370 = vpack.c.b16 %v1930, %v1922
    %v2371 = vpack.c.b16 %v1939, %v1931
    %v2372 = vpack.c.b16 %v1940, %v1932
    %v2373 = vpack.c.b16 %v1941, %v1933
    %v2374 = vpack.c.b16 %v1942, %v1934
    %v2375 = vpack.c.b16 %v1943, %v1935
    %v2376 = vpack.c.b16 %v1944, %v1936
    %v2377 = vpack.c.b16 %v1945, %v1937
    %v2378 = vpack.c.b16 %v1946, %v1938
    %v2379 = vpack.c.b16 %v1955, %v1947
    %v2380 = vpack.c.b16 %v1956, %v1948
    %v2381 = vpack.c.b16 %v1957, %v1949
    %v2382 = vpack.c.b16 %v1958, %v1950
    %v2383 = vpack.c.b16 %v1959, %v1951
    %v2384 = vpack.c.b16 %v1960, %v1952
    %v2385 = vpack.c.b16 %v1961, %v1953
    %v2386 = vpack.c.b16 %v1962, %v1954
    %v2387 = vpack.c.b16 %v1971, %v1963
    %v2388 = vpack.c.b16 %v1972, %v1964
    %v2389 = vpack.c.b16 %v1973, %v1965
    %v2390 = vpack.c.b16 %v1974, %v1966
    %v2391 = vpack.c.b16 %v1975, %v1967
    %v2392 = vpack.c.b16 %v1976, %v1968
    %v2393 = vpack.c.b16 %v1977, %v1969
    %v2394 = vpack.c.b16 %v1978, %v1970
    %v2395 = vpack.c.b16 %v1987, %v1979
    %v2396 = vpack.c.b16 %v1988, %v1980
    %v2397 = vpack.c.b16 %v1989, %v1981
    %v2398 = vpack.c.b16 %v1990, %v1982
    %v2399 = vpack.c.b16 %v1991, %v1983
    %v2400 = vpack.c.b16 %v1992, %v1984
    %v2401 = vpack.c.b16 %v1993, %v1985
    %v2402 = vpack.c.b16 %v1994, %v1986
    %v2403 = vpack.c.b16 %v2003, %v1995
    %v2404 = vpack.c.b16 %v2004, %v1996
    %v2405 = vpack.c.b16 %v2005, %v1997
    %v2406 = vpack.c.b16 %v2006, %v1998
    %v2407 = vpack.c.b16 %v2007, %v1999
    %v2408 = vpack.c.b16 %v2008, %v2000
    %v2409 = vpack.c.b16 %v2009, %v2001
    %v2410 = vpack.c.b16 %v2010, %v2002
    %v2411 = vpack.c.b16 %v2019, %v2011
    %v2412 = vpack.c.b16 %v2020, %v2012
    %v2413 = vpack.c.b16 %v2021, %v2013
    %v2414 = vpack.c.b16 %v2022, %v2014
    %v2415 = vpack.c.b16 %v2023, %v2015
    %v2416 = vpack.c.b16 %v2024, %v2016
    %v2417 = vpack.c.b16 %v2025, %v2017
    %v2418 = vpack.c.b16 %v2026, %v2018
    %v2419 = vpack.c.b16 %v2035, %v2027
    %v2420 = vpack.c.b16 %v2036, %v2028
    %v2421 = vpack.c.b16 %v2037, %v2029
    %v2422 = vpack.c.b16 %v2038, %v2030
    %v2423 = vpack.c.b16 %v2039, %v2031
    %v2424 = vpack.c.b16 %v2040, %v2032
    %v2425 = vpack.c.b16 %v2041, %v2033
    %v2426 = vpack.c.b16 %v2042, %v2034
    %v2427 = vpack.c.b16 %v2051, %v2043
    %v2428 = vpack.c.b16 %v2052, %v2044
    %v2429 = vpack.c.b16 %v2053, %v2045
    %v2430 = vpack.c.b16 %v2054, %v2046
    %v2431 = vpack.c.b16 %v2055, %v2047
    %v2432 = vpack.c.b16 %v2056, %v2048
    %v2433 = vpack.c.b16 %v2057, %v2049
    %v2434 = vpack.c.b16 %v2058, %v2050
    %v2435 = vpack.c.b16 %v2067, %v2059
    %v2436 = vpack.c.b16 %v2068, %v2060
    %v2437 = vpack.c.b16 %v2069, %v2061
    %v2438 = vpack.c.b16 %v2070, %v2062
    %v2439 = vpack.c.b16 %v2071, %v2063
    %v2440 = vpack.c.b16 %v2072, %v2064
    %v2441 = vpack.c.b16 %v2073, %v2065
    %v2442 = vpack.c.b16 %v2074, %v2066
    %v2443 = vpack.c.b16 %v2083, %v2075
    %v2444 = vpack.c.b16 %v2084, %v2076
    %v2445 = vpack.c.b16 %v2085, %v2077
    %v2446 = vpack.c.b16 %v2086, %v2078
    %v2447 = vpack.c.b16 %v2087, %v2079
    %v2448 = vpack.c.b16 %v2088, %v2080
    %v2449 = vpack.c.b16 %v2089, %v2081
    %v2450 = vpack.c.b16 %v2090, %v2082
    %v2451 = vpack.c.b16 %v2099, %v2091
    %v2452 = vpack.c.b16 %v2100, %v2092
    %v2453 = vpack.c.b16 %v2101, %v2093
    %v2454 = vpack.c.b16 %v2102, %v2094
    %v2455 = vpack.c.b16 %v2103, %v2095
    %v2456 = vpack.c.b16 %v2104, %v2096
    %v2457 = vpack.c.b16 %v2105, %v2097
    %v2458 = vpack.c.b16 %v2106, %v2098
    %v2459 = vpack.c.b16 %v2115, %v2107
    %v2460 = vpack.c.b16 %v2116, %v2108
    %v2461 = vpack.c.b16 %v2117, %v2109
    %v2462 = vpack.c.b16 %v2118, %v2110
    %v2463 = vpack.c.b16 %v2119, %v2111
    %v2464 = vpack.c.b16 %v2120, %v2112
    %v2465 = vpack.c.b16 %v2121, %v2113
    %v2466 = vpack.c.b16 %v2122, %v2114
    %v2467 = vpack.c.b16 %v2131, %v2123
    %v2468 = vpack.c.b16 %v2132, %v2124
    %v2469 = vpack.c.b16 %v2133, %v2125
    %v2470 = vpack.c.b16 %v2134, %v2126
    %v2471 = vpack.c.b16 %v2135, %v2127
    %v2472 = vpack.c.b16 %v2136, %v2128
    %v2473 = vpack.c.b16 %v2137, %v2129
    %v2474 = vpack.c.b16 %v2138, %v2130
    %v2475 = vpack.c.b16 %v2147, %v2139
    %v2476 = vpack.c.b16 %v2148, %v2140
    %v2477 = vpack.c.b16 %v2149, %v2141
    %v2478 = vpack.c.b16 %v2150, %v2142
    %v2479 = vpack.c.b16 %v2151, %v2143
    %v2480 = vpack.c.b16 %v2152, %v2144
    %v2481 = vpack.c.b16 %v2153, %v2145
    %v2482 = vpack.c.b16 %v2154, %v2146
    %v2483 = vpack.c.b16 %v2163, %v2155
    %v2484 = vpack.c.b16 %v2164, %v2156
    %v2485 = vpack.c.b16 %v2165, %v2157
    %v2486 = vpack.c.b16 %v2166, %v2158
    %v2487 = vpack.c.b16 %v2167, %v2159
    %v2488 = vpack.c.b16 %v2168, %v2160
    %v2489 = vpack.c.b16 %v2169, %v2161
    %v2490 = vpack.c.b16 %v2170, %v2162
    %v2491 = vpack.c.b16 %v2179, %v2171
    %v2492 = vpack.c.b16 %v2180, %v2172
    %v2493 = vpack.c.b16 %v2181, %v2173
    %v2494 = vpack.c.b16 %v2182, %v2174
    %v2495 = vpack.c.b16 %v2183, %v2175
    %v2496 = vpack.c.b16 %v2184, %v2176
    %v2497 = vpack.c.b16 %v2185, %v2177
    %v2498 = vpack.c.b16 %v2186, %v2178
    %v2499 = vpack.c.b16 %v2195, %v2187
    %v2500 = vpack.c.b16 %v2196, %v2188
    %v2501 = vpack.c.b16 %v2197, %v2189
    %v2502 = vpack.c.b16 %v2198, %v2190
    %v2503 = vpack.c.b16 %v2199, %v2191
    %v2504 = vpack.c.b16 %v2200, %v2192
    %v2505 = vpack.c.b16 %v2201, %v2193
    %v2506 = vpack.c.b16 %v2202, %v2194
    %v2507 = vpack.c.b16 %v2211, %v2203
    %v2508 = vpack.c.b16 %v2212, %v2204
    %v2509 = vpack.c.b16 %v2213, %v2205
    %v2510 = vpack.c.b16 %v2214, %v2206
    %v2511 = vpack.c.b16 %v2215, %v2207
    %v2512 = vpack.c.b16 %v2216, %v2208
    %v2513 = vpack.c.b16 %v2217, %v2209
    %v2514 = vpack.c.b16 %v2218, %v2210
    %v2515 = vpack.c.b16 %v2227, %v2219
    %v2516 = vpack.c.b16 %v2228, %v2220
    %v2517 = vpack.c.b16 %v2229, %v2221
    %v2518 = vpack.c.b16 %v2230, %v2222
    %v2519 = vpack.c.b16 %v2231, %v2223
    %v2520 = vpack.c.b16 %v2232, %v2224
    %v2521 = vpack.c.b16 %v2233, %v2225
    %v2522 = vpack.c.b16 %v2234, %v2226
    %v2523 = vpack.c.b16 %v2243, %v2235
    %v2524 = vpack.c.b16 %v2244, %v2236
    %v2525 = vpack.c.b16 %v2245, %v2237
    %v2526 = vpack.c.b16 %v2246, %v2238
    %v2527 = vpack.c.b16 %v2247, %v2239
    %v2528 = vpack.c.b16 %v2248, %v2240
    %v2529 = vpack.c.b16 %v2249, %v2241
    %v2530 = vpack.c.b16 %v2250, %v2242
    %v2531 = vpack.c.b16 %v2259, %v2251
    %v2532 = vpack.c.b16 %v2260, %v2252
    %v2533 = vpack.c.b16 %v2261, %v2253
    %v2534 = vpack.c.b16 %v2262, %v2254
    %v2535 = vpack.c.b16 %v2263, %v2255
    %v2536 = vpack.c.b16 %v2264, %v2256
    %v2537 = vpack.c.b16 %v2265, %v2257
    %v2538 = vpack.c.b16 %v2266, %v2258
    %v2539 = vpack.c.b16 %v2275, %v2267
    %v2540 = vpack.c.b16 %v2276, %v2268
    %v2541 = vpack.c.b16 %v2277, %v2269
    %v2542 = vpack.c.b16 %v2278, %v2270
    %v2543 = vpack.c.b16 %v2279, %v2271
    %v2544 = vpack.c.b16 %v2280, %v2272
    %v2545 = vpack.c.b16 %v2281, %v2273
    %v2546 = vpack.c.b16 %v2282, %v2274
    %v2547 = vpack.c.b16 %v2291, %v2283
    %v2548 = vpack.c.b16 %v2292, %v2284
    %v2549 = vpack.c.b16 %v2293, %v2285
    %v2550 = vpack.c.b16 %v2294, %v2286
    %v2551 = vpack.c.b16 %v2295, %v2287
    %v2552 = vpack.c.b16 %v2296, %v2288
    %v2553 = vpack.c.b16 %v2297, %v2289
    %v2554 = vpack.c.b16 %v2298, %v2290
    %2811 = vmatpush.bf16.msra.mxu0 %v2355
    %2812 = vmatpush.bf16.msra.mxu0 %v2347
    %2813 = vmatpush.bf16.msra.mxu0 %v2339
    %2814 = vmatpush.bf16.msra.mxu0 %v2331
    %2815 = vmatpush.bf16.msra.mxu0 %v2323
    %2816 = vmatpush.bf16.msra.mxu0 %v2315
    %2817 = vmatpush.bf16.msra.mxu0 %v2307
    %2818 = vmatpush.bf16.msra.mxu0 %v2299
    %2819 = vmatmul.bf16.gmra.mxu0 %v1271
    %v2820 = vpop.f32.mrf.mxu0
    %v2821 = vadd.f32 0.0, %v2820
    %v2822 = vpop.f32.mrf.mxu0
    %2823 = vdwg.mxu0
    %2824 = vmatpush.bf16.msra.mxu0 %v2419
    %2825 = vmatpush.bf16.msra.mxu0 %v2411
    %2826 = vmatpush.bf16.msra.mxu0 %v2403
    %2827 = vmatpush.bf16.msra.mxu0 %v2395
    %2828 = vmatpush.bf16.msra.mxu0 %v2387
    %2829 = vmatpush.bf16.msra.mxu0 %v2379
    %2830 = vmatpush.bf16.msra.mxu0 %v2371
    %2831 = vmatpush.bf16.msra.mxu0 %v2363
    %2832 = vmatmul.bf16.gmra.mxu0 %v1272
    %v2833 = vpop.f32.mrf.mxu0
    %v2834 = vadd.f32 %v2821, %v2833
    %v2835 = vpop.f32.mrf.mxu0
    %2836 = vdwg.mxu0
    %2837 = vmatpush.bf16.msra.mxu0 %v2483
    %2838 = vmatpush.bf16.msra.mxu0 %v2475
    %2839 = vmatpush.bf16.msra.mxu0 %v2467
    %2840 = vmatpush.bf16.msra.mxu0 %v2459
    %2841 = vmatpush.bf16.msra.mxu0 %v2451
    %2842 = vmatpush.bf16.msra.mxu0 %v2443
    %2843 = vmatpush.bf16.msra.mxu0 %v2435
    %2844 = vmatpush.bf16.msra.mxu0 %v2427
    %2845 = vmatmul.bf16.gmra.mxu0 %v1273
    %v2846 = vpop.f32.mrf.mxu0
    %v2847 = vadd.f32 %v2834, %v2846
    %v2848 = vpop.f32.mrf.mxu0
    %2849 = vdwg.mxu0
    %2850 = vmatpush.bf16.msra.mxu0 %v2547
    %2851 = vmatpush.bf16.msra.mxu0 %v2539
    %2852 = vmatpush.bf16.msra.mxu0 %v2531
    %2853 = vmatpush.bf16.msra.mxu0 %v2523
    %2854 = vmatpush.bf16.msra.mxu0 %v2515
    %2855 = vmatpush.bf16.msra.mxu0 %v2507
    %2856 = vmatpush.bf16.msra.mxu0 %v2499
    %2857 = vmatpush.bf16.msra.mxu0 %v2491
    %2858 = vmatmul.bf16.gmra.mxu0 %v1274
    %v2859 = vpop.f32.mrf.mxu0
    %v2860 = vadd.f32 %v2847, %v2859
    %v2861 = vpop.f32.mrf.mxu0
    %2862 = vdwg.mxu0
    %2863 = vmatpush.bf16.msra.mxu0 %v2356
    %2864 = vmatpush.bf16.msra.mxu0 %v2348
    %2865 = vmatpush.bf16.msra.mxu0 %v2340
    %2866 = vmatpush.bf16.msra.mxu0 %v2332
    %2867 = vmatpush.bf16.msra.mxu0 %v2324
    %2868 = vmatpush.bf16.msra.mxu0 %v2316
    %2869 = vmatpush.bf16.msra.mxu0 %v2308
    %2870 = vmatpush.bf16.msra.mxu0 %v2300
    %2871 = vmatmul.bf16.gmra.mxu0 %v1271
    %v2872 = vpop.f32.mrf.mxu0
    %v2873 = vadd.f32 0.0, %v2872
    %v2874 = vpop.f32.mrf.mxu0
    %2875 = vdwg.mxu0
    %2876 = vmatpush.bf16.msra.mxu0 %v2420
    %2877 = vmatpush.bf16.msra.mxu0 %v2412
    %2878 = vmatpush.bf16.msra.mxu0 %v2404
    %2879 = vmatpush.bf16.msra.mxu0 %v2396
    %2880 = vmatpush.bf16.msra.mxu0 %v2388
    %2881 = vmatpush.bf16.msra.mxu0 %v2380
    %2882 = vmatpush.bf16.msra.mxu0 %v2372
    %2883 = vmatpush.bf16.msra.mxu0 %v2364
    %2884 = vmatmul.bf16.gmra.mxu0 %v1272
    %v2885 = vpop.f32.mrf.mxu0
    %v2886 = vadd.f32 %v2873, %v2885
    %v2887 = vpop.f32.mrf.mxu0
    %2888 = vdwg.mxu0
    %2889 = vmatpush.bf16.msra.mxu0 %v2484
    %2890 = vmatpush.bf16.msra.mxu0 %v2476
    %2891 = vmatpush.bf16.msra.mxu0 %v2468
    %2892 = vmatpush.bf16.msra.mxu0 %v2460
    %2893 = vmatpush.bf16.msra.mxu0 %v2452
    %2894 = vmatpush.bf16.msra.mxu0 %v2444
    %2895 = vmatpush.bf16.msra.mxu0 %v2436
    %2896 = vmatpush.bf16.msra.mxu0 %v2428
    %2897 = vmatmul.bf16.gmra.mxu0 %v1273
    %v2898 = vpop.f32.mrf.mxu0
    %v2899 = vadd.f32 %v2886, %v2898
    %v2900 = vpop.f32.mrf.mxu0
    %2901 = vdwg.mxu0
    %2902 = vmatpush.bf16.msra.mxu0 %v2548
    %2903 = vmatpush.bf16.msra.mxu0 %v2540
    %2904 = vmatpush.bf16.msra.mxu0 %v2532
    %2905 = vmatpush.bf16.msra.mxu0 %v2524
    %2906 = vmatpush.bf16.msra.mxu0 %v2516
    %2907 = vmatpush.bf16.msra.mxu0 %v2508
    %2908 = vmatpush.bf16.msra.mxu0 %v2500
    %2909 = vmatpush.bf16.msra.mxu0 %v2492
    %2910 = vmatmul.bf16.gmra.mxu0 %v1274
    %v2911 = vpop.f32.mrf.mxu0
    %v2912 = vadd.f32 %v2899, %v2911
    %v2913 = vpop.f32.mrf.mxu0
    %2914 = vdwg.mxu0
    %2915 = vmatpush.bf16.msra.mxu0 %v2357
    %2916 = vmatpush.bf16.msra.mxu0 %v2349
    %2917 = vmatpush.bf16.msra.mxu0 %v2341
    %2918 = vmatpush.bf16.msra.mxu0 %v2333
    %2919 = vmatpush.bf16.msra.mxu0 %v2325
    %2920 = vmatpush.bf16.msra.mxu0 %v2317
    %2921 = vmatpush.bf16.msra.mxu0 %v2309
    %2922 = vmatpush.bf16.msra.mxu0 %v2301
    %2923 = vmatmul.bf16.gmra.mxu0 %v1271
    %v2924 = vpop.f32.mrf.mxu0
    %v2925 = vadd.f32 0.0, %v2924
    %v2926 = vpop.f32.mrf.mxu0
    %2927 = vdwg.mxu0
    %2928 = vmatpush.bf16.msra.mxu0 %v2421
    %2929 = vmatpush.bf16.msra.mxu0 %v2413
    %2930 = vmatpush.bf16.msra.mxu0 %v2405
    %2931 = vmatpush.bf16.msra.mxu0 %v2397
    %2932 = vmatpush.bf16.msra.mxu0 %v2389
    %2933 = vmatpush.bf16.msra.mxu0 %v2381
    %2934 = vmatpush.bf16.msra.mxu0 %v2373
    %2935 = vmatpush.bf16.msra.mxu0 %v2365
    %2936 = vmatmul.bf16.gmra.mxu0 %v1272
    %v2937 = vpop.f32.mrf.mxu0
    %v2938 = vadd.f32 %v2925, %v2937
    %v2939 = vpop.f32.mrf.mxu0
    %2940 = vdwg.mxu0
    %2941 = vmatpush.bf16.msra.mxu0 %v2485
    %2942 = vmatpush.bf16.msra.mxu0 %v2477
    %2943 = vmatpush.bf16.msra.mxu0 %v2469
    %2944 = vmatpush.bf16.msra.mxu0 %v2461
    %2945 = vmatpush.bf16.msra.mxu0 %v2453
    %2946 = vmatpush.bf16.msra.mxu0 %v2445
    %2947 = vmatpush.bf16.msra.mxu0 %v2437
    %2948 = vmatpush.bf16.msra.mxu0 %v2429
    %2949 = vmatmul.bf16.gmra.mxu0 %v1273
    %v2950 = vpop.f32.mrf.mxu0
    %v2951 = vadd.f32 %v2938, %v2950
    %v2952 = vpop.f32.mrf.mxu0
    %2953 = vdwg.mxu0
    %2954 = vmatpush.bf16.msra.mxu0 %v2549
    %2955 = vmatpush.bf16.msra.mxu0 %v2541
    %2956 = vmatpush.bf16.msra.mxu0 %v2533
    %2957 = vmatpush.bf16.msra.mxu0 %v2525
    %2958 = vmatpush.bf16.msra.mxu0 %v2517
    %2959 = vmatpush.bf16.msra.mxu0 %v2509
    %2960 = vmatpush.bf16.msra.mxu0 %v2501
    %2961 = vmatpush.bf16.msra.mxu0 %v2493
    %2962 = vmatmul.bf16.gmra.mxu0 %v1274
    %v2963 = vpop.f32.mrf.mxu0
    %v2964 = vadd.f32 %v2951, %v2963
    %v2965 = vpop.f32.mrf.mxu0
    %2966 = vdwg.mxu0
    %2967 = vmatpush.bf16.msra.mxu0 %v2358
    %2968 = vmatpush.bf16.msra.mxu0 %v2350
    %2969 = vmatpush.bf16.msra.mxu0 %v2342
    %2970 = vmatpush.bf16.msra.mxu0 %v2334
    %2971 = vmatpush.bf16.msra.mxu0 %v2326
    %2972 = vmatpush.bf16.msra.mxu0 %v2318
    %2973 = vmatpush.bf16.msra.mxu0 %v2310
    %2974 = vmatpush.bf16.msra.mxu0 %v2302
    %2975 = vmatmul.bf16.gmra.mxu0 %v1271
    %v2976 = vpop.f32.mrf.mxu0
    %v2977 = vadd.f32 0.0, %v2976
    %v2978 = vpop.f32.mrf.mxu0
    %2979 = vdwg.mxu0
    %2980 = vmatpush.bf16.msra.mxu0 %v2422
    %2981 = vmatpush.bf16.msra.mxu0 %v2414
    %2982 = vmatpush.bf16.msra.mxu0 %v2406
    %2983 = vmatpush.bf16.msra.mxu0 %v2398
    %2984 = vmatpush.bf16.msra.mxu0 %v2390
    %2985 = vmatpush.bf16.msra.mxu0 %v2382
    %2986 = vmatpush.bf16.msra.mxu0 %v2374
    %2987 = vmatpush.bf16.msra.mxu0 %v2366
    %2988 = vmatmul.bf16.gmra.mxu0 %v1272
    %v2989 = vpop.f32.mrf.mxu0
    %v2990 = vadd.f32 %v2977, %v2989
    %v2991 = vpop.f32.mrf.mxu0
    %2992 = vdwg.mxu0
    %2993 = vmatpush.bf16.msra.mxu0 %v2486
    %2994 = vmatpush.bf16.msra.mxu0 %v2478
    %2995 = vmatpush.bf16.msra.mxu0 %v2470
    %2996 = vmatpush.bf16.msra.mxu0 %v2462
    %2997 = vmatpush.bf16.msra.mxu0 %v2454
    %2998 = vmatpush.bf16.msra.mxu0 %v2446
    %2999 = vmatpush.bf16.msra.mxu0 %v2438
    %3000 = vmatpush.bf16.msra.mxu0 %v2430
    %3001 = vmatmul.bf16.gmra.mxu0 %v1273
    %v3002 = vpop.f32.mrf.mxu0
    %v3003 = vadd.f32 %v2990, %v3002
    %v3004 = vpop.f32.mrf.mxu0
    %3005 = vdwg.mxu0
    %3006 = vmatpush.bf16.msra.mxu0 %v2550
    %3007 = vmatpush.bf16.msra.mxu0 %v2542
    %3008 = vmatpush.bf16.msra.mxu0 %v2534
    %3009 = vmatpush.bf16.msra.mxu0 %v2526
    %3010 = vmatpush.bf16.msra.mxu0 %v2518
    %3011 = vmatpush.bf16.msra.mxu0 %v2510
    %3012 = vmatpush.bf16.msra.mxu0 %v2502
    %3013 = vmatpush.bf16.msra.mxu0 %v2494
    %3014 = vmatmul.bf16.gmra.mxu0 %v1274
    %v3015 = vpop.f32.mrf.mxu0
    %v3016 = vadd.f32 %v3003, %v3015
    %v3017 = vpop.f32.mrf.mxu0
    %3018 = vdwg.mxu0
    %3019 = vmatpush.bf16.msra.mxu0 %v2359
    %3020 = vmatpush.bf16.msra.mxu0 %v2351
    %3021 = vmatpush.bf16.msra.mxu0 %v2343
    %3022 = vmatpush.bf16.msra.mxu0 %v2335
    %3023 = vmatpush.bf16.msra.mxu0 %v2327
    %3024 = vmatpush.bf16.msra.mxu0 %v2319
    %3025 = vmatpush.bf16.msra.mxu0 %v2311
    %3026 = vmatpush.bf16.msra.mxu0 %v2303
    %3027 = vmatmul.bf16.gmra.mxu0 %v1271
    %v3028 = vpop.f32.mrf.mxu0
    %v3029 = vadd.f32 0.0, %v3028
    %v3030 = vpop.f32.mrf.mxu0
    %3031 = vdwg.mxu0
    %3032 = vmatpush.bf16.msra.mxu0 %v2423
    %3033 = vmatpush.bf16.msra.mxu0 %v2415
    %3034 = vmatpush.bf16.msra.mxu0 %v2407
    %3035 = vmatpush.bf16.msra.mxu0 %v2399
    %3036 = vmatpush.bf16.msra.mxu0 %v2391
    %3037 = vmatpush.bf16.msra.mxu0 %v2383
    %3038 = vmatpush.bf16.msra.mxu0 %v2375
    %3039 = vmatpush.bf16.msra.mxu0 %v2367
    %3040 = vmatmul.bf16.gmra.mxu0 %v1272
    %v3041 = vpop.f32.mrf.mxu0
    %v3042 = vadd.f32 %v3029, %v3041
    %v3043 = vpop.f32.mrf.mxu0
    %3044 = vdwg.mxu0
    %3045 = vmatpush.bf16.msra.mxu0 %v2487
    %3046 = vmatpush.bf16.msra.mxu0 %v2479
    %3047 = vmatpush.bf16.msra.mxu0 %v2471
    %3048 = vmatpush.bf16.msra.mxu0 %v2463
    %3049 = vmatpush.bf16.msra.mxu0 %v2455
    %3050 = vmatpush.bf16.msra.mxu0 %v2447
    %3051 = vmatpush.bf16.msra.mxu0 %v2439
    %3052 = vmatpush.bf16.msra.mxu0 %v2431
    %3053 = vmatmul.bf16.gmra.mxu0 %v1273
    %v3054 = vpop.f32.mrf.mxu0
    %v3055 = vadd.f32 %v3042, %v3054
    %v3056 = vpop.f32.mrf.mxu0
    %3057 = vdwg.mxu0
    %3058 = vmatpush.bf16.msra.mxu0 %v2551
    %3059 = vmatpush.bf16.msra.mxu0 %v2543
    %3060 = vmatpush.bf16.msra.mxu0 %v2535
    %3061 = vmatpush.bf16.msra.mxu0 %v2527
    %3062 = vmatpush.bf16.msra.mxu0 %v2519
    %3063 = vmatpush.bf16.msra.mxu0 %v2511
    %3064 = vmatpush.bf16.msra.mxu0 %v2503
    %3065 = vmatpush.bf16.msra.mxu0 %v2495
    %3066 = vmatmul.bf16.gmra.mxu0 %v1274
    %v3067 = vpop.f32.mrf.mxu0
    %v3068 = vadd.f32 %v3055, %v3067
    %v3069 = vpop.f32.mrf.mxu0
    %3070 = vdwg.mxu0
    %3071 = vmatpush.bf16.msra.mxu0 %v2360
    %3072 = vmatpush.bf16.msra.mxu0 %v2352
    %3073 = vmatpush.bf16.msra.mxu0 %v2344
    %3074 = vmatpush.bf16.msra.mxu0 %v2336
    %3075 = vmatpush.bf16.msra.mxu0 %v2328
    %3076 = vmatpush.bf16.msra.mxu0 %v2320
    %3077 = vmatpush.bf16.msra.mxu0 %v2312
    %3078 = vmatpush.bf16.msra.mxu0 %v2304
    %3079 = vmatmul.bf16.gmra.mxu0 %v1271
    %v3080 = vpop.f32.mrf.mxu0
    %v3081 = vadd.f32 0.0, %v3080
    %v3082 = vpop.f32.mrf.mxu0
    %3083 = vdwg.mxu0
    %3084 = vmatpush.bf16.msra.mxu0 %v2424
    %3085 = vmatpush.bf16.msra.mxu0 %v2416
    %3086 = vmatpush.bf16.msra.mxu0 %v2408
    %3087 = vmatpush.bf16.msra.mxu0 %v2400
    %3088 = vmatpush.bf16.msra.mxu0 %v2392
    %3089 = vmatpush.bf16.msra.mxu0 %v2384
    %3090 = vmatpush.bf16.msra.mxu0 %v2376
    %3091 = vmatpush.bf16.msra.mxu0 %v2368
    %3092 = vmatmul.bf16.gmra.mxu0 %v1272
    %v3093 = vpop.f32.mrf.mxu0
    %v3094 = vadd.f32 %v3081, %v3093
    %v3095 = vpop.f32.mrf.mxu0
    %3096 = vdwg.mxu0
    %3097 = vmatpush.bf16.msra.mxu0 %v2488
    %3098 = vmatpush.bf16.msra.mxu0 %v2480
    %3099 = vmatpush.bf16.msra.mxu0 %v2472
    %3100 = vmatpush.bf16.msra.mxu0 %v2464
    %3101 = vmatpush.bf16.msra.mxu0 %v2456
    %3102 = vmatpush.bf16.msra.mxu0 %v2448
    %3103 = vmatpush.bf16.msra.mxu0 %v2440
    %3104 = vmatpush.bf16.msra.mxu0 %v2432
    %3105 = vmatmul.bf16.gmra.mxu0 %v1273
    %v3106 = vpop.f32.mrf.mxu0
    %v3107 = vadd.f32 %v3094, %v3106
    %v3108 = vpop.f32.mrf.mxu0
    %3109 = vdwg.mxu0
    %3110 = vmatpush.bf16.msra.mxu0 %v2552
    %3111 = vmatpush.bf16.msra.mxu0 %v2544
    %3112 = vmatpush.bf16.msra.mxu0 %v2536
    %3113 = vmatpush.bf16.msra.mxu0 %v2528
    %3114 = vmatpush.bf16.msra.mxu0 %v2520
    %3115 = vmatpush.bf16.msra.mxu0 %v2512
    %3116 = vmatpush.bf16.msra.mxu0 %v2504
    %3117 = vmatpush.bf16.msra.mxu0 %v2496
    %3118 = vmatmul.bf16.gmra.mxu0 %v1274
    %v3119 = vpop.f32.mrf.mxu0
    %v3120 = vadd.f32 %v3107, %v3119
    %v3121 = vpop.f32.mrf.mxu0
    %3122 = vdwg.mxu0
    %3123 = vmatpush.bf16.msra.mxu0 %v2361
    %3124 = vmatpush.bf16.msra.mxu0 %v2353
    %3125 = vmatpush.bf16.msra.mxu0 %v2345
    %3126 = vmatpush.bf16.msra.mxu0 %v2337
    %3127 = vmatpush.bf16.msra.mxu0 %v2329
    %3128 = vmatpush.bf16.msra.mxu0 %v2321
    %3129 = vmatpush.bf16.msra.mxu0 %v2313
    %3130 = vmatpush.bf16.msra.mxu0 %v2305
    %3131 = vmatmul.bf16.gmra.mxu0 %v1271
    %v3132 = vpop.f32.mrf.mxu0
    %v3133 = vadd.f32 0.0, %v3132
    %v3134 = vpop.f32.mrf.mxu0
    %3135 = vdwg.mxu0
    %3136 = vmatpush.bf16.msra.mxu0 %v2425
    %3137 = vmatpush.bf16.msra.mxu0 %v2417
    %3138 = vmatpush.bf16.msra.mxu0 %v2409
    %3139 = vmatpush.bf16.msra.mxu0 %v2401
    %3140 = vmatpush.bf16.msra.mxu0 %v2393
    %3141 = vmatpush.bf16.msra.mxu0 %v2385
    %3142 = vmatpush.bf16.msra.mxu0 %v2377
    %3143 = vmatpush.bf16.msra.mxu0 %v2369
    %3144 = vmatmul.bf16.gmra.mxu0 %v1272
    %v3145 = vpop.f32.mrf.mxu0
    %v3146 = vadd.f32 %v3133, %v3145
    %v3147 = vpop.f32.mrf.mxu0
    %3148 = vdwg.mxu0
    %3149 = vmatpush.bf16.msra.mxu0 %v2489
    %3150 = vmatpush.bf16.msra.mxu0 %v2481
    %3151 = vmatpush.bf16.msra.mxu0 %v2473
    %3152 = vmatpush.bf16.msra.mxu0 %v2465
    %3153 = vmatpush.bf16.msra.mxu0 %v2457
    %3154 = vmatpush.bf16.msra.mxu0 %v2449
    %3155 = vmatpush.bf16.msra.mxu0 %v2441
    %3156 = vmatpush.bf16.msra.mxu0 %v2433
    %3157 = vmatmul.bf16.gmra.mxu0 %v1273
    %v3158 = vpop.f32.mrf.mxu0
    %v3159 = vadd.f32 %v3146, %v3158
    %v3160 = vpop.f32.mrf.mxu0
    %3161 = vdwg.mxu0
    %3162 = vmatpush.bf16.msra.mxu0 %v2553
    %3163 = vmatpush.bf16.msra.mxu0 %v2545
    %3164 = vmatpush.bf16.msra.mxu0 %v2537
    %3165 = vmatpush.bf16.msra.mxu0 %v2529
    %3166 = vmatpush.bf16.msra.mxu0 %v2521
    %3167 = vmatpush.bf16.msra.mxu0 %v2513
    %3168 = vmatpush.bf16.msra.mxu0 %v2505
    %3169 = vmatpush.bf16.msra.mxu0 %v2497
    %3170 = vmatmul.bf16.gmra.mxu0 %v1274
    %v3171 = vpop.f32.mrf.mxu0
    %v3172 = vadd.f32 %v3159, %v3171
    %v3173 = vpop.f32.mrf.mxu0
    %3174 = vdwg.mxu0
    %3175 = vmatpush.bf16.msra.mxu0 %v2362
    %3176 = vmatpush.bf16.msra.mxu0 %v2354
    %3177 = vmatpush.bf16.msra.mxu0 %v2346
    %3178 = vmatpush.bf16.msra.mxu0 %v2338
    %3179 = vmatpush.bf16.msra.mxu0 %v2330
    %3180 = vmatpush.bf16.msra.mxu0 %v2322
    %3181 = vmatpush.bf16.msra.mxu0 %v2314
    %3182 = vmatpush.bf16.msra.mxu0 %v2306
    %3183 = vmatmul.bf16.gmra.mxu0 %v1271
    %v3184 = vpop.f32.mrf.mxu0
    %v3185 = vadd.f32 0.0, %v3184
    %v3186 = vpop.f32.mrf.mxu0
    %3187 = vdwg.mxu0
    %3188 = vmatpush.bf16.msra.mxu0 %v2426
    %3189 = vmatpush.bf16.msra.mxu0 %v2418
    %3190 = vmatpush.bf16.msra.mxu0 %v2410
    %3191 = vmatpush.bf16.msra.mxu0 %v2402
    %3192 = vmatpush.bf16.msra.mxu0 %v2394
    %3193 = vmatpush.bf16.msra.mxu0 %v2386
    %3194 = vmatpush.bf16.msra.mxu0 %v2378
    %3195 = vmatpush.bf16.msra.mxu0 %v2370
    %3196 = vmatmul.bf16.gmra.mxu0 %v1272
    %v3197 = vpop.f32.mrf.mxu0
    %v3198 = vadd.f32 %v3185, %v3197
    %v3199 = vpop.f32.mrf.mxu0
    %3200 = vdwg.mxu0
    %3201 = vmatpush.bf16.msra.mxu0 %v2490
    %3202 = vmatpush.bf16.msra.mxu0 %v2482
    %3203 = vmatpush.bf16.msra.mxu0 %v2474
    %3204 = vmatpush.bf16.msra.mxu0 %v2466
    %3205 = vmatpush.bf16.msra.mxu0 %v2458
    %3206 = vmatpush.bf16.msra.mxu0 %v2450
    %3207 = vmatpush.bf16.msra.mxu0 %v2442
    %3208 = vmatpush.bf16.msra.mxu0 %v2434
    %3209 = vmatmul.bf16.gmra.mxu0 %v1273
    %v3210 = vpop.f32.mrf.mxu0
    %v3211 = vadd.f32 %v3198, %v3210
    %v3212 = vpop.f32.mrf.mxu0
    %3213 = vdwg.mxu0
    %3214 = vmatpush.bf16.msra.mxu0 %v2554
    %3215 = vmatpush.bf16.msra.mxu0 %v2546
    %3216 = vmatpush.bf16.msra.mxu0 %v2538
    %3217 = vmatpush.bf16.msra.mxu0 %v2530
    %3218 = vmatpush.bf16.msra.mxu0 %v2522
    %3219 = vmatpush.bf16.msra.mxu0 %v2514
    %3220 = vmatpush.bf16.msra.mxu0 %v2506
    %3221 = vmatpush.bf16.msra.mxu0 %v2498
    %3222 = vmatmul.bf16.gmra.mxu0 %v1274
    %v3223 = vpop.f32.mrf.mxu0
    %v3224 = vadd.f32 %v3211, %v3223
    %v3225 = vpop.f32.mrf.mxu0
    %3226 = vdwg.mxu0
    %v3227 = vrot.slane %v2860, 4
    %v3228 = vadd.f32 %v2860, %v3227
    %v3229 = vrot.slane %v3228, 2
    %v3230 = vadd.f32 %v3228, %v3229
    %v3231 = vrot.slane %v3230, 1
    %v3232 = vadd.f32 %v3230, %v3231
    %v3233 = vrot.slane %v2912, 4
    %v3234 = vadd.f32 %v2912, %v3233
    %v3235 = vrot.slane %v3234, 2
    %v3236 = vadd.f32 %v3234, %v3235
    %v3237 = vrot.slane %v3236, 1
    %v3238 = vadd.f32 %v3236, %v3237
    %v3239 = vrot.slane %v2964, 4
    %v3240 = vadd.f32 %v2964, %v3239
    %v3241 = vrot.slane %v3240, 2
    %v3242 = vadd.f32 %v3240, %v3241
    %v3243 = vrot.slane %v3242, 1
    %v3244 = vadd.f32 %v3242, %v3243
    %v3245 = vrot.slane %v3016, 4
    %v3246 = vadd.f32 %v3016, %v3245
    %v3247 = vrot.slane %v3246, 2
    %v3248 = vadd.f32 %v3246, %v3247
    %v3249 = vrot.slane %v3248, 1
    %v3250 = vadd.f32 %v3248, %v3249
    %v3251 = vrot.slane %v3068, 4
    %v3252 = vadd.f32 %v3068, %v3251
    %v3253 = vrot.slane %v3252, 2
    %v3254 = vadd.f32 %v3252, %v3253
    %v3255 = vrot.slane %v3254, 1
    %v3256 = vadd.f32 %v3254, %v3255
    %v3257 = vrot.slane %v3120, 4
    %v3258 = vadd.f32 %v3120, %v3257
    %v3259 = vrot.slane %v3258, 2
    %v3260 = vadd.f32 %v3258, %v3259
    %v3261 = vrot.slane %v3260, 1
    %v3262 = vadd.f32 %v3260, %v3261
    %v3263 = vrot.slane %v3172, 4
    %v3264 = vadd.f32 %v3172, %v3263
    %v3265 = vrot.slane %v3264, 2
    %v3266 = vadd.f32 %v3264, %v3265
    %v3267 = vrot.slane %v3266, 1
    %v3268 = vadd.f32 %v3266, %v3267
    %v3269 = vrot.slane %v3224, 4
    %v3270 = vadd.f32 %v3224, %v3269
    %v3271 = vrot.slane %v3270, 2
    %v3272 = vadd.f32 %v3270, %v3271
    %v3273 = vrot.slane %v3272, 1
    %v3274 = vadd.f32 %v3272, %v3273
    %v3275 = vmul.f32 %v3232, %v378
    %v3276 = vmul.f32 %v3238, %v378
    %v3277 = vmul.f32 %v3244, %v378
    %v3278 = vmul.f32 %v3250, %v378
    %v3279 = vmul.f32 %v3256, %v378
    %v3280 = vmul.f32 %v3262, %v378
    %v3281 = vmul.f32 %v3268, %v378
    %v3282 = vmul.f32 %v3274, %v378
    %v3283 = vmul.f32 %v2860, %v2860
    %v3284 = vmul.f32 %v2912, %v2912
    %v3285 = vmul.f32 %v2964, %v2964
    %v3286 = vmul.f32 %v3016, %v3016
    %v3287 = vmul.f32 %v3068, %v3068
    %v3288 = vmul.f32 %v3120, %v3120
    %v3289 = vmul.f32 %v3172, %v3172
    %v3290 = vmul.f32 %v3224, %v3224
    %v3291 = vrot.slane %v3283, 4
    %v3292 = vadd.f32 %v3283, %v3291
    %v3293 = vrot.slane %v3292, 2
    %v3294 = vadd.f32 %v3292, %v3293
    %v3295 = vrot.slane %v3294, 1
    %v3296 = vadd.f32 %v3294, %v3295
    %v3297 = vrot.slane %v3284, 4
    %v3298 = vadd.f32 %v3284, %v3297
    %v3299 = vrot.slane %v3298, 2
    %v3300 = vadd.f32 %v3298, %v3299
    %v3301 = vrot.slane %v3300, 1
    %v3302 = vadd.f32 %v3300, %v3301
    %v3303 = vrot.slane %v3285, 4
    %v3304 = vadd.f32 %v3285, %v3303
    %v3305 = vrot.slane %v3304, 2
    %v3306 = vadd.f32 %v3304, %v3305
    %v3307 = vrot.slane %v3306, 1
    %v3308 = vadd.f32 %v3306, %v3307
    %v3309 = vrot.slane %v3286, 4
    %v3310 = vadd.f32 %v3286, %v3309
    %v3311 = vrot.slane %v3310, 2
    %v3312 = vadd.f32 %v3310, %v3311
    %v3313 = vrot.slane %v3312, 1
    %v3314 = vadd.f32 %v3312, %v3313
    %v3315 = vrot.slane %v3287, 4
    %v3316 = vadd.f32 %v3287, %v3315
    %v3317 = vrot.slane %v3316, 2
    %v3318 = vadd.f32 %v3316, %v3317
    %v3319 = vrot.slane %v3318, 1
    %v3320 = vadd.f32 %v3318, %v3319
    %v3321 = vrot.slane %v3288, 4
    %v3322 = vadd.f32 %v3288, %v3321
    %v3323 = vrot.slane %v3322, 2
    %v3324 = vadd.f32 %v3322, %v3323
    %v3325 = vrot.slane %v3324, 1
    %v3326 = vadd.f32 %v3324, %v3325
    %v3327 = vrot.slane %v3289, 4
    %v3328 = vadd.f32 %v3289, %v3327
    %v3329 = vrot.slane %v3328, 2
    %v3330 = vadd.f32 %v3328, %v3329
    %v3331 = vrot.slane %v3330, 1
    %v3332 = vadd.f32 %v3330, %v3331
    %v3333 = vrot.slane %v3290, 4
    %v3334 = vadd.f32 %v3290, %v3333
    %v3335 = vrot.slane %v3334, 2
    %v3336 = vadd.f32 %v3334, %v3335
    %v3337 = vrot.slane %v3336, 1
    %v3338 = vadd.f32 %v3336, %v3337
    %v3339 = vmul.f32 %v3296, %v378
    %v3340 = vmul.f32 %v3302, %v378
    %v3341 = vmul.f32 %v3308, %v378
    %v3342 = vmul.f32 %v3314, %v378
    %v3343 = vmul.f32 %v3320, %v378
    %v3344 = vmul.f32 %v3326, %v378
    %v3345 = vmul.f32 %v3332, %v378
    %v3346 = vmul.f32 %v3338, %v378
    %v3347 = vmul.f32 %v3275, %v3275
    %v3348 = vmul.f32 %v3276, %v3276
    %v3349 = vmul.f32 %v3277, %v3277
    %v3350 = vmul.f32 %v3278, %v3278
    %v3351 = vmul.f32 %v3279, %v3279
    %v3352 = vmul.f32 %v3280, %v3280
    %v3353 = vmul.f32 %v3281, %v3281
    %v3354 = vmul.f32 %v3282, %v3282
    %v3355 = vsub.f32 %v3339, %v3347
    %v3356 = vsub.f32 %v3340, %v3348
    %v3357 = vsub.f32 %v3341, %v3349
    %v3358 = vsub.f32 %v3342, %v3350
    %v3359 = vsub.f32 %v3343, %v3351
    %v3360 = vsub.f32 %v3344, %v3352
    %v3361 = vsub.f32 %v3345, %v3353
    %v3362 = vsub.f32 %v3346, %v3354
    %v3363 = vsub.f32 %v2860, %v3275
    %v3364 = vsub.f32 %v2912, %v3276
    %v3365 = vsub.f32 %v2964, %v3277
    %v3366 = vsub.f32 %v3016, %v3278
    %v3367 = vsub.f32 %v3068, %v3279
    %v3368 = vsub.f32 %v3120, %v3280
    %v3369 = vsub.f32 %v3172, %v3281
    %v3370 = vsub.f32 %v3224, %v3282
    %v3371 = vadd.f32 %v3355, 0.8
    %v3372 = vadd.f32 %v3356, 0.8
    %v3373 = vadd.f32 %v3357, 0.8
    %v3374 = vadd.f32 %v3358, 0.8
    %v3375 = vadd.f32 %v3359, 0.8
    %v3376 = vadd.f32 %v3360, 0.8
    %v3377 = vadd.f32 %v3361, 0.8
    %v3378 = vadd.f32 %v3362, 0.8
    %v3379 = vrsqrt.pop %v3371
    %v3380 = vmul.f32 %v3379, %v3371
    %v3381 = vmul.f32 %v3380, %v3379
    %v3382 = vmul.f32 0.5, %v3381
    %v3383 = vsub.f32 1.5, %v3382
    %v3384 = vmul.f32 %v3379, %v3383
    %vm3385 = vweird.f32 %v3371
    %vm3386 = vweird.f32 %v3379
    %vm3387 = vmor %vm3385, %vm3386
    %v3388 = vsel %vm3387, %v3379, %v3384
    %v3389 = vrsqrt.pop %v3372
    %v3390 = vmul.f32 %v3389, %v3372
    %v3391 = vmul.f32 %v3390, %v3389
    %v3392 = vmul.f32 0.5, %v3391
    %v3393 = vsub.f32 1.5, %v3392
    %v3394 = vmul.f32 %v3389, %v3393
    %vm3395 = vweird.f32 %v3372
    %vm3396 = vweird.f32 %v3389
    %vm3397 = vmor %vm3395, %vm3396
    %v3398 = vsel %vm3397, %v3389, %v3394
    %v3399 = vrsqrt.pop %v3373
    %v3400 = vmul.f32 %v3399, %v3373
    %v3401 = vmul.f32 %v3400, %v3399
    %v3402 = vmul.f32 0.5, %v3401
    %v3403 = vsub.f32 1.5, %v3402
    %v3404 = vmul.f32 %v3399, %v3403
    %vm3405 = vweird.f32 %v3373
    %vm3406 = vweird.f32 %v3399
    %vm3407 = vmor %vm3405, %vm3406
    %v3408 = vsel %vm3407, %v3399, %v3404
    %v3409 = vrsqrt.pop %v3374
    %v3410 = vmul.f32 %v3409, %v3374
    %v3411 = vmul.f32 %v3410, %v3409
    %v3412 = vmul.f32 0.5, %v3411
    %v3413 = vsub.f32 1.5, %v3412
    %v3414 = vmul.f32 %v3409, %v3413
    %vm3415 = vweird.f32 %v3374
    %vm3416 = vweird.f32 %v3409
    %vm3417 = vmor %vm3415, %vm3416
    %v3418 = vsel %vm3417, %v3409, %v3414
    %v3419 = vrsqrt.pop %v3375
    %v3420 = vmul.f32 %v3419, %v3375
    %v3421 = vmul.f32 %v3420, %v3419
    %v3422 = vmul.f32 0.5, %v3421
    %v3423 = vsub.f32 1.5, %v3422
    %v3424 = vmul.f32 %v3419, %v3423
    %vm3425 = vweird.f32 %v3375
    %vm3426 = vweird.f32 %v3419
    %vm3427 = vmor %vm3425, %vm3426
    %v3428 = vsel %vm3427, %v3419, %v3424
    %v3429 = vrsqrt.pop %v3376
    %v3430 = vmul.f32 %v3429, %v3376
    %v3431 = vmul.f32 %v3430, %v3429
    %v3432 = vmul.f32 0.5, %v3431
    %v3433 = vsub.f32 1.5, %v3432
    %v3434 = vmul.f32 %v3429, %v3433
    %vm3435 = vweird.f32 %v3376
    %vm3436 = vweird.f32 %v3429
    %vm3437 = vmor %vm3435, %vm3436
    %v3438 = vsel %vm3437, %v3429, %v3434
    %v3439 = vrsqrt.pop %v3377
    %v3440 = vmul.f32 %v3439, %v3377
    %v3441 = vmul.f32 %v3440, %v3439
    %v3442 = vmul.f32 0.5, %v3441
    %v3443 = vsub.f32 1.5, %v3442
    %v3444 = vmul.f32 %v3439, %v3443
    %vm3445 = vweird.f32 %v3377
    %vm3446 = vweird.f32 %v3439
    %vm3447 = vmor %vm3445, %vm3446
    %v3448 = vsel %vm3447, %v3439, %v3444
    %v3449 = vrsqrt.pop %v3378
    %v3450 = vmul.f32 %v3449, %v3378
    %v3451 = vmul.f32 %v3450, %v3449
    %v3452 = vmul.f32 0.5, %v3451
    %v3453 = vsub.f32 1.5, %v3452
    %v3454 = vmul.f32 %v3449, %v3453
    %vm3455 = vweird.f32 %v3378
    %vm3456 = vweird.f32 %v3449
    %vm3457 = vmor %vm3455, %vm3456
    %v3458 = vsel %vm3457, %v3449, %v3454
    %v3459 = vmul.f32 %v3363, %v3388
    %v3460 = vmul.f32 %v3364, %v3398
    %v3461 = vmul.f32 %v3365, %v3408
    %v3462 = vmul.f32 %v3366, %v3418
    %v3463 = vmul.f32 %v3367, %v3428
    %v3464 = vmul.f32 %v3368, %v3438
    %v3465 = vmul.f32 %v3369, %v3448
    %v3466 = vmul.f32 %v3370, %v3458
    %v3467 = vld [vmem:[%s14] sm:$0xff]
    %v3469 = vperm.slane %v3467, 0
    %v3470 = vperm.slane %v3467, 1
    %v3471 = vperm.slane %v3467, 2
    %v3472 = vperm.slane %v3467, 3
    %v3473 = vperm.slane %v3467, 4
    %v3474 = vperm.slane %v3467, 5
    %v3475 = vperm.slane %v3467, 6
    %v3476 = vperm.slane %v3467, 7
    %v3485 = vmul.f32 %v3459, %v3469
    %v3486 = vmul.f32 %v3460, %v3470
    %v3487 = vmul.f32 %v3461, %v3471
    %v3488 = vmul.f32 %v3462, %v3472
    %v3489 = vmul.f32 %v3463, %v3473
    %v3490 = vmul.f32 %v3464, %v3474
    %v3491 = vmul.f32 %v3465, %v3475
    %v3492 = vmul.f32 %v3466, %v3476
    %v3493 = vld [vmem:[#allocation19] sm:$0xff]
    %v3495 = vperm.slane %v3493, 0
    %v3496 = vperm.slane %v3493, 1
    %v3497 = vperm.slane %v3493, 2
    %v3498 = vperm.slane %v3493, 3
    %v3499 = vperm.slane %v3493, 4
    %v3500 = vperm.slane %v3493, 5
    %v3501 = vperm.slane %v3493, 6
    %v3502 = vperm.slane %v3493, 7
    %v3511 = vadd.f32 %v3485, %v3495
    %v3512 = vadd.f32 %v3486, %v3496
    %v3513 = vadd.f32 %v3487, %v3497
    %v3514 = vadd.f32 %v3488, %v3498
    %v3515 = vadd.f32 %v3489, %v3499
    %v3516 = vadd.f32 %v3490, %v3500
    %v3517 = vadd.f32 %v3491, %v3501
    %v3518 = vadd.f32 %v3492, %v3502
    %vm3519 = vcmp.gt.f32.partialorder %v3511, 0.0
    %vm3520 = vcmp.gt.f32.partialorder %v3512, 0.0
    %vm3521 = vcmp.gt.f32.partialorder %v3513, 0.0
    %vm3522 = vcmp.gt.f32.partialorder %v3514, 0.0
    %vm3523 = vcmp.gt.f32.partialorder %v3515, 0.0
    %vm3524 = vcmp.gt.f32.partialorder %v3516, 0.0
    %vm3525 = vcmp.gt.f32.partialorder %v3517, 0.0
    %vm3526 = vcmp.gt.f32.partialorder %v3518, 0.0
    %v3527 = vmul.f32 %v3511, 0.2
    %v3528 = vmul.f32 %v3512, 0.2
    %v3529 = vmul.f32 %v3513, 0.2
    %v3530 = vmul.f32 %v3514, 0.2
    %v3531 = vmul.f32 %v3515, 0.2
    %v3532 = vmul.f32 %v3516, 0.2
    %v3533 = vmul.f32 %v3517, 0.2
    %v3534 = vmul.f32 %v3518, 0.2
    %v3535 = vsel %vm3519, %v3511, %v3527
    %v3536 = vsel %vm3520, %v3512, %v3528
    %v3537 = vsel %vm3521, %v3513, %v3529
    %v3538 = vsel %vm3522, %v3514, %v3530
    %v3539 = vsel %vm3523, %v3515, %v3531
    %v3540 = vsel %vm3524, %v3516, %v3532
    %v3541 = vsel %vm3525, %v3517, %v3533
    %v3542 = vsel %vm3526, %v3518, %v3534
    %v3543 = vpack.c.bf16 %v3535, %v3535
    %v3544 = vpack.c.bf16 %v3536, %v3536
    %v3545 = vpack.c.bf16 %v3537, %v3537
    %v3546 = vpack.c.bf16 %v3538, %v3538
    %v3547 = vpack.c.bf16 %v3539, %v3539
    %v3548 = vpack.c.bf16 %v3540, %v3540
    %v3549 = vpack.c.bf16 %v3541, %v3541
    %v3550 = vpack.c.bf16 %v3542, %v3542
    %v3551 = vld [vmem:[#allocation21] sm:$0xff]
    %v3552 = vld [vmem:[#allocation21 + $0x8] sm:$0xff]
    %v3553 = vld [vmem:[#allocation21 + $0x10] sm:$0xff]
    %v3554 = vld [vmem:[#allocation21 + $0x18] sm:$0xff]
    %v3555 = vld [vmem:[#allocation21 + $0x20] sm:$0xff]
    %v3556 = vld [vmem:[#allocation21 + $0x28] sm:$0xff]
    %v3557 = vld [vmem:[#allocation21 + $0x30] sm:$0xff]
    %v3558 = vld [vmem:[#allocation21 + $0x38] sm:$0xff]
    %v3559 = vld [vmem:[#allocation21 + $0x40] sm:$0xff]
    %v3560 = vld [vmem:[#allocation21 + $0x48] sm:$0xff]
    %v3561 = vld [vmem:[#allocation21 + $0x50] sm:$0xff]
    %v3562 = vld [vmem:[#allocation21 + $0x58] sm:$0xff]
    %v3563 = vld [vmem:[#allocation21 + $0x60] sm:$0xff]
    %v3564 = vld [vmem:[#allocation21 + $0x68] sm:$0xff]
    %v3565 = vld [vmem:[#allocation21 + $0x70] sm:$0xff]
    %v3566 = vld [vmem:[#allocation21 + $0x78] sm:$0xff]
    %v3567 = vld [vmem:[#allocation21 + $0x80] sm:$0xff]
    %v3568 = vld [vmem:[#allocation21 + $0x88] sm:$0xff]
    %v3569 = vld [vmem:[#allocation21 + $0x90] sm:$0xff]
    %v3570 = vld [vmem:[#allocation21 + $0x98] sm:$0xff]
    %v3571 = vld [vmem:[#allocation21 + $0xa0] sm:$0xff]
    %v3572 = vld [vmem:[#allocation21 + $0xa8] sm:$0xff]
    %v3573 = vld [vmem:[#allocation21 + $0xb0] sm:$0xff]
    %v3574 = vld [vmem:[#allocation21 + $0xb8] sm:$0xff]
    %v3575 = vld [vmem:[#allocation21 + $0xc0] sm:$0xff]
    %v3576 = vld [vmem:[#allocation21 + $0xc8] sm:$0xff]
    %v3577 = vld [vmem:[#allocation21 + $0xd0] sm:$0xff]
    %v3578 = vld [vmem:[#allocation21 + $0xd8] sm:$0xff]
    %v3579 = vld [vmem:[#allocation21 + $0xe0] sm:$0xff]
    %v3580 = vld [vmem:[#allocation21 + $0xe8] sm:$0xff]
    %v3581 = vld [vmem:[#allocation21 + $0xf0] sm:$0xff]
    %v3582 = vld [vmem:[#allocation21 + $0xf8] sm:$0xff]
    %v3583 = vld [vmem:[#allocation21 + $0x100] sm:$0xff]
    %v3584 = vld [vmem:[#allocation21 + $0x108] sm:$0xff]
    %v3585 = vld [vmem:[#allocation21 + $0x110] sm:$0xff]
    %v3586 = vld [vmem:[#allocation21 + $0x118] sm:$0xff]
    %v3587 = vld [vmem:[#allocation21 + $0x120] sm:$0xff]
    %v3588 = vld [vmem:[#allocation21 + $0x128] sm:$0xff]
    %v3589 = vld [vmem:[#allocation21 + $0x130] sm:$0xff]
    %v3590 = vld [vmem:[#allocation21 + $0x138] sm:$0xff]
    %v3591 = vld [vmem:[#allocation21 + $0x140] sm:$0xff]
    %v3592 = vld [vmem:[#allocation21 + $0x148] sm:$0xff]
    %v3593 = vld [vmem:[#allocation21 + $0x150] sm:$0xff]
    %v3594 = vld [vmem:[#allocation21 + $0x158] sm:$0xff]
    %v3595 = vld [vmem:[#allocation21 + $0x160] sm:$0xff]
    %v3596 = vld [vmem:[#allocation21 + $0x168] sm:$0xff]
    %v3597 = vld [vmem:[#allocation21 + $0x170] sm:$0xff]
    %v3598 = vld [vmem:[#allocation21 + $0x178] sm:$0xff]
    %v3599 = vld [vmem:[#allocation21 + $0x180] sm:$0xff]
    %v3600 = vld [vmem:[#allocation21 + $0x188] sm:$0xff]
    %v3601 = vld [vmem:[#allocation21 + $0x190] sm:$0xff]
    %v3602 = vld [vmem:[#allocation21 + $0x198] sm:$0xff]
    %v3603 = vld [vmem:[#allocation21 + $0x1a0] sm:$0xff]
    %v3604 = vld [vmem:[#allocation21 + $0x1a8] sm:$0xff]
    %v3605 = vld [vmem:[#allocation21 + $0x1b0] sm:$0xff]
    %v3606 = vld [vmem:[#allocation21 + $0x1b8] sm:$0xff]
    %v3607 = vld [vmem:[#allocation21 + $0x1c0] sm:$0xff]
    %v3608 = vld [vmem:[#allocation21 + $0x1c8] sm:$0xff]
    %v3609 = vld [vmem:[#allocation21 + $0x1d0] sm:$0xff]
    %v3610 = vld [vmem:[#allocation21 + $0x1d8] sm:$0xff]
    %v3611 = vld [vmem:[#allocation21 + $0x1e0] sm:$0xff]
    %v3612 = vld [vmem:[#allocation21 + $0x1e8] sm:$0xff]
    %v3613 = vld [vmem:[#allocation21 + $0x1f0] sm:$0xff]
    %v3614 = vld [vmem:[#allocation21 + $0x1f8] sm:$0xff]
    %v3615 = vld [vmem:[#allocation21 + $0x200] sm:$0xff]
    %v3616 = vld [vmem:[#allocation21 + $0x208] sm:$0xff]
    %v3617 = vld [vmem:[#allocation21 + $0x210] sm:$0xff]
    %v3618 = vld [vmem:[#allocation21 + $0x218] sm:$0xff]
    %v3619 = vld [vmem:[#allocation21 + $0x220] sm:$0xff]
    %v3620 = vld [vmem:[#allocation21 + $0x228] sm:$0xff]
    %v3621 = vld [vmem:[#allocation21 + $0x230] sm:$0xff]
    %v3622 = vld [vmem:[#allocation21 + $0x238] sm:$0xff]
    %v3623 = vld [vmem:[#allocation21 + $0x240] sm:$0xff]
    %v3624 = vld [vmem:[#allocation21 + $0x248] sm:$0xff]
    %v3625 = vld [vmem:[#allocation21 + $0x250] sm:$0xff]
    %v3626 = vld [vmem:[#allocation21 + $0x258] sm:$0xff]
    %v3627 = vld [vmem:[#allocation21 + $0x260] sm:$0xff]
    %v3628 = vld [vmem:[#allocation21 + $0x268] sm:$0xff]
    %v3629 = vld [vmem:[#allocation21 + $0x270] sm:$0xff]
    %v3630 = vld [vmem:[#allocation21 + $0x278] sm:$0xff]
    %v3631 = vld [vmem:[#allocation21 + $0x280] sm:$0xff]
    %v3632 = vld [vmem:[#allocation21 + $0x288] sm:$0xff]
    %v3633 = vld [vmem:[#allocation21 + $0x290] sm:$0xff]
    %v3634 = vld [vmem:[#allocation21 + $0x298] sm:$0xff]
    %v3635 = vld [vmem:[#allocation21 + $0x2a0] sm:$0xff]
    %v3636 = vld [vmem:[#allocation21 + $0x2a8] sm:$0xff]
    %v3637 = vld [vmem:[#allocation21 + $0x2b0] sm:$0xff]
    %v3638 = vld [vmem:[#allocation21 + $0x2b8] sm:$0xff]
    %v3639 = vld [vmem:[#allocation21 + $0x2c0] sm:$0xff]
    %v3640 = vld [vmem:[#allocation21 + $0x2c8] sm:$0xff]
    %v3641 = vld [vmem:[#allocation21 + $0x2d0] sm:$0xff]
    %v3642 = vld [vmem:[#allocation21 + $0x2d8] sm:$0xff]
    %v3643 = vld [vmem:[#allocation21 + $0x2e0] sm:$0xff]
    %v3644 = vld [vmem:[#allocation21 + $0x2e8] sm:$0xff]
    %v3645 = vld [vmem:[#allocation21 + $0x2f0] sm:$0xff]
    %v3646 = vld [vmem:[#allocation21 + $0x2f8] sm:$0xff]
    %v3647 = vld [vmem:[#allocation21 + $0x300] sm:$0xff]
    %v3648 = vld [vmem:[#allocation21 + $0x308] sm:$0xff]
    %v3649 = vld [vmem:[#allocation21 + $0x310] sm:$0xff]
    %v3650 = vld [vmem:[#allocation21 + $0x318] sm:$0xff]
    %v3651 = vld [vmem:[#allocation21 + $0x320] sm:$0xff]
    %v3652 = vld [vmem:[#allocation21 + $0x328] sm:$0xff]
    %v3653 = vld [vmem:[#allocation21 + $0x330] sm:$0xff]
    %v3654 = vld [vmem:[#allocation21 + $0x338] sm:$0xff]
    %v3655 = vld [vmem:[#allocation21 + $0x340] sm:$0xff]
    %v3656 = vld [vmem:[#allocation21 + $0x348] sm:$0xff]
    %v3657 = vld [vmem:[#allocation21 + $0x350] sm:$0xff]
    %v3658 = vld [vmem:[#allocation21 + $0x358] sm:$0xff]
    %v3659 = vld [vmem:[#allocation21 + $0x360] sm:$0xff]
    %v3660 = vld [vmem:[#allocation21 + $0x368] sm:$0xff]
    %v3661 = vld [vmem:[#allocation21 + $0x370] sm:$0xff]
    %v3662 = vld [vmem:[#allocation21 + $0x378] sm:$0xff]
    %v3663 = vld [vmem:[#allocation21 + $0x380] sm:$0xff]
    %v3664 = vld [vmem:[#allocation21 + $0x388] sm:$0xff]
    %v3665 = vld [vmem:[#allocation21 + $0x390] sm:$0xff]
    %v3666 = vld [vmem:[#allocation21 + $0x398] sm:$0xff]
    %v3667 = vld [vmem:[#allocation21 + $0x3a0] sm:$0xff]
    %v3668 = vld [vmem:[#allocation21 + $0x3a8] sm:$0xff]
    %v3669 = vld [vmem:[#allocation21 + $0x3b0] sm:$0xff]
    %v3670 = vld [vmem:[#allocation21 + $0x3b8] sm:$0xff]
    %v3671 = vld [vmem:[#allocation21 + $0x3c0] sm:$0xff]
    %v3672 = vld [vmem:[#allocation21 + $0x3c8] sm:$0xff]
    %v3673 = vld [vmem:[#allocation21 + $0x3d0] sm:$0xff]
    %v3674 = vld [vmem:[#allocation21 + $0x3d8] sm:$0xff]
    %v3675 = vld [vmem:[#allocation21 + $0x3e0] sm:$0xff]
    %v3676 = vld [vmem:[#allocation21 + $0x3e8] sm:$0xff]
    %v3677 = vld [vmem:[#allocation21 + $0x3f0] sm:$0xff]
    %v3678 = vld [vmem:[#allocation21 + $0x3f8] sm:$0xff]
    %v3679 = vld [vmem:[#allocation22] sm:$0x3]
    %v3681 = vperm.slane %v3679, 0
    %v3682 = vperm.slane %v3679, 1
    %v3813 = vunpack.c.l.b16 %v3551
    %v3814 = vunpack.c.h.b16 %v3551
    %v3815 = vunpack.c.l.b16 %v3552
    %v3816 = vunpack.c.h.b16 %v3552
    %v3817 = vunpack.c.l.b16 %v3553
    %v3818 = vunpack.c.h.b16 %v3553
    %v3819 = vunpack.c.l.b16 %v3554
    %v3820 = vunpack.c.h.b16 %v3554
    %v3821 = vunpack.c.l.b16 %v3555
    %v3822 = vunpack.c.h.b16 %v3555
    %v3823 = vunpack.c.l.b16 %v3556
    %v3824 = vunpack.c.h.b16 %v3556
    %v3825 = vunpack.c.l.b16 %v3557
    %v3826 = vunpack.c.h.b16 %v3557
    %v3827 = vunpack.c.l.b16 %v3558
    %v3828 = vunpack.c.h.b16 %v3558
    %v3829 = vunpack.c.l.b16 %v3559
    %v3830 = vunpack.c.h.b16 %v3559
    %v3831 = vunpack.c.l.b16 %v3560
    %v3832 = vunpack.c.h.b16 %v3560
    %v3833 = vunpack.c.l.b16 %v3561
    %v3834 = vunpack.c.h.b16 %v3561
    %v3835 = vunpack.c.l.b16 %v3562
    %v3836 = vunpack.c.h.b16 %v3562
    %v3837 = vunpack.c.l.b16 %v3563
    %v3838 = vunpack.c.h.b16 %v3563
    %v3839 = vunpack.c.l.b16 %v3564
    %v3840 = vunpack.c.h.b16 %v3564
    %v3841 = vunpack.c.l.b16 %v3565
    %v3842 = vunpack.c.h.b16 %v3565
    %v3843 = vunpack.c.l.b16 %v3566
    %v3844 = vunpack.c.h.b16 %v3566
    %v3845 = vunpack.c.l.b16 %v3567
    %v3846 = vunpack.c.h.b16 %v3567
    %v3847 = vunpack.c.l.b16 %v3568
    %v3848 = vunpack.c.h.b16 %v3568
    %v3849 = vunpack.c.l.b16 %v3569
    %v3850 = vunpack.c.h.b16 %v3569
    %v3851 = vunpack.c.l.b16 %v3570
    %v3852 = vunpack.c.h.b16 %v3570
    %v3853 = vunpack.c.l.b16 %v3571
    %v3854 = vunpack.c.h.b16 %v3571
    %v3855 = vunpack.c.l.b16 %v3572
    %v3856 = vunpack.c.h.b16 %v3572
    %v3857 = vunpack.c.l.b16 %v3573
    %v3858 = vunpack.c.h.b16 %v3573
    %v3859 = vunpack.c.l.b16 %v3574
    %v3860 = vunpack.c.h.b16 %v3574
    %v3861 = vunpack.c.l.b16 %v3575
    %v3862 = vunpack.c.h.b16 %v3575
    %v3863 = vunpack.c.l.b16 %v3576
    %v3864 = vunpack.c.h.b16 %v3576
    %v3865 = vunpack.c.l.b16 %v3577
    %v3866 = vunpack.c.h.b16 %v3577
    %v3867 = vunpack.c.l.b16 %v3578
    %v3868 = vunpack.c.h.b16 %v3578
    %v3869 = vunpack.c.l.b16 %v3579
    %v3870 = vunpack.c.h.b16 %v3579
    %v3871 = vunpack.c.l.b16 %v3580
    %v3872 = vunpack.c.h.b16 %v3580
    %v3873 = vunpack.c.l.b16 %v3581
    %v3874 = vunpack.c.h.b16 %v3581
    %v3875 = vunpack.c.l.b16 %v3582
    %v3876 = vunpack.c.h.b16 %v3582
    %v3877 = vunpack.c.l.b16 %v3583
    %v3878 = vunpack.c.h.b16 %v3583
    %v3879 = vunpack.c.l.b16 %v3584
    %v3880 = vunpack.c.h.b16 %v3584
    %v3881 = vunpack.c.l.b16 %v3585
    %v3882 = vunpack.c.h.b16 %v3585
    %v3883 = vunpack.c.l.b16 %v3586
    %v3884 = vunpack.c.h.b16 %v3586
    %v3885 = vunpack.c.l.b16 %v3587
    %v3886 = vunpack.c.h.b16 %v3587
    %v3887 = vunpack.c.l.b16 %v3588
    %v3888 = vunpack.c.h.b16 %v3588
    %v3889 = vunpack.c.l.b16 %v3589
    %v3890 = vunpack.c.h.b16 %v3589
    %v3891 = vunpack.c.l.b16 %v3590
    %v3892 = vunpack.c.h.b16 %v3590
    %v3893 = vunpack.c.l.b16 %v3591
    %v3894 = vunpack.c.h.b16 %v3591
    %v3895 = vunpack.c.l.b16 %v3592
    %v3896 = vunpack.c.h.b16 %v3592
    %v3897 = vunpack.c.l.b16 %v3593
    %v3898 = vunpack.c.h.b16 %v3593
    %v3899 = vunpack.c.l.b16 %v3594
    %v3900 = vunpack.c.h.b16 %v3594
    %v3901 = vunpack.c.l.b16 %v3595
    %v3902 = vunpack.c.h.b16 %v3595
    %v3903 = vunpack.c.l.b16 %v3596
    %v3904 = vunpack.c.h.b16 %v3596
    %v3905 = vunpack.c.l.b16 %v3597
    %v3906 = vunpack.c.h.b16 %v3597
    %v3907 = vunpack.c.l.b16 %v3598
    %v3908 = vunpack.c.h.b16 %v3598
    %v3909 = vunpack.c.l.b16 %v3599
    %v3910 = vunpack.c.h.b16 %v3599
    %v3911 = vunpack.c.l.b16 %v3600
    %v3912 = vunpack.c.h.b16 %v3600
    %v3913 = vunpack.c.l.b16 %v3601
    %v3914 = vunpack.c.h.b16 %v3601
    %v3915 = vunpack.c.l.b16 %v3602
    %v3916 = vunpack.c.h.b16 %v3602
    %v3917 = vunpack.c.l.b16 %v3603
    %v3918 = vunpack.c.h.b16 %v3603
    %v3919 = vunpack.c.l.b16 %v3604
    %v3920 = vunpack.c.h.b16 %v3604
    %v3921 = vunpack.c.l.b16 %v3605
    %v3922 = vunpack.c.h.b16 %v3605
    %v3923 = vunpack.c.l.b16 %v3606
    %v3924 = vunpack.c.h.b16 %v3606
    %v3925 = vunpack.c.l.b16 %v3607
    %v3926 = vunpack.c.h.b16 %v3607
    %v3927 = vunpack.c.l.b16 %v3608
    %v3928 = vunpack.c.h.b16 %v3608
    %v3929 = vunpack.c.l.b16 %v3609
    %v3930 = vunpack.c.h.b16 %v3609
    %v3931 = vunpack.c.l.b16 %v3610
    %v3932 = vunpack.c.h.b16 %v3610
    %v3933 = vunpack.c.l.b16 %v3611
    %v3934 = vunpack.c.h.b16 %v3611
    %v3935 = vunpack.c.l.b16 %v3612
    %v3936 = vunpack.c.h.b16 %v3612
    %v3937 = vunpack.c.l.b16 %v3613
    %v3938 = vunpack.c.h.b16 %v3613
    %v3939 = vunpack.c.l.b16 %v3614
    %v3940 = vunpack.c.h.b16 %v3614
    %v3941 = vunpack.c.l.b16 %v3615
    %v3942 = vunpack.c.h.b16 %v3615
    %v3943 = vunpack.c.l.b16 %v3616
    %v3944 = vunpack.c.h.b16 %v3616
    %v3945 = vunpack.c.l.b16 %v3617
    %v3946 = vunpack.c.h.b16 %v3617
    %v3947 = vunpack.c.l.b16 %v3618
    %v3948 = vunpack.c.h.b16 %v3618
    %v3949 = vunpack.c.l.b16 %v3619
    %v3950 = vunpack.c.h.b16 %v3619
    %v3951 = vunpack.c.l.b16 %v3620
    %v3952 = vunpack.c.h.b16 %v3620
    %v3953 = vunpack.c.l.b16 %v3621
    %v3954 = vunpack.c.h.b16 %v3621
    %v3955 = vunpack.c.l.b16 %v3622
    %v3956 = vunpack.c.h.b16 %v3622
    %v3957 = vunpack.c.l.b16 %v3623
    %v3958 = vunpack.c.h.b16 %v3623
    %v3959 = vunpack.c.l.b16 %v3624
    %v3960 = vunpack.c.h.b16 %v3624
    %v3961 = vunpack.c.l.b16 %v3625
    %v3962 = vunpack.c.h.b16 %v3625
    %v3963 = vunpack.c.l.b16 %v3626
    %v3964 = vunpack.c.h.b16 %v3626
    %v3965 = vunpack.c.l.b16 %v3627
    %v3966 = vunpack.c.h.b16 %v3627
    %v3967 = vunpack.c.l.b16 %v3628
    %v3968 = vunpack.c.h.b16 %v3628
    %v3969 = vunpack.c.l.b16 %v3629
    %v3970 = vunpack.c.h.b16 %v3629
    %v3971 = vunpack.c.l.b16 %v3630
    %v3972 = vunpack.c.h.b16 %v3630
    %v3973 = vunpack.c.l.b16 %v3631
    %v3974 = vunpack.c.h.b16 %v3631
    %v3975 = vunpack.c.l.b16 %v3632
    %v3976 = vunpack.c.h.b16 %v3632
    %v3977 = vunpack.c.l.b16 %v3633
    %v3978 = vunpack.c.h.b16 %v3633
    %v3979 = vunpack.c.l.b16 %v3634
    %v3980 = vunpack.c.h.b16 %v3634
    %v3981 = vunpack.c.l.b16 %v3635
    %v3982 = vunpack.c.h.b16 %v3635
    %v3983 = vunpack.c.l.b16 %v3636
    %v3984 = vunpack.c.h.b16 %v3636
    %v3985 = vunpack.c.l.b16 %v3637
    %v3986 = vunpack.c.h.b16 %v3637
    %v3987 = vunpack.c.l.b16 %v3638
    %v3988 = vunpack.c.h.b16 %v3638
    %v3989 = vunpack.c.l.b16 %v3639
    %v3990 = vunpack.c.h.b16 %v3639
    %v3991 = vunpack.c.l.b16 %v3640
    %v3992 = vunpack.c.h.b16 %v3640
    %v3993 = vunpack.c.l.b16 %v3641
    %v3994 = vunpack.c.h.b16 %v3641
    %v3995 = vunpack.c.l.b16 %v3642
    %v3996 = vunpack.c.h.b16 %v3642
    %v3997 = vunpack.c.l.b16 %v3643
    %v3998 = vunpack.c.h.b16 %v3643
    %v3999 = vunpack.c.l.b16 %v3644
    %v4000 = vunpack.c.h.b16 %v3644
    %v4001 = vunpack.c.l.b16 %v3645
    %v4002 = vunpack.c.h.b16 %v3645
    %v4003 = vunpack.c.l.b16 %v3646
    %v4004 = vunpack.c.h.b16 %v3646
    %v4005 = vunpack.c.l.b16 %v3647
    %v4006 = vunpack.c.h.b16 %v3647
    %v4007 = vunpack.c.l.b16 %v3648
    %v4008 = vunpack.c.h.b16 %v3648
    %v4009 = vunpack.c.l.b16 %v3649
    %v4010 = vunpack.c.h.b16 %v3649
    %v4011 = vunpack.c.l.b16 %v3650
    %v4012 = vunpack.c.h.b16 %v3650
    %v4013 = vunpack.c.l.b16 %v3651
    %v4014 = vunpack.c.h.b16 %v3651
    %v4015 = vunpack.c.l.b16 %v3652
    %v4016 = vunpack.c.h.b16 %v3652
    %v4017 = vunpack.c.l.b16 %v3653
    %v4018 = vunpack.c.h.b16 %v3653
    %v4019 = vunpack.c.l.b16 %v3654
    %v4020 = vunpack.c.h.b16 %v3654
    %v4021 = vunpack.c.l.b16 %v3655
    %v4022 = vunpack.c.h.b16 %v3655
    %v4023 = vunpack.c.l.b16 %v3656
    %v4024 = vunpack.c.h.b16 %v3656
    %v4025 = vunpack.c.l.b16 %v3657
    %v4026 = vunpack.c.h.b16 %v3657
    %v4027 = vunpack.c.l.b16 %v3658
    %v4028 = vunpack.c.h.b16 %v3658
    %v4029 = vunpack.c.l.b16 %v3659
    %v4030 = vunpack.c.h.b16 %v3659
    %v4031 = vunpack.c.l.b16 %v3660
    %v4032 = vunpack.c.h.b16 %v3660
    %v4033 = vunpack.c.l.b16 %v3661
    %v4034 = vunpack.c.h.b16 %v3661
    %v4035 = vunpack.c.l.b16 %v3662
    %v4036 = vunpack.c.h.b16 %v3662
    %v4037 = vunpack.c.l.b16 %v3663
    %v4038 = vunpack.c.h.b16 %v3663
    %v4039 = vunpack.c.l.b16 %v3664
    %v4040 = vunpack.c.h.b16 %v3664
    %v4041 = vunpack.c.l.b16 %v3665
    %v4042 = vunpack.c.h.b16 %v3665
    %v4043 = vunpack.c.l.b16 %v3666
    %v4044 = vunpack.c.h.b16 %v3666
    %v4045 = vunpack.c.l.b16 %v3667
    %v4046 = vunpack.c.h.b16 %v3667
    %v4047 = vunpack.c.l.b16 %v3668
    %v4048 = vunpack.c.h.b16 %v3668
    %v4049 = vunpack.c.l.b16 %v3669
    %v4050 = vunpack.c.h.b16 %v3669
    %v4051 = vunpack.c.l.b16 %v3670
    %v4052 = vunpack.c.h.b16 %v3670
    %v4053 = vunpack.c.l.b16 %v3671
    %v4054 = vunpack.c.h.b16 %v3671
    %v4055 = vunpack.c.l.b16 %v3672
    %v4056 = vunpack.c.h.b16 %v3672
    %v4057 = vunpack.c.l.b16 %v3673
    %v4058 = vunpack.c.h.b16 %v3673
    %v4059 = vunpack.c.l.b16 %v3674
    %v4060 = vunpack.c.h.b16 %v3674
    %v4061 = vunpack.c.l.b16 %v3675
    %v4062 = vunpack.c.h.b16 %v3675
    %v4063 = vunpack.c.l.b16 %v3676
    %v4064 = vunpack.c.h.b16 %v3676
    %v4065 = vunpack.c.l.b16 %v3677
    %v4066 = vunpack.c.h.b16 %v3677
    %v4067 = vunpack.c.l.b16 %v3678
    %v4068 = vunpack.c.h.b16 %v3678
    %v4069 = vpack.c.b16 %v3815, %v3813
    %v4070 = vpack.c.b16 %v3816, %v3814
    %v4071 = vpack.c.b16 %v3819, %v3817
    %v4072 = vpack.c.b16 %v3820, %v3818
    %v4073 = vpack.c.b16 %v3823, %v3821
    %v4074 = vpack.c.b16 %v3824, %v3822
    %v4075 = vpack.c.b16 %v3827, %v3825
    %v4076 = vpack.c.b16 %v3828, %v3826
    %v4077 = vpack.c.b16 %v3831, %v3829
    %v4078 = vpack.c.b16 %v3832, %v3830
    %v4079 = vpack.c.b16 %v3835, %v3833
    %v4080 = vpack.c.b16 %v3836, %v3834
    %v4081 = vpack.c.b16 %v3839, %v3837
    %v4082 = vpack.c.b16 %v3840, %v3838
    %v4083 = vpack.c.b16 %v3843, %v3841
    %v4084 = vpack.c.b16 %v3844, %v3842
    %v4085 = vpack.c.b16 %v3847, %v3845
    %v4086 = vpack.c.b16 %v3848, %v3846
    %v4087 = vpack.c.b16 %v3851, %v3849
    %v4088 = vpack.c.b16 %v3852, %v3850
    %v4089 = vpack.c.b16 %v3855, %v3853
    %v4090 = vpack.c.b16 %v3856, %v3854
    %v4091 = vpack.c.b16 %v3859, %v3857
    %v4092 = vpack.c.b16 %v3860, %v3858
    %v4093 = vpack.c.b16 %v3863, %v3861
    %v4094 = vpack.c.b16 %v3864, %v3862
    %v4095 = vpack.c.b16 %v3867, %v3865
    %v4096 = vpack.c.b16 %v3868, %v3866
    %v4097 = vpack.c.b16 %v3871, %v3869
    %v4098 = vpack.c.b16 %v3872, %v3870
    %v4099 = vpack.c.b16 %v3875, %v3873
    %v4100 = vpack.c.b16 %v3876, %v3874
    %v4101 = vpack.c.b16 %v3879, %v3877
    %v4102 = vpack.c.b16 %v3880, %v3878
    %v4103 = vpack.c.b16 %v3883, %v3881
    %v4104 = vpack.c.b16 %v3884, %v3882
    %v4105 = vpack.c.b16 %v3887, %v3885
    %v4106 = vpack.c.b16 %v3888, %v3886
    %v4107 = vpack.c.b16 %v3891, %v3889
    %v4108 = vpack.c.b16 %v3892, %v3890
    %v4109 = vpack.c.b16 %v3895, %v3893
    %v4110 = vpack.c.b16 %v3896, %v3894
    %v4111 = vpack.c.b16 %v3899, %v3897
    %v4112 = vpack.c.b16 %v3900, %v3898
    %v4113 = vpack.c.b16 %v3903, %v3901
    %v4114 = vpack.c.b16 %v3904, %v3902
    %v4115 = vpack.c.b16 %v3907, %v3905
    %v4116 = vpack.c.b16 %v3908, %v3906
    %v4117 = vpack.c.b16 %v3911, %v3909
    %v4118 = vpack.c.b16 %v3912, %v3910
    %v4119 = vpack.c.b16 %v3915, %v3913
    %v4120 = vpack.c.b16 %v3916, %v3914
    %v4121 = vpack.c.b16 %v3919, %v3917
    %v4122 = vpack.c.b16 %v3920, %v3918
    %v4123 = vpack.c.b16 %v3923, %v3921
    %v4124 = vpack.c.b16 %v3924, %v3922
    %v4125 = vpack.c.b16 %v3927, %v3925
    %v4126 = vpack.c.b16 %v3928, %v3926
    %v4127 = vpack.c.b16 %v3931, %v3929
    %v4128 = vpack.c.b16 %v3932, %v3930
    %v4129 = vpack.c.b16 %v3935, %v3933
    %v4130 = vpack.c.b16 %v3936, %v3934
    %v4131 = vpack.c.b16 %v3939, %v3937
    %v4132 = vpack.c.b16 %v3940, %v3938
    %v4133 = vpack.c.b16 %v3943, %v3941
    %v4134 = vpack.c.b16 %v3944, %v3942
    %v4135 = vpack.c.b16 %v3947, %v3945
    %v4136 = vpack.c.b16 %v3948, %v3946
    %v4137 = vpack.c.b16 %v3951, %v3949
    %v4138 = vpack.c.b16 %v3952, %v3950
    %v4139 = vpack.c.b16 %v3955, %v3953
    %v4140 = vpack.c.b16 %v3956, %v3954
    %v4141 = vpack.c.b16 %v3959, %v3957
    %v4142 = vpack.c.b16 %v3960, %v3958
    %v4143 = vpack.c.b16 %v3963, %v3961
    %v4144 = vpack.c.b16 %v3964, %v3962
    %v4145 = vpack.c.b16 %v3967, %v3965
    %v4146 = vpack.c.b16 %v3968, %v3966
    %v4147 = vpack.c.b16 %v3971, %v3969
    %v4148 = vpack.c.b16 %v3972, %v3970
    %v4149 = vpack.c.b16 %v3975, %v3973
    %v4150 = vpack.c.b16 %v3976, %v3974
    %v4151 = vpack.c.b16 %v3979, %v3977
    %v4152 = vpack.c.b16 %v3980, %v3978
    %v4153 = vpack.c.b16 %v3983, %v3981
    %v4154 = vpack.c.b16 %v3984, %v3982
    %v4155 = vpack.c.b16 %v3987, %v3985
    %v4156 = vpack.c.b16 %v3988, %v3986
    %v4157 = vpack.c.b16 %v3991, %v3989
    %v4158 = vpack.c.b16 %v3992, %v3990
    %v4159 = vpack.c.b16 %v3995, %v3993
    %v4160 = vpack.c.b16 %v3996, %v3994
    %v4161 = vpack.c.b16 %v3999, %v3997
    %v4162 = vpack.c.b16 %v4000, %v3998
    %v4163 = vpack.c.b16 %v4003, %v4001
    %v4164 = vpack.c.b16 %v4004, %v4002
    %v4165 = vpack.c.b16 %v4007, %v4005
    %v4166 = vpack.c.b16 %v4008, %v4006
    %v4167 = vpack.c.b16 %v4011, %v4009
    %v4168 = vpack.c.b16 %v4012, %v4010
    %v4169 = vpack.c.b16 %v4015, %v4013
    %v4170 = vpack.c.b16 %v4016, %v4014
    %v4171 = vpack.c.b16 %v4019, %v4017
    %v4172 = vpack.c.b16 %v4020, %v4018
    %v4173 = vpack.c.b16 %v4023, %v4021
    %v4174 = vpack.c.b16 %v4024, %v4022
    %v4175 = vpack.c.b16 %v4027, %v4025
    %v4176 = vpack.c.b16 %v4028, %v4026
    %v4177 = vpack.c.b16 %v4031, %v4029
    %v4178 = vpack.c.b16 %v4032, %v4030
    %v4179 = vpack.c.b16 %v4035, %v4033
    %v4180 = vpack.c.b16 %v4036, %v4034
    %v4181 = vpack.c.b16 %v4039, %v4037
    %v4182 = vpack.c.b16 %v4040, %v4038
    %v4183 = vpack.c.b16 %v4043, %v4041
    %v4184 = vpack.c.b16 %v4044, %v4042
    %v4185 = vpack.c.b16 %v4047, %v4045
    %v4186 = vpack.c.b16 %v4048, %v4046
    %v4187 = vpack.c.b16 %v4051, %v4049
    %v4188 = vpack.c.b16 %v4052, %v4050
    %v4189 = vpack.c.b16 %v4055, %v4053
    %v4190 = vpack.c.b16 %v4056, %v4054
    %v4191 = vpack.c.b16 %v4059, %v4057
    %v4192 = vpack.c.b16 %v4060, %v4058
    %v4193 = vpack.c.b16 %v4063, %v4061
    %v4194 = vpack.c.b16 %v4064, %v4062
    %v4195 = vpack.c.b16 %v4067, %v4065
    %v4196 = vpack.c.b16 %v4068, %v4066
    %4325 = vmatpush.bf16.msra.mxu0 %v4083
    %4326 = vmatpush.bf16.msra.mxu0 %v4081
    %4327 = vmatpush.bf16.msra.mxu0 %v4079
    %4328 = vmatpush.bf16.msra.mxu0 %v4077
    %4329 = vmatpush.bf16.msra.mxu0 %v4075
    %4330 = vmatpush.bf16.msra.mxu0 %v4073
    %4331 = vmatpush.bf16.msra.mxu0 %v4071
    %4332 = vmatpush.bf16.msra.mxu0 %v4069
    %4333 = vmatmul.bf16.gmra.mxu0 %v3543
    %v4334 = vpop.f32.mrf.mxu0
    %v4335 = vadd.f32 %v3681, %v4334
    %v4336 = vpop.f32.mrf.mxu0
    %4337 = vdwg.mxu0
    %4338 = vmatpush.bf16.msra.mxu0 %v4099
    %4339 = vmatpush.bf16.msra.mxu0 %v4097
    %4340 = vmatpush.bf16.msra.mxu0 %v4095
    %4341 = vmatpush.bf16.msra.mxu0 %v4093
    %4342 = vmatpush.bf16.msra.mxu0 %v4091
    %4343 = vmatpush.bf16.msra.mxu0 %v4089
    %4344 = vmatpush.bf16.msra.mxu0 %v4087
    %4345 = vmatpush.bf16.msra.mxu0 %v4085
    %4346 = vmatmul.bf16.gmra.mxu0 %v3544
    %v4347 = vpop.f32.mrf.mxu0
    %v4348 = vadd.f32 %v4335, %v4347
    %v4349 = vpop.f32.mrf.mxu0
    %4350 = vdwg.mxu0
    %4351 = vmatpush.bf16.msra.mxu0 %v4115
    %4352 = vmatpush.bf16.msra.mxu0 %v4113
    %4353 = vmatpush.bf16.msra.mxu0 %v4111
    %4354 = vmatpush.bf16.msra.mxu0 %v4109
    %4355 = vmatpush.bf16.msra.mxu0 %v4107
    %4356 = vmatpush.bf16.msra.mxu0 %v4105
    %4357 = vmatpush.bf16.msra.mxu0 %v4103
    %4358 = vmatpush.bf16.msra.mxu0 %v4101
    %4359 = vmatmul.bf16.gmra.mxu0 %v3545
    %v4360 = vpop.f32.mrf.mxu0
    %v4361 = vadd.f32 %v4348, %v4360
    %v4362 = vpop.f32.mrf.mxu0
    %4363 = vdwg.mxu0
    %4364 = vmatpush.bf16.msra.mxu0 %v4131
    %4365 = vmatpush.bf16.msra.mxu0 %v4129
    %4366 = vmatpush.bf16.msra.mxu0 %v4127
    %4367 = vmatpush.bf16.msra.mxu0 %v4125
    %4368 = vmatpush.bf16.msra.mxu0 %v4123
    %4369 = vmatpush.bf16.msra.mxu0 %v4121
    %4370 = vmatpush.bf16.msra.mxu0 %v4119
    %4371 = vmatpush.bf16.msra.mxu0 %v4117
    %4372 = vmatmul.bf16.gmra.mxu0 %v3546
    %v4373 = vpop.f32.mrf.mxu0
    %v4374 = vadd.f32 %v4361, %v4373
    %v4375 = vpop.f32.mrf.mxu0
    %4376 = vdwg.mxu0
    %4377 = vmatpush.bf16.msra.mxu0 %v4147
    %4378 = vmatpush.bf16.msra.mxu0 %v4145
    %4379 = vmatpush.bf16.msra.mxu0 %v4143
    %4380 = vmatpush.bf16.msra.mxu0 %v4141
    %4381 = vmatpush.bf16.msra.mxu0 %v4139
    %4382 = vmatpush.bf16.msra.mxu0 %v4137
    %4383 = vmatpush.bf16.msra.mxu0 %v4135
    %4384 = vmatpush.bf16.msra.mxu0 %v4133
    %4385 = vmatmul.bf16.gmra.mxu0 %v3547
    %v4386 = vpop.f32.mrf.mxu0
    %v4387 = vadd.f32 %v4374, %v4386
    %v4388 = vpop.f32.mrf.mxu0
    %4389 = vdwg.mxu0
    %4390 = vmatpush.bf16.msra.mxu0 %v4163
    %4391 = vmatpush.bf16.msra.mxu0 %v4161
    %4392 = vmatpush.bf16.msra.mxu0 %v4159
    %4393 = vmatpush.bf16.msra.mxu0 %v4157
    %4394 = vmatpush.bf16.msra.mxu0 %v4155
    %4395 = vmatpush.bf16.msra.mxu0 %v4153
    %4396 = vmatpush.bf16.msra.mxu0 %v4151
    %4397 = vmatpush.bf16.msra.mxu0 %v4149
    %4398 = vmatmul.bf16.gmra.mxu0 %v3548
    %v4399 = vpop.f32.mrf.mxu0
    %v4400 = vadd.f32 %v4387, %v4399
    %v4401 = vpop.f32.mrf.mxu0
    %4402 = vdwg.mxu0
    %4403 = vmatpush.bf16.msra.mxu0 %v4179
    %4404 = vmatpush.bf16.msra.mxu0 %v4177
    %4405 = vmatpush.bf16.msra.mxu0 %v4175
    %4406 = vmatpush.bf16.msra.mxu0 %v4173
    %4407 = vmatpush.bf16.msra.mxu0 %v4171
    %4408 = vmatpush.bf16.msra.mxu0 %v4169
    %4409 = vmatpush.bf16.msra.mxu0 %v4167
    %4410 = vmatpush.bf16.msra.mxu0 %v4165
    %4411 = vmatmul.bf16.gmra.mxu0 %v3549
    %v4412 = vpop.f32.mrf.mxu0
    %v4413 = vadd.f32 %v4400, %v4412
    %v4414 = vpop.f32.mrf.mxu0
    %4415 = vdwg.mxu0
    %4416 = vmatpush.bf16.msra.mxu0 %v4195
    %4417 = vmatpush.bf16.msra.mxu0 %v4193
    %4418 = vmatpush.bf16.msra.mxu0 %v4191
    %4419 = vmatpush.bf16.msra.mxu0 %v4189
    %4420 = vmatpush.bf16.msra.mxu0 %v4187
    %4421 = vmatpush.bf16.msra.mxu0 %v4185
    %4422 = vmatpush.bf16.msra.mxu0 %v4183
    %4423 = vmatpush.bf16.msra.mxu0 %v4181
    %4424 = vmatmul.bf16.gmra.mxu0 %v3550
    %v4425 = vpop.f32.mrf.mxu0
    %v4426 = vadd.f32 %v4413, %v4425
    %v4427 = vpop.f32.mrf.mxu0
    %4428 = vdwg.mxu0
    %4429 = vmatpush.bf16.msra.mxu0 %v4084
    %4430 = vmatpush.bf16.msra.mxu0 %v4082
    %4431 = vmatpush.bf16.msra.mxu0 %v4080
    %4432 = vmatpush.bf16.msra.mxu0 %v4078
    %4433 = vmatpush.bf16.msra.mxu0 %v4076
    %4434 = vmatpush.bf16.msra.mxu0 %v4074
    %4435 = vmatpush.bf16.msra.mxu0 %v4072
    %4436 = vmatpush.bf16.msra.mxu0 %v4070
    %4437 = vmatmul.bf16.gmra.mxu0 %v3543
    %v4438 = vpop.f32.mrf.mxu0
    %v4439 = vadd.f32 %v3682, %v4438
    %v4440 = vpop.f32.mrf.mxu0
    %4441 = vdwg.mxu0
    %4442 = vmatpush.bf16.msra.mxu0 %v4100
    %4443 = vmatpush.bf16.msra.mxu0 %v4098
    %4444 = vmatpush.bf16.msra.mxu0 %v4096
    %4445 = vmatpush.bf16.msra.mxu0 %v4094
    %4446 = vmatpush.bf16.msra.mxu0 %v4092
    %4447 = vmatpush.bf16.msra.mxu0 %v4090
    %4448 = vmatpush.bf16.msra.mxu0 %v4088
    %4449 = vmatpush.bf16.msra.mxu0 %v4086
    %4450 = vmatmul.bf16.gmra.mxu0 %v3544
    %v4451 = vpop.f32.mrf.mxu0
    %v4452 = vadd.f32 %v4439, %v4451
    %v4453 = vpop.f32.mrf.mxu0
    %4454 = vdwg.mxu0
    %4455 = vmatpush.bf16.msra.mxu0 %v4116
    %4456 = vmatpush.bf16.msra.mxu0 %v4114
    %4457 = vmatpush.bf16.msra.mxu0 %v4112
    %4458 = vmatpush.bf16.msra.mxu0 %v4110
    %4459 = vmatpush.bf16.msra.mxu0 %v4108
    %4460 = vmatpush.bf16.msra.mxu0 %v4106
    %4461 = vmatpush.bf16.msra.mxu0 %v4104
    %4462 = vmatpush.bf16.msra.mxu0 %v4102
    %4463 = vmatmul.bf16.gmra.mxu0 %v3545
    %v4464 = vpop.f32.mrf.mxu0
    %v4465 = vadd.f32 %v4452, %v4464
    %v4466 = vpop.f32.mrf.mxu0
    %4467 = vdwg.mxu0
    %4468 = vmatpush.bf16.msra.mxu0 %v4132
    %4469 = vmatpush.bf16.msra.mxu0 %v4130
    %4470 = vmatpush.bf16.msra.mxu0 %v4128
    %4471 = vmatpush.bf16.msra.mxu0 %v4126
    %4472 = vmatpush.bf16.msra.mxu0 %v4124
    %4473 = vmatpush.bf16.msra.mxu0 %v4122
    %4474 = vmatpush.bf16.msra.mxu0 %v4120
    %4475 = vmatpush.bf16.msra.mxu0 %v4118
    %4476 = vmatmul.bf16.gmra.mxu0 %v3546
    %v4477 = vpop.f32.mrf.mxu0
    %v4478 = vadd.f32 %v4465, %v4477
    %v4479 = vpop.f32.mrf.mxu0
    %4480 = vdwg.mxu0
    %4481 = vmatpush.bf16.msra.mxu0 %v4148
    %4482 = vmatpush.bf16.msra.mxu0 %v4146
    %4483 = vmatpush.bf16.msra.mxu0 %v4144
    %4484 = vmatpush.bf16.msra.mxu0 %v4142
    %4485 = vmatpush.bf16.msra.mxu0 %v4140
    %4486 = vmatpush.bf16.msra.mxu0 %v4138
    %4487 = vmatpush.bf16.msra.mxu0 %v4136
    %4488 = vmatpush.bf16.msra.mxu0 %v4134
    %4489 = vmatmul.bf16.gmra.mxu0 %v3547
    %v4490 = vpop.f32.mrf.mxu0
    %v4491 = vadd.f32 %v4478, %v4490
    %v4492 = vpop.f32.mrf.mxu0
    %4493 = vdwg.mxu0
    %4494 = vmatpush.bf16.msra.mxu0 %v4164
    %4495 = vmatpush.bf16.msra.mxu0 %v4162
    %4496 = vmatpush.bf16.msra.mxu0 %v4160
    %4497 = vmatpush.bf16.msra.mxu0 %v4158
    %4498 = vmatpush.bf16.msra.mxu0 %v4156
    %4499 = vmatpush.bf16.msra.mxu0 %v4154
    %4500 = vmatpush.bf16.msra.mxu0 %v4152
    %4501 = vmatpush.bf16.msra.mxu0 %v4150
    %4502 = vmatmul.bf16.gmra.mxu0 %v3548
    %v4503 = vpop.f32.mrf.mxu0
    %v4504 = vadd.f32 %v4491, %v4503
    %v4505 = vpop.f32.mrf.mxu0
    %4506 = vdwg.mxu0
    %4507 = vmatpush.bf16.msra.mxu0 %v4180
    %4508 = vmatpush.bf16.msra.mxu0 %v4178
    %4509 = vmatpush.bf16.msra.mxu0 %v4176
    %4510 = vmatpush.bf16.msra.mxu0 %v4174
    %4511 = vmatpush.bf16.msra.mxu0 %v4172
    %4512 = vmatpush.bf16.msra.mxu0 %v4170
    %4513 = vmatpush.bf16.msra.mxu0 %v4168
    %4514 = vmatpush.bf16.msra.mxu0 %v4166
    %4515 = vmatmul.bf16.gmra.mxu0 %v3549
    %v4516 = vpop.f32.mrf.mxu0
    %v4517 = vadd.f32 %v4504, %v4516
    %v4518 = vpop.f32.mrf.mxu0
    %4519 = vdwg.mxu0
    %4520 = vmatpush.bf16.msra.mxu0 %v4196
    %4521 = vmatpush.bf16.msra.mxu0 %v4194
    %4522 = vmatpush.bf16.msra.mxu0 %v4192
    %4523 = vmatpush.bf16.msra.mxu0 %v4190
    %4524 = vmatpush.bf16.msra.mxu0 %v4188
    %4525 = vmatpush.bf16.msra.mxu0 %v4186
    %4526 = vmatpush.bf16.msra.mxu0 %v4184
    %4527 = vmatpush.bf16.msra.mxu0 %v4182
    %4528 = vmatmul.bf16.gmra.mxu0 %v3550
    %v4529 = vpop.f32.mrf.mxu0
    %v4530 = vadd.f32 %v4517, %v4529
    %v4531 = vpop.f32.mrf.mxu0
    %4532 = vdwg.mxu0
    %v4533 = vtanh.pop %v4426
    %v4534 = vtanh.pop %v4530
    %4535 = vst [vmem:[%s18] sm:$0xff] %v4533
    %4536 = vst [vmem:[%s18 + $0x8] sm:$0xff] %v4534
    // Predicated region
    $region130: #{generator_forward.1} parent=1 // pred_check
      _
    $region131: #{generator_forward.1} parent=1 // pred_check_branch
      %4538 = sbr.rel (0) target = $region133
    $region132: #{generator_forward.1} parent=1 // pred_region
      _
    $region133: #{generator_forward.1} parent=1 // pred_fallthru
      _
    // Predicated region
    $region134: #{generator_forward.1} parent=1 // pred_check
      _
    $region135: #{generator_forward.1} parent=1 // pred_check_branch
      %4540 = sbr.rel (0) target = $region137
    $region136: #{generator_forward.1} parent=1 // pred_region
      _
    $region137: #{generator_forward.1} parent=1 // pred_fallthru
      _
    %4541 = vsyncpa [#allocation3], 1
    %4542 = vsyncpa [#allocation5], 1
    %4543 = vsyncpa [#allocation8], 1
    %4544 = vsyncpa [#allocation11], 1
    %4545 = vsyncpa [#allocation14], 1
    %4546 = vsyncpa [#allocation17], 1
    %4547 = vsyncpa [#allocation20], 1
    %4548 = vsyncpa [#allocation23], 1

</llo_original>
